<compile_context>
chip_gen: v7x
topology: tpu7x:2x2x1
jax: 0.10.0
libtpu: 0.0.40
codegen_flags: <defaults>
</compile_context>

<pallas_src>
import jax
import jax.numpy as jnp
from jax.experimental import pallas as pl
from jax.experimental.pallas import tpu as pltpu

N_HIDDEN = 80
DILATIONS = (1, 2, 4, 8, 16, 32)   # TemporalBlocks 1..6 (kernel_size = 2)
CP = 128                           # channel padding (lane width)
HEAD = 16                          # scratch left halo rows (>= max tap shift, aligned)
TAIL = 16                          # scratch right halo rows
GAP = 16                           # min zero-separator rows between folded sequences
ROWS_TARGET = 2048                 # target folded rows per grid step

# 'same' padding tap shifts: L = d//2 (left), R = d - L (right).
_MAX_SHIFT = max(max(d // 2, d - d // 2) for d in DILATIONS)
# Halos / separators must cover the widest tap shift.  VMEM refs have no
# bounds check, so fail loudly if a future dilation change violates this.
assert _MAX_SHIFT <= min(HEAD, TAIL, GAP), "halo/gap too small for max dilation"


def _round_up(n, m):
    return (n + m - 1) // m * m


def _prelu(v, a):
    return jnp.where(v >= 0, v, a * v)


def _sigmoid(v):
    # numerically stable: exp of a non-positive argument only; the divide is
    # an EUP approximate reciprocal (free slot relative to the MXU/VPU path).
    z = jnp.exp(-jnp.abs(v))
    r = pl.reciprocal(1.0 + z, approx=True)
    return jnp.where(v >= 0, r, z * r)


# ----------------------------- Pallas kernel --------------------------------
def discriminator_kernel(x_ref, mask_ref, w0c_ref, w20_ref,
                         w1a_ref, w1b_ref, w2a_ref, w2b_ref, wf_ref,
                         bds_ref, b1_ref, b2_ref, bf_ref, prelu_ref,
                         o_ref, pad_ref):
    N = x_ref.shape[0]                       # folded rows handled this grid step
    f32, bf16 = jnp.float32, jnp.bfloat16

    # Halo rows of the scratch must always read as zero ('same' padding and
    # batch separators).  Scratch is uninitialised and persists across steps,
    # so re-zero every step (32 rows, negligible) -- keeps the "parallel"
    # grid sharding safe on megacore.
    pad_ref[0:HEAD, :] = jnp.zeros((HEAD, CP), f32)
    pad_ref[HEAD + N:HEAD + N + TAIL, :] = jnp.zeros((TAIL, CP), f32)

    # Row-validity mask broadcast to full lane width ONCE (JAX does not CSE
    # broadcast_in_dim; doing this inside conv_k2 would re-emit it 12x).
    maskb = jnp.broadcast_to(mask_ref[...], (N, CP))

    alphas = [prelu_ref[i] for i in range(14)]   # hoisted PReLU scalar reads

    def conv_k2(v, d, w0, w1, bias):
        # kernel_size=2, padding='same', dilation=d:
        #   out[t] = W0 @ v[t-L] + W1 @ v[t+R],  L = d//2, R = d - L, zeros outside.
        # One masked f32 store keeps gap/halo rows zero so taps never cross
        # sequence boundaries; the two taps are read back at row offsets -L/+R
        # and applied with two K=128 MXU passes (no (N, 2*CP) concatenate copy).
        pad_ref[HEAD:HEAD + N, :] = v * maskb
        L = d // 2
        R = d - L
        t0 = pad_ref[HEAD - L:HEAD - L + N, :].astype(bf16)   # v[t - L]
        t1 = pad_ref[HEAD + R:HEAD + R + N, :].astype(bf16)   # v[t + R]
        return (jnp.dot(t0, w0, preferred_element_type=f32)
                + jnp.dot(t1, w1, preferred_element_type=f32) + bias)

    xb = x_ref[...]                              # already bf16 (cast in the wrapper)

    # ---- TemporalBlock 0 (k=1, d=1): conv1 and the 1x1-downsample residual
    # share the same input -> fused into one (N,CP)@(CP,2*CP) matmul that
    # fills the 256-wide MXU output on v6e/v7x.
    big = jnp.dot(xb, w0c_ref[...], preferred_element_type=f32)        # (N, 2*CP)
    h = _prelu(big[:, 0:CP] + b1_ref[0:1, :], alphas[0])
    h = jnp.dot(h.astype(bf16), w20_ref[...], preferred_element_type=f32) + b2_ref[0:1, :]
    h = _prelu(h, alphas[1])
    y = h + big[:, CP:2 * CP] + bds_ref[...]                           # (N, CP) f32

    # ---- TemporalBlocks 1..6: k=2, dilations 1,2,4,8,16,32, identity residual ----
    for i, d in enumerate(DILATIONS):
        blk = i + 1
        h = _prelu(conv_k2(y, d, w1a_ref[i], w1b_ref[i], b1_ref[blk:blk + 1, :]),
                   alphas[2 * blk])
        h = _prelu(conv_k2(h, d, w2a_ref[i], w2b_ref[i], b2_ref[blk:blk + 1, :]),
                   alphas[2 * blk + 1])
        y = h + y

    # ---- final 1x1 conv + sigmoid ----
    logits = jnp.dot(y.astype(bf16), wf_ref[...], preferred_element_type=f32) + bf_ref[...]
    o_ref[...] = _sigmoid(logits)


# --------------------------- parameter preparation ---------------------------
def prepare_params(p):
    """One-time weight padding / tap-splitting / bf16 cast.  Hoisted out of the
    forward path so these XLA ops do not re-run every call."""
    bf16 = jnp.bfloat16
    assert p["w10"].shape[0] <= CP and p["wf"].shape[1] <= CP and N_HIDDEN <= CP

    def pad2(w):
        return jnp.pad(w, ((0, CP - w.shape[0]), (0, CP - w.shape[1])))

    return {
        # block 0: conv1 weight and 1x1-downsample weight fused along the
        # output axis -> one (CP, 2*CP) matmul in the kernel.
        "w0c": jnp.concatenate([pad2(p["w10"]), pad2(p["wds"])], axis=1).astype(bf16),
        "w20": pad2(p["w20"]).astype(bf16),
        "wf": pad2(p["wf"]).astype(bf16),
        # blocks 1..6: per-tap weights, (6, CP, CP) each (tap0 = left, tap1 = right)
        "w1a": jnp.stack([pad2(p["w1s"][2 * i]) for i in range(6)]).astype(bf16),
        "w1b": jnp.stack([pad2(p["w1s"][2 * i + 1]) for i in range(6)]).astype(bf16),
        "w2a": jnp.stack([pad2(p["w2s"][2 * i]) for i in range(6)]).astype(bf16),
        "w2b": jnp.stack([pad2(p["w2s"][2 * i + 1]) for i in range(6)]).astype(bf16),
        "bds": jnp.pad(p["bds"], ((0, 0), (0, CP - N_HIDDEN))),
        "b1": jnp.pad(p["b1"], ((0, 0), (0, CP - N_HIDDEN))),
        "b2": jnp.pad(p["b2"], ((0, 0), (0, CP - N_HIDDEN))),
        "bf": jnp.pad(p["bf"], ((0, 0), (0, CP - p["wf"].shape[1]))),
        "prelu": p["prelu"],
    }


# ------------------------------ wrapper --------------------------------------
def discriminator_forward(x, prep, c_out):
    B, T, c_in = x.shape
    assert c_in <= CP and c_out <= CP
    bf16 = jnp.bfloat16

    slot = _round_up(T, 8) + GAP                 # rows per sequence incl. zero separator
    assert slot - T >= _MAX_SHIFT                # separator must cover the widest tap
    if slot > ROWS_TARGET:
        # TODO(synk): tile the time axis with a recomputed 16-row halo so per-step
        # VMEM stays bounded for very long sequences (v7x has only 64 MiB VMEM).
        raise NotImplementedError("sequence too long for a single time tile")

    # Fold as many sequences per grid step as fit ROWS_TARGET, but keep >= 2
    # grid steps when B >= 2 so the "parallel" axis spans both v7x TensorCores.
    G = max(1, min(B, ROWS_TARGET // slot))
    if B >= 2:
        G = min(G, (B + 1) // 2)
    B_pad = _round_up(B, G)
    n_groups = B_pad // G
    N = G * slot                                 # folded rows per grid step

    # Fold batch into the matmul M dimension; pad channels to the 128-lane
    # width; hand the kernel bf16 input (halves input DMA; kernel computes on
    # bf16 operands anyway, accumulation stays f32).
    x_fold = jnp.pad(x, ((0, B_pad - B), (0, slot - T), (0, CP - c_in)))
    x_fold = x_fold.reshape(B_pad * slot, CP).astype(bf16)

    # 1.0 on real time steps, 0.0 on separator/padding rows (same for every group).
    mask = (jnp.arange(slot) < T).astype(jnp.float32)
    mask = jnp.tile(mask, (G,)).reshape(N, 1)

    args = (x_fold, mask, prep["w0c"], prep["w20"],
            prep["w1a"], prep["w1b"], prep["w2a"], prep["w2b"], prep["wf"],
            prep["bds"], prep["b1"], prep["b2"], prep["bf"], prep["prelu"])

    # Weight/bias blocks are grid-invariant; we rely on the compiler to elide
    # re-fetch rather than forcing pl.Buffered(1) (VMEM headroom verified).
    in_specs = [
        pl.BlockSpec((N, CP), lambda g: (g, 0)),              # x (folded, bf16)
        pl.BlockSpec((N, 1), lambda g: (0, 0)),               # row mask
        pl.BlockSpec((CP, 2 * CP), lambda g: (0, 0)),         # w0c (conv1 | downsample)
        pl.BlockSpec((CP, CP), lambda g: (0, 0)),             # w20
        pl.BlockSpec((6, CP, CP), lambda g: (0, 0, 0)),       # w1a (tap 0)
        pl.BlockSpec((6, CP, CP), lambda g: (0, 0, 0)),       # w1b (tap 1)
        pl.BlockSpec((6, CP, CP), lambda g: (0, 0, 0)),       # w2a (tap 0)
        pl.BlockSpec((6, CP, CP), lambda g: (0, 0, 0)),       # w2b (tap 1)
        pl.BlockSpec((CP, CP), lambda g: (0, 0)),             # wf
        pl.BlockSpec((1, CP), lambda g: (0, 0)),              # bds
        pl.BlockSpec((7, CP), lambda g: (0, 0)),              # b1
        pl.BlockSpec((7, CP), lambda g: (0, 0)),              # b2
        pl.BlockSpec((1, CP), lambda g: (0, 0)),              # bf
        pl.BlockSpec(memory_space=pltpu.MemorySpace.SMEM),    # prelu slopes (14,)
    ]

    rows = B_pad * slot
    # per row: block0 fused (2x) + w20 + 12 convs x 2 taps + final 1x1
    flops = 2 * rows * CP * CP * (2 + 1 + 2 * 2 * len(DILATIONS) + 1)
    bytes_accessed = sum(int(a.size) * a.dtype.itemsize for a in args) + rows * CP * 4
    cost = pl.CostEstimate(flops=flops, transcendentals=rows * CP,
                           bytes_accessed=int(bytes_accessed))

    out_fold = pl.pallas_call(
        discriminator_kernel,
        out_shape=jax.ShapeDtypeStruct((B_pad * slot, CP), jnp.float32),
        grid=(n_groups,),
        in_specs=in_specs,
        out_specs=pl.BlockSpec((N, CP), lambda g: (g, 0)),
        scratch_shapes=[pltpu.VMEM((HEAD + N + TAIL, CP), jnp.float32)],
        compiler_params=pltpu.CompilerParams(
            dimension_semantics=("parallel",),
            vmem_limit_bytes=32 * 1024 * 1024),
        cost_estimate=cost,
    )(*args)

    return out_fold.reshape(B_pad, slot, CP)[:B, :T, :c_out]


# --------------------------- parameter init -----------------------------------
def init_params(key, input_size, output_size, n_hidden=N_HIDDEN):
    ks = jax.random.split(key, 10)
    std = 0.01
    n = jax.random.normal
    return {
        # block 0 (k=1): weights stored as (Cin, Cout) for x @ W
        "w10": std * n(ks[0], (input_size, n_hidden), jnp.float32),
        "w20": std * n(ks[1], (n_hidden, n_hidden), jnp.float32),
        "wds": std * n(ks[2], (input_size, n_hidden), jnp.float32),
        "bds": std * n(ks[3], (1, n_hidden), jnp.float32),
        # blocks 1..6 (k=2): stacked as (6*2 taps, Cin, Cout)
        "w1s": std * n(ks[4], (12, n_hidden, n_hidden), jnp.float32),
        "w2s": std * n(ks[5], (12, n_hidden, n_hidden), jnp.float32),
        "b1": std * n(ks[6], (7, n_hidden), jnp.float32),
        "b2": std * n(ks[7], (7, n_hidden), jnp.float32),
        # final 1x1 conv
        "wf": std * n(ks[8], (n_hidden, output_size), jnp.float32),
        "bf": std * n(ks[9], (1, output_size), jnp.float32),
        # PReLU slopes (PyTorch default init = 0.25), 2 per block
        "prelu": jnp.full((14,), 0.25, jnp.float32),
    }


# --------------------------- pure-JAX reference -------------------------------
def _conv1d_same_ref(x, w_taps, b, d):
    # x: (B, T, Cin), w_taps: (k, Cin, Cout), b: (Cout,)
    k, T = w_taps.shape[0], x.shape[1]
    total = d * (k - 1)
    L = total // 2
    R = total - L
    xp = jnp.pad(x, ((0, 0), (L, R), (0, 0)))
    out = jnp.zeros((x.shape[0], T, w_taps.shape[2]), jnp.float32)
    for j in range(k):
        out = out + jnp.einsum("btc,co->bto", xp[:, j * d:j * d + T, :], w_taps[j])
    return out + b.reshape(1, 1, -1)


def reference_forward(x, p):
    a = p["prelu"]
    prelu = lambda v, s: jnp.where(v >= 0, v, s * v)
    # block 0
    h = _conv1d_same_ref(x, p["w10"][None], p["b1"][0], 1)
    h = prelu(h, a[0])
    h = _conv1d_same_ref(h, p["w20"][None], p["b2"][0], 1)
    h = prelu(h, a[1])
    res = _conv1d_same_ref(x, p["wds"][None], p["bds"][0], 1)
    y = h + res
    # blocks 1..6
    for i, d in enumerate(DILATIONS):
        blk = i + 1
        h = _conv1d_same_ref(y, p["w1s"][2 * i:2 * i + 2], p["b1"][blk], d)
        h = prelu(h, a[2 * blk])
        h = _conv1d_same_ref(h, p["w2s"][2 * i:2 * i + 2], p["b2"][blk], d)
        h = prelu(h, a[2 * blk + 1])
        y = h + y
    logits = _conv1d_same_ref(y, p["wf"][None], p["bf"][0], 1)
    return 1.0 / (1.0 + jnp.exp(-logits))


if __name__ == "__main__":
    B, T = 2, 16
    input_size, output_size = 4, 3

    key = jax.random.PRNGKey(0)
    kx, kp = jax.random.split(key)
    x = jax.random.normal(kx, (B, T, input_size), jnp.float32)
    params = init_params(kp, input_size, output_size)

    prep = prepare_params(params)       # one-time weight padding/stacking/cast
    fwd = jax.jit(discriminator_forward, static_argnames=("c_out",))

    out = jax.block_until_ready(fwd(x, prep, c_out=output_size))
    ref = reference_forward(x, params)

    assert out.shape == (B, T, output_size)
    # tolerance accounts for bf16 MXU operands (f32 accumulation) and the EUP
    # approximate reciprocal used in the sigmoid
    if not jnp.allclose(out, ref, atol=2e-3, rtol=2e-3):
        err = float(jnp.max(jnp.abs(out - ref)))
        raise AssertionError(f"Pallas output mismatch vs JAX reference (max abs err {err})")
    print("KERNEL_OK")
</pallas_src>

<mosaic_0001>
module attributes {stable_mosaic.version = 11 : i64} {
  func.func @discriminator_kernel(%arg0: i32, %arg1: memref<32x128xbf16, #tpu.memory_space<vmem>>, %arg2: memref<32x1xf32, #tpu.memory_space<vmem>>, %arg3: memref<128x256xbf16, #tpu.memory_space<vmem>>, %arg4: memref<128x128xbf16, #tpu.memory_space<vmem>>, %arg5: memref<6x128x128xbf16, #tpu.memory_space<vmem>>, %arg6: memref<6x128x128xbf16, #tpu.memory_space<vmem>>, %arg7: memref<6x128x128xbf16, #tpu.memory_space<vmem>>, %arg8: memref<6x128x128xbf16, #tpu.memory_space<vmem>>, %arg9: memref<128x128xbf16, #tpu.memory_space<vmem>>, %arg10: memref<1x128xf32, #tpu.memory_space<vmem>>, %arg11: memref<7x128xf32, #tpu.memory_space<vmem>>, %arg12: memref<7x128xf32, #tpu.memory_space<vmem>>, %arg13: memref<1x128xf32, #tpu.memory_space<vmem>>, %arg14: memref<14xf32, #tpu.memory_space<smem>>, %arg15: memref<32x128xf32, #tpu.memory_space<vmem>>, %arg16: memref<64x128xf32, #tpu.memory_space<vmem>>) attributes {dimension_semantics = [#tpu.dimension_semantics<parallel>], iteration_bounds = array<i64: 2>, scalar_prefetch = 0 : i64, scratch_operands = 1 : i64, tpu.core_type = #tpu.core_type<tc>, window_params = [{transform_indices = @transform_0, window_bounds = array<i64: 32, 128>}, {pipeline_mode = #tpu.pipeline_mode<synchronous>, transform_indices = @transform_1, window_bounds = array<i64: 32, 1>}, {pipeline_mode = #tpu.pipeline_mode<synchronous>, transform_indices = @transform_2, window_bounds = array<i64: 128, 256>}, {pipeline_mode = #tpu.pipeline_mode<synchronous>, transform_indices = @transform_3, window_bounds = array<i64: 128, 128>}, {pipeline_mode = #tpu.pipeline_mode<synchronous>, transform_indices = @transform_4, window_bounds = array<i64: 6, 128, 128>}, {pipeline_mode = #tpu.pipeline_mode<synchronous>, transform_indices = @transform_5, window_bounds = array<i64: 6, 128, 128>}, {pipeline_mode = #tpu.pipeline_mode<synchronous>, transform_indices = @transform_6, window_bounds = array<i64: 6, 128, 128>}, {pipeline_mode = #tpu.pipeline_mode<synchronous>, transform_indices = @transform_7, window_bounds = array<i64: 6, 128, 128>}, {pipeline_mode = #tpu.pipeline_mode<synchronous>, transform_indices = @transform_8, window_bounds = array<i64: 128, 128>}, {pipeline_mode = #tpu.pipeline_mode<synchronous>, transform_indices = @transform_9, window_bounds = array<i64: 1, 128>}, {pipeline_mode = #tpu.pipeline_mode<synchronous>, transform_indices = @transform_10, window_bounds = array<i64: 7, 128>}, {pipeline_mode = #tpu.pipeline_mode<synchronous>, transform_indices = @transform_11, window_bounds = array<i64: 7, 128>}, {pipeline_mode = #tpu.pipeline_mode<synchronous>, transform_indices = @transform_12, window_bounds = array<i64: 1, 128>}, {transform_indices = @transform_13, window_bounds = array<i64: 14>}, {transform_indices = @transform_14, window_bounds = array<i64: 32, 128>}]} {
    %cst = arith.constant 0.000000e+00 : f32
    %0 = vector.broadcast %cst : f32 to vector<16x128xf32>
    %c0 = arith.constant 0 : index
    %c0_0 = arith.constant 0 : index
    %1 = vector.load %arg16[%c0, %c0_0] : memref<64x128xf32, #tpu.memory_space<vmem>>, vector<16x128xf32>
    tpu.vector_store %arg16[%c0, %c0_0], %0 {strides = array<i32>} : memref<64x128xf32, #tpu.memory_space<vmem>>, vector<16x128xf32>,
    %cst_1 = arith.constant 0.000000e+00 : f32
    %2 = vector.broadcast %cst_1 : f32 to vector<16x128xf32>
    %c48 = arith.constant 48 : index
    %c0_2 = arith.constant 0 : index
    %3 = vector.load %arg16[%c48, %c0_2] : memref<64x128xf32, #tpu.memory_space<vmem>>, vector<16x128xf32>
    tpu.vector_store %arg16[%c48, %c0_2], %2 {strides = array<i32>} : memref<64x128xf32, #tpu.memory_space<vmem>>, vector<16x128xf32>,
    %c0_3 = arith.constant 0 : index
    %c0_4 = arith.constant 0 : index
    %4 = vector.load %arg2[%c0_3, %c0_4] : memref<32x1xf32, #tpu.memory_space<vmem>>, vector<32x1xf32>
    %5 = vector.shape_cast %4 : vector<32x1xf32> to vector<32x1xf32>
    %6 = vector.broadcast %5 : vector<32x1xf32> to vector<32x128xf32>
    %c0_5 = arith.constant 0 : index
    %7 = memref.load %arg14[%c0_5] : memref<14xf32, #tpu.memory_space<smem>>
    %c1 = arith.constant 1 : index
    %8 = memref.load %arg14[%c1] : memref<14xf32, #tpu.memory_space<smem>>
    %c2 = arith.constant 2 : index
    %9 = memref.load %arg14[%c2] : memref<14xf32, #tpu.memory_space<smem>>
    %c3 = arith.constant 3 : index
    %10 = memref.load %arg14[%c3] : memref<14xf32, #tpu.memory_space<smem>>
    %c4 = arith.constant 4 : index
    %11 = memref.load %arg14[%c4] : memref<14xf32, #tpu.memory_space<smem>>
    %c5 = arith.constant 5 : index
    %12 = memref.load %arg14[%c5] : memref<14xf32, #tpu.memory_space<smem>>
    %c6 = arith.constant 6 : index
    %13 = memref.load %arg14[%c6] : memref<14xf32, #tpu.memory_space<smem>>
    %c7 = arith.constant 7 : index
    %14 = memref.load %arg14[%c7] : memref<14xf32, #tpu.memory_space<smem>>
    %c8 = arith.constant 8 : index
    %15 = memref.load %arg14[%c8] : memref<14xf32, #tpu.memory_space<smem>>
    %c9 = arith.constant 9 : index
    %16 = memref.load %arg14[%c9] : memref<14xf32, #tpu.memory_space<smem>>
    %c10 = arith.constant 10 : index
    %17 = memref.load %arg14[%c10] : memref<14xf32, #tpu.memory_space<smem>>
    %c11 = arith.constant 11 : index
    %18 = memref.load %arg14[%c11] : memref<14xf32, #tpu.memory_space<smem>>
    %c12 = arith.constant 12 : index
    %19 = memref.load %arg14[%c12] : memref<14xf32, #tpu.memory_space<smem>>
    %c13 = arith.constant 13 : index
    %20 = memref.load %arg14[%c13] : memref<14xf32, #tpu.memory_space<smem>>
    %c0_6 = arith.constant 0 : index
    %c0_7 = arith.constant 0 : index
    %21 = vector.load %arg1[%c0_6, %c0_7] : memref<32x128xbf16, #tpu.memory_space<vmem>>, vector<32x128xbf16>
    %c0_8 = arith.constant 0 : index
    %c0_9 = arith.constant 0 : index
    %22 = vector.load %arg3[%c0_8, %c0_9] : memref<128x256xbf16, #tpu.memory_space<vmem>>, vector<128x256xbf16>
    %cst_10 = arith.constant dense<0.000000e+00> : vector<32x256xf32>
    %23 = tpu.matmul %21, %22, %cst_10 {dimension_numbers = #tpu.dot_dimension_numbers<[1], [0], [0], [1], [0, 0, 1, 1], [], []>} : vector<32x128xbf16>, vector<128x256xbf16>, vector<32x256xf32> -> vector<32x256xf32>
    %24 = vector.extract_strided_slice %23 {offsets = [0, 0], sizes = [32, 128], strides = [1, 1]} : vector<32x256xf32> to vector<32x128xf32>
    %c0_11 = arith.constant 0 : index
    %c0_12 = arith.constant 0 : index
    %25 = vector.load %arg11[%c0_11, %c0_12] : memref<7x128xf32, #tpu.memory_space<vmem>>, vector<1x128xf32>
    %26 = vector.broadcast %25 : vector<1x128xf32> to vector<32x128xf32>
    %27 = arith.addf %24, %26 : vector<32x128xf32>
    %cst_13 = arith.constant 0.000000e+00 : f32
    %28 = vector.broadcast %cst_13 : f32 to vector<32x128xf32>
    %29 = arith.cmpf oge, %27, %28 : vector<32x128xf32>
    %30 = vector.broadcast %7 : f32 to vector<32x128xf32>
    %31 = arith.mulf %30, %27 : vector<32x128xf32>
    %32 = arith.select %29, %27, %31 : vector<32x128xi1>, vector<32x128xf32>
    %33 = arith.truncf %32 : vector<32x128xf32> to vector<32x128xbf16>
    %c0_14 = arith.constant 0 : index
    %c0_15 = arith.constant 0 : index
    %34 = vector.load %arg4[%c0_14, %c0_15] : memref<128x128xbf16, #tpu.memory_space<vmem>>, vector<128x128xbf16>
    %cst_16 = arith.constant dense<0.000000e+00> : vector<32x128xf32>
    %35 = tpu.matmul %33, %34, %cst_16 {dimension_numbers = #tpu.dot_dimension_numbers<[1], [0], [0], [1], [0, 0, 1, 1], [], []>} : vector<32x128xbf16>, vector<128x128xbf16>, vector<32x128xf32> -> vector<32x128xf32>
    %c0_17 = arith.constant 0 : index
    %c0_18 = arith.constant 0 : index
    %36 = vector.load %arg12[%c0_17, %c0_18] : memref<7x128xf32, #tpu.memory_space<vmem>>, vector<1x128xf32>
    %37 = vector.broadcast %36 : vector<1x128xf32> to vector<32x128xf32>
    %38 = arith.addf %35, %37 : vector<32x128xf32>
    %cst_19 = arith.constant 0.000000e+00 : f32
    %39 = vector.broadcast %cst_19 : f32 to vector<32x128xf32>
    %40 = arith.cmpf oge, %38, %39 : vector<32x128xf32>
    %41 = vector.broadcast %8 : f32 to vector<32x128xf32>
    %42 = arith.mulf %41, %38 : vector<32x128xf32>
    %43 = arith.select %40, %38, %42 : vector<32x128xi1>, vector<32x128xf32>
    %44 = vector.extract_strided_slice %23 {offsets = [0, 128], sizes = [32, 128], strides = [1, 1]} : vector<32x256xf32> to vector<32x128xf32>
    %45 = arith.addf %43, %44 : vector<32x128xf32>
    %c0_20 = arith.constant 0 : index
    %c0_21 = arith.constant 0 : index
    %46 = vector.load %arg10[%c0_20, %c0_21] : memref<1x128xf32, #tpu.memory_space<vmem>>, vector<1x128xf32>
    %47 = vector.broadcast %46 : vector<1x128xf32> to vector<32x128xf32>
    %48 = arith.addf %45, %47 : vector<32x128xf32>
    %c0_22 = arith.constant 0 : index
    %c0_23 = arith.constant 0 : index
    %c0_24 = arith.constant 0 : index
    %49 = vector.load %arg5[%c0_22, %c0_23, %c0_24] : memref<6x128x128xbf16, #tpu.memory_space<vmem>>, vector<1x128x128xbf16>
    %50 = vector.shape_cast %49 : vector<1x128x128xbf16> to vector<128x128xbf16>
    %c0_25 = arith.constant 0 : index
    %c0_26 = arith.constant 0 : index
    %c0_27 = arith.constant 0 : index
    %51 = vector.load %arg6[%c0_25, %c0_26, %c0_27] : memref<6x128x128xbf16, #tpu.memory_space<vmem>>, vector<1x128x128xbf16>
    %52 = vector.shape_cast %51 : vector<1x128x128xbf16> to vector<128x128xbf16>
    %c1_28 = arith.constant 1 : index
    %c0_29 = arith.constant 0 : index
    %53 = vector.load %arg11[%c1_28, %c0_29] : memref<7x128xf32, #tpu.memory_space<vmem>>, vector<1x128xf32>
    %54 = arith.mulf %48, %6 : vector<32x128xf32>
    %c16 = arith.constant 16 : index
    %c0_30 = arith.constant 0 : index
    %55 = vector.load %arg16[%c16, %c0_30] : memref<64x128xf32, #tpu.memory_space<vmem>>, vector<32x128xf32>
    tpu.vector_store %arg16[%c16, %c0_30], %54 {strides = array<i32>} : memref<64x128xf32, #tpu.memory_space<vmem>>, vector<32x128xf32>,
    %c16_31 = arith.constant 16 : index
    %c0_32 = arith.constant 0 : index
    %56 = vector.load %arg16[%c16_31, %c0_32] : memref<64x128xf32, #tpu.memory_space<vmem>>, vector<32x128xf32>
    %57 = arith.truncf %56 : vector<32x128xf32> to vector<32x128xbf16>
    %c17 = arith.constant 17 : index
    %c0_33 = arith.constant 0 : index
    %58 = vector.load %arg16[%c17, %c0_33] : memref<64x128xf32, #tpu.memory_space<vmem>>, vector<32x128xf32>
    %59 = arith.truncf %58 : vector<32x128xf32> to vector<32x128xbf16>
    %cst_34 = arith.constant dense<0.000000e+00> : vector<32x128xf32>
    %60 = tpu.matmul %57, %50, %cst_34 {dimension_numbers = #tpu.dot_dimension_numbers<[1], [0], [0], [1], [0, 0, 1, 1], [], []>} : vector<32x128xbf16>, vector<128x128xbf16>, vector<32x128xf32> -> vector<32x128xf32>
    %cst_35 = arith.constant dense<0.000000e+00> : vector<32x128xf32>
    %61 = tpu.matmul %59, %52, %cst_35 {dimension_numbers = #tpu.dot_dimension_numbers<[1], [0], [0], [1], [0, 0, 1, 1], [], []>} : vector<32x128xbf16>, vector<128x128xbf16>, vector<32x128xf32> -> vector<32x128xf32>
    %62 = arith.addf %60, %61 : vector<32x128xf32>
    %63 = vector.broadcast %53 : vector<1x128xf32> to vector<32x128xf32>
    %64 = arith.addf %62, %63 : vector<32x128xf32>
    %cst_36 = arith.constant 0.000000e+00 : f32
    %65 = vector.broadcast %cst_36 : f32 to vector<32x128xf32>
    %66 = arith.cmpf oge, %64, %65 : vector<32x128xf32>
    %67 = vector.broadcast %9 : f32 to vector<32x128xf32>
    %68 = arith.mulf %67, %64 : vector<32x128xf32>
    %69 = arith.select %66, %64, %68 : vector<32x128xi1>, vector<32x128xf32>
    %c0_37 = arith.constant 0 : index
    %c0_38 = arith.constant 0 : index
    %c0_39 = arith.constant 0 : index
    %70 = vector.load %arg7[%c0_37, %c0_38, %c0_39] : memref<6x128x128xbf16, #tpu.memory_space<vmem>>, vector<1x128x128xbf16>
    %71 = vector.shape_cast %70 : vector<1x128x128xbf16> to vector<128x128xbf16>
    %c0_40 = arith.constant 0 : index
    %c0_41 = arith.constant 0 : index
    %c0_42 = arith.constant 0 : index
    %72 = vector.load %arg8[%c0_40, %c0_41, %c0_42] : memref<6x128x128xbf16, #tpu.memory_space<vmem>>, vector<1x128x128xbf16>
    %73 = vector.shape_cast %72 : vector<1x128x128xbf16> to vector<128x128xbf16>
    %c1_43 = arith.constant 1 : index
    %c0_44 = arith.constant 0 : index
    %74 = vector.load %arg12[%c1_43, %c0_44] : memref<7x128xf32, #tpu.memory_space<vmem>>, vector<1x128xf32>
    %75 = arith.mulf %69, %6 : vector<32x128xf32>
    %c16_45 = arith.constant 16 : index
    %c0_46 = arith.constant 0 : index
    %76 = vector.load %arg16[%c16_45, %c0_46] : memref<64x128xf32, #tpu.memory_space<vmem>>, vector<32x128xf32>
    tpu.vector_store %arg16[%c16_45, %c0_46], %75 {strides = array<i32>} : memref<64x128xf32, #tpu.memory_space<vmem>>, vector<32x128xf32>,
    %c16_47 = arith.constant 16 : index
    %c0_48 = arith.constant 0 : index
    %77 = vector.load %arg16[%c16_47, %c0_48] : memref<64x128xf32, #tpu.memory_space<vmem>>, vector<32x128xf32>
    %78 = arith.truncf %77 : vector<32x128xf32> to vector<32x128xbf16>
    %c17_49 = arith.constant 17 : index
    %c0_50 = arith.constant 0 : index
    %79 = vector.load %arg16[%c17_49, %c0_50] : memref<64x128xf32, #tpu.memory_space<vmem>>, vector<32x128xf32>
    %80 = arith.truncf %79 : vector<32x128xf32> to vector<32x128xbf16>
    %cst_51 = arith.constant dense<0.000000e+00> : vector<32x128xf32>
    %81 = tpu.matmul %78, %71, %cst_51 {dimension_numbers = #tpu.dot_dimension_numbers<[1], [0], [0], [1], [0, 0, 1, 1], [], []>} : vector<32x128xbf16>, vector<128x128xbf16>, vector<32x128xf32> -> vector<32x128xf32>
    %cst_52 = arith.constant dense<0.000000e+00> : vector<32x128xf32>
    %82 = tpu.matmul %80, %73, %cst_52 {dimension_numbers = #tpu.dot_dimension_numbers<[1], [0], [0], [1], [0, 0, 1, 1], [], []>} : vector<32x128xbf16>, vector<128x128xbf16>, vector<32x128xf32> -> vector<32x128xf32>
    %83 = arith.addf %81, %82 : vector<32x128xf32>
    %84 = vector.broadcast %74 : vector<1x128xf32> to vector<32x128xf32>
    %85 = arith.addf %83, %84 : vector<32x128xf32>
    %cst_53 = arith.constant 0.000000e+00 : f32
    %86 = vector.broadcast %cst_53 : f32 to vector<32x128xf32>
    %87 = arith.cmpf oge, %85, %86 : vector<32x128xf32>
    %88 = vector.broadcast %10 : f32 to vector<32x128xf32>
    %89 = arith.mulf %88, %85 : vector<32x128xf32>
    %90 = arith.select %87, %85, %89 : vector<32x128xi1>, vector<32x128xf32>
    %91 = arith.addf %90, %48 : vector<32x128xf32>
    %c1_54 = arith.constant 1 : index
    %c0_55 = arith.constant 0 : index
    %c0_56 = arith.constant 0 : index
    %92 = vector.load %arg5[%c1_54, %c0_55, %c0_56] : memref<6x128x128xbf16, #tpu.memory_space<vmem>>, vector<1x128x128xbf16>
    %93 = vector.shape_cast %92 : vector<1x128x128xbf16> to vector<128x128xbf16>
    %c1_57 = arith.constant 1 : index
    %c0_58 = arith.constant 0 : index
    %c0_59 = arith.constant 0 : index
    %94 = vector.load %arg6[%c1_57, %c0_58, %c0_59] : memref<6x128x128xbf16, #tpu.memory_space<vmem>>, vector<1x128x128xbf16>
    %95 = vector.shape_cast %94 : vector<1x128x128xbf16> to vector<128x128xbf16>
    %c2_60 = arith.constant 2 : index
    %c0_61 = arith.constant 0 : index
    %96 = vector.load %arg11[%c2_60, %c0_61] : memref<7x128xf32, #tpu.memory_space<vmem>>, vector<1x128xf32>
    %97 = arith.mulf %91, %6 : vector<32x128xf32>
    %c16_62 = arith.constant 16 : index
    %c0_63 = arith.constant 0 : index
    %98 = vector.load %arg16[%c16_62, %c0_63] : memref<64x128xf32, #tpu.memory_space<vmem>>, vector<32x128xf32>
    tpu.vector_store %arg16[%c16_62, %c0_63], %97 {strides = array<i32>} : memref<64x128xf32, #tpu.memory_space<vmem>>, vector<32x128xf32>,
    %c15 = arith.constant 15 : index
    %c0_64 = arith.constant 0 : index
    %99 = vector.load %arg16[%c15, %c0_64] : memref<64x128xf32, #tpu.memory_space<vmem>>, vector<32x128xf32>
    %100 = arith.truncf %99 : vector<32x128xf32> to vector<32x128xbf16>
    %c17_65 = arith.constant 17 : index
    %c0_66 = arith.constant 0 : index
    %101 = vector.load %arg16[%c17_65, %c0_66] : memref<64x128xf32, #tpu.memory_space<vmem>>, vector<32x128xf32>
    %102 = arith.truncf %101 : vector<32x128xf32> to vector<32x128xbf16>
    %cst_67 = arith.constant dense<0.000000e+00> : vector<32x128xf32>
    %103 = tpu.matmul %100, %93, %cst_67 {dimension_numbers = #tpu.dot_dimension_numbers<[1], [0], [0], [1], [0, 0, 1, 1], [], []>} : vector<32x128xbf16>, vector<128x128xbf16>, vector<32x128xf32> -> vector<32x128xf32>
    %cst_68 = arith.constant dense<0.000000e+00> : vector<32x128xf32>
    %104 = tpu.matmul %102, %95, %cst_68 {dimension_numbers = #tpu.dot_dimension_numbers<[1], [0], [0], [1], [0, 0, 1, 1], [], []>} : vector<32x128xbf16>, vector<128x128xbf16>, vector<32x128xf32> -> vector<32x128xf32>
    %105 = arith.addf %103, %104 : vector<32x128xf32>
    %106 = vector.broadcast %96 : vector<1x128xf32> to vector<32x128xf32>
    %107 = arith.addf %105, %106 : vector<32x128xf32>
    %cst_69 = arith.constant 0.000000e+00 : f32
    %108 = vector.broadcast %cst_69 : f32 to vector<32x128xf32>
    %109 = arith.cmpf oge, %107, %108 : vector<32x128xf32>
    %110 = vector.broadcast %11 : f32 to vector<32x128xf32>
    %111 = arith.mulf %110, %107 : vector<32x128xf32>
    %112 = arith.select %109, %107, %111 : vector<32x128xi1>, vector<32x128xf32>
    %c1_70 = arith.constant 1 : index
    %c0_71 = arith.constant 0 : index
    %c0_72 = arith.constant 0 : index
    %113 = vector.load %arg7[%c1_70, %c0_71, %c0_72] : memref<6x128x128xbf16, #tpu.memory_space<vmem>>, vector<1x128x128xbf16>
    %114 = vector.shape_cast %113 : vector<1x128x128xbf16> to vector<128x128xbf16>
    %c1_73 = arith.constant 1 : index
    %c0_74 = arith.constant 0 : index
    %c0_75 = arith.constant 0 : index
    %115 = vector.load %arg8[%c1_73, %c0_74, %c0_75] : memref<6x128x128xbf16, #tpu.memory_space<vmem>>, vector<1x128x128xbf16>
    %116 = vector.shape_cast %115 : vector<1x128x128xbf16> to vector<128x128xbf16>
    %c2_76 = arith.constant 2 : index
    %c0_77 = arith.constant 0 : index
    %117 = vector.load %arg12[%c2_76, %c0_77] : memref<7x128xf32, #tpu.memory_space<vmem>>, vector<1x128xf32>
    %118 = arith.mulf %112, %6 : vector<32x128xf32>
    %c16_78 = arith.constant 16 : index
    %c0_79 = arith.constant 0 : index
    %119 = vector.load %arg16[%c16_78, %c0_79] : memref<64x128xf32, #tpu.memory_space<vmem>>, vector<32x128xf32>
    tpu.vector_store %arg16[%c16_78, %c0_79], %118 {strides = array<i32>} : memref<64x128xf32, #tpu.memory_space<vmem>>, vector<32x128xf32>,
    %c15_80 = arith.constant 15 : index
    %c0_81 = arith.constant 0 : index
    %120 = vector.load %arg16[%c15_80, %c0_81] : memref<64x128xf32, #tpu.memory_space<vmem>>, vector<32x128xf32>
    %121 = arith.truncf %120 : vector<32x128xf32> to vector<32x128xbf16>
    %c17_82 = arith.constant 17 : index
    %c0_83 = arith.constant 0 : index
    %122 = vector.load %arg16[%c17_82, %c0_83] : memref<64x128xf32, #tpu.memory_space<vmem>>, vector<32x128xf32>
    %123 = arith.truncf %122 : vector<32x128xf32> to vector<32x128xbf16>
    %cst_84 = arith.constant dense<0.000000e+00> : vector<32x128xf32>
    %124 = tpu.matmul %121, %114, %cst_84 {dimension_numbers = #tpu.dot_dimension_numbers<[1], [0], [0], [1], [0, 0, 1, 1], [], []>} : vector<32x128xbf16>, vector<128x128xbf16>, vector<32x128xf32> -> vector<32x128xf32>
    %cst_85 = arith.constant dense<0.000000e+00> : vector<32x128xf32>
    %125 = tpu.matmul %123, %116, %cst_85 {dimension_numbers = #tpu.dot_dimension_numbers<[1], [0], [0], [1], [0, 0, 1, 1], [], []>} : vector<32x128xbf16>, vector<128x128xbf16>, vector<32x128xf32> -> vector<32x128xf32>
    %126 = arith.addf %124, %125 : vector<32x128xf32>
    %127 = vector.broadcast %117 : vector<1x128xf32> to vector<32x128xf32>
    %128 = arith.addf %126, %127 : vector<32x128xf32>
    %cst_86 = arith.constant 0.000000e+00 : f32
    %129 = vector.broadcast %cst_86 : f32 to vector<32x128xf32>
    %130 = arith.cmpf oge, %128, %129 : vector<32x128xf32>
    %131 = vector.broadcast %12 : f32 to vector<32x128xf32>
    %132 = arith.mulf %131, %128 : vector<32x128xf32>
    %133 = arith.select %130, %128, %132 : vector<32x128xi1>, vector<32x128xf32>
    %134 = arith.addf %133, %91 : vector<32x128xf32>
    %c2_87 = arith.constant 2 : index
    %c0_88 = arith.constant 0 : index
    %c0_89 = arith.constant 0 : index
    %135 = vector.load %arg5[%c2_87, %c0_88, %c0_89] : memref<6x128x128xbf16, #tpu.memory_space<vmem>>, vector<1x128x128xbf16>
    %136 = vector.shape_cast %135 : vector<1x128x128xbf16> to vector<128x128xbf16>
    %c2_90 = arith.constant 2 : index
    %c0_91 = arith.constant 0 : index
    %c0_92 = arith.constant 0 : index
    %137 = vector.load %arg6[%c2_90, %c0_91, %c0_92] : memref<6x128x128xbf16, #tpu.memory_space<vmem>>, vector<1x128x128xbf16>
    %138 = vector.shape_cast %137 : vector<1x128x128xbf16> to vector<128x128xbf16>
    %c3_93 = arith.constant 3 : index
    %c0_94 = arith.constant 0 : index
    %139 = vector.load %arg11[%c3_93, %c0_94] : memref<7x128xf32, #tpu.memory_space<vmem>>, vector<1x128xf32>
    %140 = arith.mulf %134, %6 : vector<32x128xf32>
    %c16_95 = arith.constant 16 : index
    %c0_96 = arith.constant 0 : index
    %141 = vector.load %arg16[%c16_95, %c0_96] : memref<64x128xf32, #tpu.memory_space<vmem>>, vector<32x128xf32>
    tpu.vector_store %arg16[%c16_95, %c0_96], %140 {strides = array<i32>} : memref<64x128xf32, #tpu.memory_space<vmem>>, vector<32x128xf32>,
    %c14 = arith.constant 14 : index
    %c0_97 = arith.constant 0 : index
    %142 = vector.load %arg16[%c14, %c0_97] : memref<64x128xf32, #tpu.memory_space<vmem>>, vector<32x128xf32>
    %143 = arith.truncf %142 : vector<32x128xf32> to vector<32x128xbf16>
    %c18 = arith.constant 18 : index
    %c0_98 = arith.constant 0 : index
    %144 = vector.load %arg16[%c18, %c0_98] : memref<64x128xf32, #tpu.memory_space<vmem>>, vector<32x128xf32>
    %145 = arith.truncf %144 : vector<32x128xf32> to vector<32x128xbf16>
    %cst_99 = arith.constant dense<0.000000e+00> : vector<32x128xf32>
    %146 = tpu.matmul %143, %136, %cst_99 {dimension_numbers = #tpu.dot_dimension_numbers<[1], [0], [0], [1], [0, 0, 1, 1], [], []>} : vector<32x128xbf16>, vector<128x128xbf16>, vector<32x128xf32> -> vector<32x128xf32>
    %cst_100 = arith.constant dense<0.000000e+00> : vector<32x128xf32>
    %147 = tpu.matmul %145, %138, %cst_100 {dimension_numbers = #tpu.dot_dimension_numbers<[1], [0], [0], [1], [0, 0, 1, 1], [], []>} : vector<32x128xbf16>, vector<128x128xbf16>, vector<32x128xf32> -> vector<32x128xf32>
    %148 = arith.addf %146, %147 : vector<32x128xf32>
    %149 = vector.broadcast %139 : vector<1x128xf32> to vector<32x128xf32>
    %150 = arith.addf %148, %149 : vector<32x128xf32>
    %cst_101 = arith.constant 0.000000e+00 : f32
    %151 = vector.broadcast %cst_101 : f32 to vector<32x128xf32>
    %152 = arith.cmpf oge, %150, %151 : vector<32x128xf32>
    %153 = vector.broadcast %13 : f32 to vector<32x128xf32>
    %154 = arith.mulf %153, %150 : vector<32x128xf32>
    %155 = arith.select %152, %150, %154 : vector<32x128xi1>, vector<32x128xf32>
    %c2_102 = arith.constant 2 : index
    %c0_103 = arith.constant 0 : index
    %c0_104 = arith.constant 0 : index
    %156 = vector.load %arg7[%c2_102, %c0_103, %c0_104] : memref<6x128x128xbf16, #tpu.memory_space<vmem>>, vector<1x128x128xbf16>
    %157 = vector.shape_cast %156 : vector<1x128x128xbf16> to vector<128x128xbf16>
    %c2_105 = arith.constant 2 : index
    %c0_106 = arith.constant 0 : index
    %c0_107 = arith.constant 0 : index
    %158 = vector.load %arg8[%c2_105, %c0_106, %c0_107] : memref<6x128x128xbf16, #tpu.memory_space<vmem>>, vector<1x128x128xbf16>
    %159 = vector.shape_cast %158 : vector<1x128x128xbf16> to vector<128x128xbf16>
    %c3_108 = arith.constant 3 : index
    %c0_109 = arith.constant 0 : index
    %160 = vector.load %arg12[%c3_108, %c0_109] : memref<7x128xf32, #tpu.memory_space<vmem>>, vector<1x128xf32>
    %161 = arith.mulf %155, %6 : vector<32x128xf32>
    %c16_110 = arith.constant 16 : index
    %c0_111 = arith.constant 0 : index
    %162 = vector.load %arg16[%c16_110, %c0_111] : memref<64x128xf32, #tpu.memory_space<vmem>>, vector<32x128xf32>
    tpu.vector_store %arg16[%c16_110, %c0_111], %161 {strides = array<i32>} : memref<64x128xf32, #tpu.memory_space<vmem>>, vector<32x128xf32>,
    %c14_112 = arith.constant 14 : index
    %c0_113 = arith.constant 0 : index
    %163 = vector.load %arg16[%c14_112, %c0_113] : memref<64x128xf32, #tpu.memory_space<vmem>>, vector<32x128xf32>
    %164 = arith.truncf %163 : vector<32x128xf32> to vector<32x128xbf16>
    %c18_114 = arith.constant 18 : index
    %c0_115 = arith.constant 0 : index
    %165 = vector.load %arg16[%c18_114, %c0_115] : memref<64x128xf32, #tpu.memory_space<vmem>>, vector<32x128xf32>
    %166 = arith.truncf %165 : vector<32x128xf32> to vector<32x128xbf16>
    %cst_116 = arith.constant dense<0.000000e+00> : vector<32x128xf32>
    %167 = tpu.matmul %164, %157, %cst_116 {dimension_numbers = #tpu.dot_dimension_numbers<[1], [0], [0], [1], [0, 0, 1, 1], [], []>} : vector<32x128xbf16>, vector<128x128xbf16>, vector<32x128xf32> -> vector<32x128xf32>
    %cst_117 = arith.constant dense<0.000000e+00> : vector<32x128xf32>
    %168 = tpu.matmul %166, %159, %cst_117 {dimension_numbers = #tpu.dot_dimension_numbers<[1], [0], [0], [1], [0, 0, 1, 1], [], []>} : vector<32x128xbf16>, vector<128x128xbf16>, vector<32x128xf32> -> vector<32x128xf32>
    %169 = arith.addf %167, %168 : vector<32x128xf32>
    %170 = vector.broadcast %160 : vector<1x128xf32> to vector<32x128xf32>
    %171 = arith.addf %169, %170 : vector<32x128xf32>
    %cst_118 = arith.constant 0.000000e+00 : f32
    %172 = vector.broadcast %cst_118 : f32 to vector<32x128xf32>
    %173 = arith.cmpf oge, %171, %172 : vector<32x128xf32>
    %174 = vector.broadcast %14 : f32 to vector<32x128xf32>
    %175 = arith.mulf %174, %171 : vector<32x128xf32>
    %176 = arith.select %173, %171, %175 : vector<32x128xi1>, vector<32x128xf32>
    %177 = arith.addf %176, %134 : vector<32x128xf32>
    %c3_119 = arith.constant 3 : index
    %c0_120 = arith.constant 0 : index
    %c0_121 = arith.constant 0 : index
    %178 = vector.load %arg5[%c3_119, %c0_120, %c0_121] : memref<6x128x128xbf16, #tpu.memory_space<vmem>>, vector<1x128x128xbf16>
    %179 = vector.shape_cast %178 : vector<1x128x128xbf16> to vector<128x128xbf16>
    %c3_122 = arith.constant 3 : index
    %c0_123 = arith.constant 0 : index
    %c0_124 = arith.constant 0 : index
    %180 = vector.load %arg6[%c3_122, %c0_123, %c0_124] : memref<6x128x128xbf16, #tpu.memory_space<vmem>>, vector<1x128x128xbf16>
    %181 = vector.shape_cast %180 : vector<1x128x128xbf16> to vector<128x128xbf16>
    %c4_125 = arith.constant 4 : index
    %c0_126 = arith.constant 0 : index
    %182 = vector.load %arg11[%c4_125, %c0_126] : memref<7x128xf32, #tpu.memory_space<vmem>>, vector<1x128xf32>
    %183 = arith.mulf %177, %6 : vector<32x128xf32>
    %c16_127 = arith.constant 16 : index
    %c0_128 = arith.constant 0 : index
    %184 = vector.load %arg16[%c16_127, %c0_128] : memref<64x128xf32, #tpu.memory_space<vmem>>, vector<32x128xf32>
    tpu.vector_store %arg16[%c16_127, %c0_128], %183 {strides = array<i32>} : memref<64x128xf32, #tpu.memory_space<vmem>>, vector<32x128xf32>,
    %c12_129 = arith.constant 12 : index
    %c0_130 = arith.constant 0 : index
    %185 = vector.load %arg16[%c12_129, %c0_130] : memref<64x128xf32, #tpu.memory_space<vmem>>, vector<32x128xf32>
    %186 = arith.truncf %185 : vector<32x128xf32> to vector<32x128xbf16>
    %c20 = arith.constant 20 : index
    %c0_131 = arith.constant 0 : index
    %187 = vector.load %arg16[%c20, %c0_131] : memref<64x128xf32, #tpu.memory_space<vmem>>, vector<32x128xf32>
    %188 = arith.truncf %187 : vector<32x128xf32> to vector<32x128xbf16>
    %cst_132 = arith.constant dense<0.000000e+00> : vector<32x128xf32>
    %189 = tpu.matmul %186, %179, %cst_132 {dimension_numbers = #tpu.dot_dimension_numbers<[1], [0], [0], [1], [0, 0, 1, 1], [], []>} : vector<32x128xbf16>, vector<128x128xbf16>, vector<32x128xf32> -> vector<32x128xf32>
    %cst_133 = arith.constant dense<0.000000e+00> : vector<32x128xf32>
    %190 = tpu.matmul %188, %181, %cst_133 {dimension_numbers = #tpu.dot_dimension_numbers<[1], [0], [0], [1], [0, 0, 1, 1], [], []>} : vector<32x128xbf16>, vector<128x128xbf16>, vector<32x128xf32> -> vector<32x128xf32>
    %191 = arith.addf %189, %190 : vector<32x128xf32>
    %192 = vector.broadcast %182 : vector<1x128xf32> to vector<32x128xf32>
    %193 = arith.addf %191, %192 : vector<32x128xf32>
    %cst_134 = arith.constant 0.000000e+00 : f32
    %194 = vector.broadcast %cst_134 : f32 to vector<32x128xf32>
    %195 = arith.cmpf oge, %193, %194 : vector<32x128xf32>
    %196 = vector.broadcast %15 : f32 to vector<32x128xf32>
    %197 = arith.mulf %196, %193 : vector<32x128xf32>
    %198 = arith.select %195, %193, %197 : vector<32x128xi1>, vector<32x128xf32>
    %c3_135 = arith.constant 3 : index
    %c0_136 = arith.constant 0 : index
    %c0_137 = arith.constant 0 : index
    %199 = vector.load %arg7[%c3_135, %c0_136, %c0_137] : memref<6x128x128xbf16, #tpu.memory_space<vmem>>, vector<1x128x128xbf16>
    %200 = vector.shape_cast %199 : vector<1x128x128xbf16> to vector<128x128xbf16>
    %c3_138 = arith.constant 3 : index
    %c0_139 = arith.constant 0 : index
    %c0_140 = arith.constant 0 : index
    %201 = vector.load %arg8[%c3_138, %c0_139, %c0_140] : memref<6x128x128xbf16, #tpu.memory_space<vmem>>, vector<1x128x128xbf16>
    %202 = vector.shape_cast %201 : vector<1x128x128xbf16> to vector<128x128xbf16>
    %c4_141 = arith.constant 4 : index
    %c0_142 = arith.constant 0 : index
    %203 = vector.load %arg12[%c4_141, %c0_142] : memref<7x128xf32, #tpu.memory_space<vmem>>, vector<1x128xf32>
    %204 = arith.mulf %198, %6 : vector<32x128xf32>
    %c16_143 = arith.constant 16 : index
    %c0_144 = arith.constant 0 : index
    %205 = vector.load %arg16[%c16_143, %c0_144] : memref<64x128xf32, #tpu.memory_space<vmem>>, vector<32x128xf32>
    tpu.vector_store %arg16[%c16_143, %c0_144], %204 {strides = array<i32>} : memref<64x128xf32, #tpu.memory_space<vmem>>, vector<32x128xf32>,
    %c12_145 = arith.constant 12 : index
    %c0_146 = arith.constant 0 : index
    %206 = vector.load %arg16[%c12_145, %c0_146] : memref<64x128xf32, #tpu.memory_space<vmem>>, vector<32x128xf32>
    %207 = arith.truncf %206 : vector<32x128xf32> to vector<32x128xbf16>
    %c20_147 = arith.constant 20 : index
    %c0_148 = arith.constant 0 : index
    %208 = vector.load %arg16[%c20_147, %c0_148] : memref<64x128xf32, #tpu.memory_space<vmem>>, vector<32x128xf32>
    %209 = arith.truncf %208 : vector<32x128xf32> to vector<32x128xbf16>
    %cst_149 = arith.constant dense<0.000000e+00> : vector<32x128xf32>
    %210 = tpu.matmul %207, %200, %cst_149 {dimension_numbers = #tpu.dot_dimension_numbers<[1], [0], [0], [1], [0, 0, 1, 1], [], []>} : vector<32x128xbf16>, vector<128x128xbf16>, vector<32x128xf32> -> vector<32x128xf32>
    %cst_150 = arith.constant dense<0.000000e+00> : vector<32x128xf32>
    %211 = tpu.matmul %209, %202, %cst_150 {dimension_numbers = #tpu.dot_dimension_numbers<[1], [0], [0], [1], [0, 0, 1, 1], [], []>} : vector<32x128xbf16>, vector<128x128xbf16>, vector<32x128xf32> -> vector<32x128xf32>
    %212 = arith.addf %210, %211 : vector<32x128xf32>
    %213 = vector.broadcast %203 : vector<1x128xf32> to vector<32x128xf32>
    %214 = arith.addf %212, %213 : vector<32x128xf32>
    %cst_151 = arith.constant 0.000000e+00 : f32
    %215 = vector.broadcast %cst_151 : f32 to vector<32x128xf32>
    %216 = arith.cmpf oge, %214, %215 : vector<32x128xf32>
    %217 = vector.broadcast %16 : f32 to vector<32x128xf32>
    %218 = arith.mulf %217, %214 : vector<32x128xf32>
    %219 = arith.select %216, %214, %218 : vector<32x128xi1>, vector<32x128xf32>
    %220 = arith.addf %219, %177 : vector<32x128xf32>
    %c4_152 = arith.constant 4 : index
    %c0_153 = arith.constant 0 : index
    %c0_154 = arith.constant 0 : index
    %221 = vector.load %arg5[%c4_152, %c0_153, %c0_154] : memref<6x128x128xbf16, #tpu.memory_space<vmem>>, vector<1x128x128xbf16>
    %222 = vector.shape_cast %221 : vector<1x128x128xbf16> to vector<128x128xbf16>
    %c4_155 = arith.constant 4 : index
    %c0_156 = arith.constant 0 : index
    %c0_157 = arith.constant 0 : index
    %223 = vector.load %arg6[%c4_155, %c0_156, %c0_157] : memref<6x128x128xbf16, #tpu.memory_space<vmem>>, vector<1x128x128xbf16>
    %224 = vector.shape_cast %223 : vector<1x128x128xbf16> to vector<128x128xbf16>
    %c5_158 = arith.constant 5 : index
    %c0_159 = arith.constant 0 : index
    %225 = vector.load %arg11[%c5_158, %c0_159] : memref<7x128xf32, #tpu.memory_space<vmem>>, vector<1x128xf32>
    %226 = arith.mulf %220, %6 : vector<32x128xf32>
    %c16_160 = arith.constant 16 : index
    %c0_161 = arith.constant 0 : index
    %227 = vector.load %arg16[%c16_160, %c0_161] : memref<64x128xf32, #tpu.memory_space<vmem>>, vector<32x128xf32>
    tpu.vector_store %arg16[%c16_160, %c0_161], %226 {strides = array<i32>} : memref<64x128xf32, #tpu.memory_space<vmem>>, vector<32x128xf32>,
    %c8_162 = arith.constant 8 : index
    %c0_163 = arith.constant 0 : index
    %228 = vector.load %arg16[%c8_162, %c0_163] : memref<64x128xf32, #tpu.memory_space<vmem>>, vector<32x128xf32>
    %229 = arith.truncf %228 : vector<32x128xf32> to vector<32x128xbf16>
    %c24 = arith.constant 24 : index
    %c0_164 = arith.constant 0 : index
    %230 = vector.load %arg16[%c24, %c0_164] : memref<64x128xf32, #tpu.memory_space<vmem>>, vector<32x128xf32>
    %231 = arith.truncf %230 : vector<32x128xf32> to vector<32x128xbf16>
    %cst_165 = arith.constant dense<0.000000e+00> : vector<32x128xf32>
    %232 = tpu.matmul %229, %222, %cst_165 {dimension_numbers = #tpu.dot_dimension_numbers<[1], [0], [0], [1], [0, 0, 1, 1], [], []>} : vector<32x128xbf16>, vector<128x128xbf16>, vector<32x128xf32> -> vector<32x128xf32>
    %cst_166 = arith.constant dense<0.000000e+00> : vector<32x128xf32>
    %233 = tpu.matmul %231, %224, %cst_166 {dimension_numbers = #tpu.dot_dimension_numbers<[1], [0], [0], [1], [0, 0, 1, 1], [], []>} : vector<32x128xbf16>, vector<128x128xbf16>, vector<32x128xf32> -> vector<32x128xf32>
    %234 = arith.addf %232, %233 : vector<32x128xf32>
    %235 = vector.broadcast %225 : vector<1x128xf32> to vector<32x128xf32>
    %236 = arith.addf %234, %235 : vector<32x128xf32>
    %cst_167 = arith.constant 0.000000e+00 : f32
    %237 = vector.broadcast %cst_167 : f32 to vector<32x128xf32>
    %238 = arith.cmpf oge, %236, %237 : vector<32x128xf32>
    %239 = vector.broadcast %17 : f32 to vector<32x128xf32>
    %240 = arith.mulf %239, %236 : vector<32x128xf32>
    %241 = arith.select %238, %236, %240 : vector<32x128xi1>, vector<32x128xf32>
    %c4_168 = arith.constant 4 : index
    %c0_169 = arith.constant 0 : index
    %c0_170 = arith.constant 0 : index
    %242 = vector.load %arg7[%c4_168, %c0_169, %c0_170] : memref<6x128x128xbf16, #tpu.memory_space<vmem>>, vector<1x128x128xbf16>
    %243 = vector.shape_cast %242 : vector<1x128x128xbf16> to vector<128x128xbf16>
    %c4_171 = arith.constant 4 : index
    %c0_172 = arith.constant 0 : index
    %c0_173 = arith.constant 0 : index
    %244 = vector.load %arg8[%c4_171, %c0_172, %c0_173] : memref<6x128x128xbf16, #tpu.memory_space<vmem>>, vector<1x128x128xbf16>
    %245 = vector.shape_cast %244 : vector<1x128x128xbf16> to vector<128x128xbf16>
    %c5_174 = arith.constant 5 : index
    %c0_175 = arith.constant 0 : index
    %246 = vector.load %arg12[%c5_174, %c0_175] : memref<7x128xf32, #tpu.memory_space<vmem>>, vector<1x128xf32>
    %247 = arith.mulf %241, %6 : vector<32x128xf32>
    %c16_176 = arith.constant 16 : index
    %c0_177 = arith.constant 0 : index
    %248 = vector.load %arg16[%c16_176, %c0_177] : memref<64x128xf32, #tpu.memory_space<vmem>>, vector<32x128xf32>
    tpu.vector_store %arg16[%c16_176, %c0_177], %247 {strides = array<i32>} : memref<64x128xf32, #tpu.memory_space<vmem>>, vector<32x128xf32>,
    %c8_178 = arith.constant 8 : index
    %c0_179 = arith.constant 0 : index
    %249 = vector.load %arg16[%c8_178, %c0_179] : memref<64x128xf32, #tpu.memory_space<vmem>>, vector<32x128xf32>
    %250 = arith.truncf %249 : vector<32x128xf32> to vector<32x128xbf16>
    %c24_180 = arith.constant 24 : index
    %c0_181 = arith.constant 0 : index
    %251 = vector.load %arg16[%c24_180, %c0_181] : memref<64x128xf32, #tpu.memory_space<vmem>>, vector<32x128xf32>
    %252 = arith.truncf %251 : vector<32x128xf32> to vector<32x128xbf16>
    %cst_182 = arith.constant dense<0.000000e+00> : vector<32x128xf32>
    %253 = tpu.matmul %250, %243, %cst_182 {dimension_numbers = #tpu.dot_dimension_numbers<[1], [0], [0], [1], [0, 0, 1, 1], [], []>} : vector<32x128xbf16>, vector<128x128xbf16>, vector<32x128xf32> -> vector<32x128xf32>
    %cst_183 = arith.constant dense<0.000000e+00> : vector<32x128xf32>
    %254 = tpu.matmul %252, %245, %cst_183 {dimension_numbers = #tpu.dot_dimension_numbers<[1], [0], [0], [1], [0, 0, 1, 1], [], []>} : vector<32x128xbf16>, vector<128x128xbf16>, vector<32x128xf32> -> vector<32x128xf32>
    %255 = arith.addf %253, %254 : vector<32x128xf32>
    %256 = vector.broadcast %246 : vector<1x128xf32> to vector<32x128xf32>
    %257 = arith.addf %255, %256 : vector<32x128xf32>
    %cst_184 = arith.constant 0.000000e+00 : f32
    %258 = vector.broadcast %cst_184 : f32 to vector<32x128xf32>
    %259 = arith.cmpf oge, %257, %258 : vector<32x128xf32>
    %260 = vector.broadcast %18 : f32 to vector<32x128xf32>
    %261 = arith.mulf %260, %257 : vector<32x128xf32>
    %262 = arith.select %259, %257, %261 : vector<32x128xi1>, vector<32x128xf32>
    %263 = arith.addf %262, %220 : vector<32x128xf32>
    %c5_185 = arith.constant 5 : index
    %c0_186 = arith.constant 0 : index
    %c0_187 = arith.constant 0 : index
    %264 = vector.load %arg5[%c5_185, %c0_186, %c0_187] : memref<6x128x128xbf16, #tpu.memory_space<vmem>>, vector<1x128x128xbf16>
    %265 = vector.shape_cast %264 : vector<1x128x128xbf16> to vector<128x128xbf16>
    %c5_188 = arith.constant 5 : index
    %c0_189 = arith.constant 0 : index
    %c0_190 = arith.constant 0 : index
    %266 = vector.load %arg6[%c5_188, %c0_189, %c0_190] : memref<6x128x128xbf16, #tpu.memory_space<vmem>>, vector<1x128x128xbf16>
    %267 = vector.shape_cast %266 : vector<1x128x128xbf16> to vector<128x128xbf16>
    %c6_191 = arith.constant 6 : index
    %c0_192 = arith.constant 0 : index
    %268 = vector.load %arg11[%c6_191, %c0_192] : memref<7x128xf32, #tpu.memory_space<vmem>>, vector<1x128xf32>
    %269 = arith.mulf %263, %6 : vector<32x128xf32>
    %c16_193 = arith.constant 16 : index
    %c0_194 = arith.constant 0 : index
    %270 = vector.load %arg16[%c16_193, %c0_194] : memref<64x128xf32, #tpu.memory_space<vmem>>, vector<32x128xf32>
    tpu.vector_store %arg16[%c16_193, %c0_194], %269 {strides = array<i32>} : memref<64x128xf32, #tpu.memory_space<vmem>>, vector<32x128xf32>,
    %c0_195 = arith.constant 0 : index
    %c0_196 = arith.constant 0 : index
    %271 = vector.load %arg16[%c0_195, %c0_196] : memref<64x128xf32, #tpu.memory_space<vmem>>, vector<32x128xf32>
    %272 = arith.truncf %271 : vector<32x128xf32> to vector<32x128xbf16>
    %c32 = arith.constant 32 : index
    %c0_197 = arith.constant 0 : index
    %273 = vector.load %arg16[%c32, %c0_197] : memref<64x128xf32, #tpu.memory_space<vmem>>, vector<32x128xf32>
    %274 = arith.truncf %273 : vector<32x128xf32> to vector<32x128xbf16>
    %cst_198 = arith.constant dense<0.000000e+00> : vector<32x128xf32>
    %275 = tpu.matmul %272, %265, %cst_198 {dimension_numbers = #tpu.dot_dimension_numbers<[1], [0], [0], [1], [0, 0, 1, 1], [], []>} : vector<32x128xbf16>, vector<128x128xbf16>, vector<32x128xf32> -> vector<32x128xf32>
    %cst_199 = arith.constant dense<0.000000e+00> : vector<32x128xf32>
    %276 = tpu.matmul %274, %267, %cst_199 {dimension_numbers = #tpu.dot_dimension_numbers<[1], [0], [0], [1], [0, 0, 1, 1], [], []>} : vector<32x128xbf16>, vector<128x128xbf16>, vector<32x128xf32> -> vector<32x128xf32>
    %277 = arith.addf %275, %276 : vector<32x128xf32>
    %278 = vector.broadcast %268 : vector<1x128xf32> to vector<32x128xf32>
    %279 = arith.addf %277, %278 : vector<32x128xf32>
    %cst_200 = arith.constant 0.000000e+00 : f32
    %280 = vector.broadcast %cst_200 : f32 to vector<32x128xf32>
    %281 = arith.cmpf oge, %279, %280 : vector<32x128xf32>
    %282 = vector.broadcast %19 : f32 to vector<32x128xf32>
    %283 = arith.mulf %282, %279 : vector<32x128xf32>
    %284 = arith.select %281, %279, %283 : vector<32x128xi1>, vector<32x128xf32>
    %c5_201 = arith.constant 5 : index
    %c0_202 = arith.constant 0 : index
    %c0_203 = arith.constant 0 : index
    %285 = vector.load %arg7[%c5_201, %c0_202, %c0_203] : memref<6x128x128xbf16, #tpu.memory_space<vmem>>, vector<1x128x128xbf16>
    %286 = vector.shape_cast %285 : vector<1x128x128xbf16> to vector<128x128xbf16>
    %c5_204 = arith.constant 5 : index
    %c0_205 = arith.constant 0 : index
    %c0_206 = arith.constant 0 : index
    %287 = vector.load %arg8[%c5_204, %c0_205, %c0_206] : memref<6x128x128xbf16, #tpu.memory_space<vmem>>, vector<1x128x128xbf16>
    %288 = vector.shape_cast %287 : vector<1x128x128xbf16> to vector<128x128xbf16>
    %c6_207 = arith.constant 6 : index
    %c0_208 = arith.constant 0 : index
    %289 = vector.load %arg12[%c6_207, %c0_208] : memref<7x128xf32, #tpu.memory_space<vmem>>, vector<1x128xf32>
    %290 = arith.mulf %284, %6 : vector<32x128xf32>
    %c16_209 = arith.constant 16 : index
    %c0_210 = arith.constant 0 : index
    %291 = vector.load %arg16[%c16_209, %c0_210] : memref<64x128xf32, #tpu.memory_space<vmem>>, vector<32x128xf32>
    tpu.vector_store %arg16[%c16_209, %c0_210], %290 {strides = array<i32>} : memref<64x128xf32, #tpu.memory_space<vmem>>, vector<32x128xf32>,
    %c0_211 = arith.constant 0 : index
    %c0_212 = arith.constant 0 : index
    %292 = vector.load %arg16[%c0_211, %c0_212] : memref<64x128xf32, #tpu.memory_space<vmem>>, vector<32x128xf32>
    %293 = arith.truncf %292 : vector<32x128xf32> to vector<32x128xbf16>
    %c32_213 = arith.constant 32 : index
    %c0_214 = arith.constant 0 : index
    %294 = vector.load %arg16[%c32_213, %c0_214] : memref<64x128xf32, #tpu.memory_space<vmem>>, vector<32x128xf32>
    %295 = arith.truncf %294 : vector<32x128xf32> to vector<32x128xbf16>
    %cst_215 = arith.constant dense<0.000000e+00> : vector<32x128xf32>
    %296 = tpu.matmul %293, %286, %cst_215 {dimension_numbers = #tpu.dot_dimension_numbers<[1], [0], [0], [1], [0, 0, 1, 1], [], []>} : vector<32x128xbf16>, vector<128x128xbf16>, vector<32x128xf32> -> vector<32x128xf32>
    %cst_216 = arith.constant dense<0.000000e+00> : vector<32x128xf32>
    %297 = tpu.matmul %295, %288, %cst_216 {dimension_numbers = #tpu.dot_dimension_numbers<[1], [0], [0], [1], [0, 0, 1, 1], [], []>} : vector<32x128xbf16>, vector<128x128xbf16>, vector<32x128xf32> -> vector<32x128xf32>
    %298 = arith.addf %296, %297 : vector<32x128xf32>
    %299 = vector.broadcast %289 : vector<1x128xf32> to vector<32x128xf32>
    %300 = arith.addf %298, %299 : vector<32x128xf32>
    %cst_217 = arith.constant 0.000000e+00 : f32
    %301 = vector.broadcast %cst_217 : f32 to vector<32x128xf32>
    %302 = arith.cmpf oge, %300, %301 : vector<32x128xf32>
    %303 = vector.broadcast %20 : f32 to vector<32x128xf32>
    %304 = arith.mulf %303, %300 : vector<32x128xf32>
    %305 = arith.select %302, %300, %304 : vector<32x128xi1>, vector<32x128xf32>
    %306 = arith.addf %305, %263 : vector<32x128xf32>
    %307 = arith.truncf %306 : vector<32x128xf32> to vector<32x128xbf16>
    %c0_218 = arith.constant 0 : index
    %c0_219 = arith.constant 0 : index
    %308 = vector.load %arg9[%c0_218, %c0_219] : memref<128x128xbf16, #tpu.memory_space<vmem>>, vector<128x128xbf16>
    %cst_220 = arith.constant dense<0.000000e+00> : vector<32x128xf32>
    %309 = tpu.matmul %307, %308, %cst_220 {dimension_numbers = #tpu.dot_dimension_numbers<[1], [0], [0], [1], [0, 0, 1, 1], [], []>} : vector<32x128xbf16>, vector<128x128xbf16>, vector<32x128xf32> -> vector<32x128xf32>
    %c0_221 = arith.constant 0 : index
    %c0_222 = arith.constant 0 : index
    %310 = vector.load %arg13[%c0_221, %c0_222] : memref<1x128xf32, #tpu.memory_space<vmem>>, vector<1x128xf32>
    %311 = vector.broadcast %310 : vector<1x128xf32> to vector<32x128xf32>
    %312 = arith.addf %309, %311 : vector<32x128xf32>
    %313 = math.absf %312 : vector<32x128xf32>
    %cst_223 = arith.constant 0.000000e+00 : f32
    %314 = vector.broadcast %cst_223 : f32 to vector<32x128xf32>
    %315 = arith.subf %314, %313 : vector<32x128xf32>
    %316 = math.exp %315 : vector<32x128xf32>
    %cst_224 = arith.constant 1.000000e+00 : f32
    %317 = vector.broadcast %cst_224 : f32 to vector<32x128xf32>
    %318 = arith.addf %317, %316 : vector<32x128xf32>
    %319 = tpu.reciprocal %318 {approx = true} : vector<32x128xf32> -> vector<32x128xf32>
    %cst_225 = arith.constant 0.000000e+00 : f32
    %320 = vector.broadcast %cst_225 : f32 to vector<32x128xf32>
    %321 = arith.cmpf oge, %312, %320 : vector<32x128xf32>
    %322 = arith.mulf %316, %319 : vector<32x128xf32>
    %323 = arith.select %321, %319, %322 : vector<32x128xi1>, vector<32x128xf32>
    %c0_226 = arith.constant 0 : index
    %c0_227 = arith.constant 0 : index
    %324 = vector.load %arg15[%c0_226, %c0_227] : memref<32x128xf32, #tpu.memory_space<vmem>>, vector<32x128xf32>
    tpu.vector_store %arg15[%c0_226, %c0_227], %323 {strides = array<i32>} : memref<32x128xf32, #tpu.memory_space<vmem>>, vector<32x128xf32>,
    return
  }
  func.func @transform_0(%arg0: i32) -> (i32, i32) {
    %c0_i32 = arith.constant 0 : i32
    %c0_i32_0 = arith.constant 0 : i32
    return %arg0, %c0_i32 : i32, i32
  }
  func.func @transform_1(%arg0: i32) -> (i32, i32) {
    %c0_i32 = arith.constant 0 : i32
    %c0_i32_0 = arith.constant 0 : i32
    %c0_i32_1 = arith.constant 0 : i32
    return %c0_i32, %c0_i32_0 : i32, i32
  }
  func.func @transform_2(%arg0: i32) -> (i32, i32) {
    %c0_i32 = arith.constant 0 : i32
    %c0_i32_0 = arith.constant 0 : i32
    %c0_i32_1 = arith.constant 0 : i32
    return %c0_i32, %c0_i32_0 : i32, i32
  }
  func.func @transform_3(%arg0: i32) -> (i32, i32) {
    %c0_i32 = arith.constant 0 : i32
    %c0_i32_0 = arith.constant 0 : i32
    %c0_i32_1 = arith.constant 0 : i32
    return %c0_i32, %c0_i32_0 : i32, i32
  }
  func.func @transform_4(%arg0: i32) -> (i32, i32, i32) {
    %c0_i32 = arith.constant 0 : i32
    %c0_i32_0 = arith.constant 0 : i32
    %c0_i32_1 = arith.constant 0 : i32
    %c0_i32_2 = arith.constant 0 : i32
    return %c0_i32, %c0_i32_0, %c0_i32_1 : i32, i32, i32
  }
  func.func @transform_5(%arg0: i32) -> (i32, i32, i32) {
    %c0_i32 = arith.constant 0 : i32
    %c0_i32_0 = arith.constant 0 : i32
    %c0_i32_1 = arith.constant 0 : i32
    %c0_i32_2 = arith.constant 0 : i32
    return %c0_i32, %c0_i32_0, %c0_i32_1 : i32, i32, i32
  }
  func.func @transform_6(%arg0: i32) -> (i32, i32, i32) {
    %c0_i32 = arith.constant 0 : i32
    %c0_i32_0 = arith.constant 0 : i32
    %c0_i32_1 = arith.constant 0 : i32
    %c0_i32_2 = arith.constant 0 : i32
    return %c0_i32, %c0_i32_0, %c0_i32_1 : i32, i32, i32
  }
  func.func @transform_7(%arg0: i32) -> (i32, i32, i32) {
    %c0_i32 = arith.constant 0 : i32
    %c0_i32_0 = arith.constant 0 : i32
    %c0_i32_1 = arith.constant 0 : i32
    %c0_i32_2 = arith.constant 0 : i32
    return %c0_i32, %c0_i32_0, %c0_i32_1 : i32, i32, i32
  }
  func.func @transform_8(%arg0: i32) -> (i32, i32) {
    %c0_i32 = arith.constant 0 : i32
    %c0_i32_0 = arith.constant 0 : i32
    %c0_i32_1 = arith.constant 0 : i32
    return %c0_i32, %c0_i32_0 : i32, i32
  }
  func.func @transform_9(%arg0: i32) -> (i32, i32) {
    %c0_i32 = arith.constant 0 : i32
    %c0_i32_0 = arith.constant 0 : i32
    %c0_i32_1 = arith.constant 0 : i32
    return %c0_i32, %c0_i32_0 : i32, i32
  }
  func.func @transform_10(%arg0: i32) -> (i32, i32) {
    %c0_i32 = arith.constant 0 : i32
    %c0_i32_0 = arith.constant 0 : i32
    %c0_i32_1 = arith.constant 0 : i32
    return %c0_i32, %c0_i32_0 : i32, i32
  }
  func.func @transform_11(%arg0: i32) -> (i32, i32) {
    %c0_i32 = arith.constant 0 : i32
    %c0_i32_0 = arith.constant 0 : i32
    %c0_i32_1 = arith.constant 0 : i32
    return %c0_i32, %c0_i32_0 : i32, i32
  }
  func.func @transform_12(%arg0: i32) -> (i32, i32) {
    %c0_i32 = arith.constant 0 : i32
    %c0_i32_0 = arith.constant 0 : i32
    %c0_i32_1 = arith.constant 0 : i32
    return %c0_i32, %c0_i32_0 : i32, i32
  }
  func.func @transform_13(%arg0: i32) -> i32 {
    %c0_i32 = arith.constant 0 : i32
    %c0_i32_0 = arith.constant 0 : i32
    return %c0_i32 : i32
  }
  func.func @transform_14(%arg0: i32) -> (i32, i32) {
    %c0_i32 = arith.constant 0 : i32
    %c0_i32_0 = arith.constant 0 : i32
    return %arg0, %c0_i32 : i32, i32
  }
}

</mosaic_0001>

<llo_original>
// kernel: discriminator_forward.1
$region0: #{discriminator_forward.1}
  #allocation0 [shape = 'u32[]', space=smem, size = 0x4, offset = 0x4, fixed_abs, tag = 'smem constant byte address 0x4 - core index']
  #allocation1 [shape = 'u32[144,128]{1,0:T(1,128)}', space=vmem, size = 0x12000, scoped, tag = 'internal scratch']
  #allocation2 [shape = 'f32[64,128]{1,0:T(8,128)}', space=vmem, size = 0x8000, scoped, tag = 'scratch operand']
  %s0 = inlined_call_operand.vmem [shape: bf16[64,128], index: 0, kind: input, shape index: {}]
  %s1 = inlined_call_operand.vmem [shape: f32[32,1], index: 1, kind: input, shape index: {}]
  %s2 = inlined_call_operand.vmem [shape: bf16[128,256], index: 2, kind: input, shape index: {}]
  %s3 = inlined_call_operand.hbm [shape: bf16[128,128], index: 3, kind: input, shape index: {}]
  %s4 = inlined_call_operand.hbm [shape: bf16[6,128,128], index: 4, kind: input, shape index: {}]
  %s5 = inlined_call_operand.hbm [shape: bf16[6,128,128], index: 5, kind: input, shape index: {}]
  %s6 = inlined_call_operand.hbm [shape: bf16[6,128,128], index: 6, kind: input, shape index: {}]
  %s7 = inlined_call_operand.hbm [shape: bf16[6,128,128], index: 7, kind: input, shape index: {}]
  %s8 = inlined_call_operand.hbm [shape: bf16[128,128], index: 8, kind: input, shape index: {}]
  %s9 = inlined_call_operand.vmem [shape: f32[1,128], index: 9, kind: input, shape index: {}]
  %s10 = inlined_call_operand.vmem [shape: f32[7,128], index: 10, kind: input, shape index: {}]
  %s11 = inlined_call_operand.hbm [shape: f32[7,128], index: 11, kind: input, shape index: {}]
  %s12 = inlined_call_operand.vmem [shape: f32[1,128], index: 12, kind: input, shape index: {}]
  %s13 = inlined_call_operand.vmem [shape: f32[14], index: 13, kind: input, shape index: {}]
  %s14 = inlined_call_operand.vmem [shape: f32[64,128], index: 14, kind: output, shape index: {}]
  %s15 = sld [smem:[#allocation0]]
  $region121: #{discriminator_forward.1} parent=0
    _
  %s17 = ssub.s32 1, %s15
  %s18 = scalar_select 0, %s17, %s15
  $region1: #{discriminator_forward.1} parent=0
    #allocation3 [shape = 'u8[32768]{0}', space=vmem, size = 0x8000, scoped, tag = 'input window, operand 3, single buffered']
    #allocation4 [shape = 's32[2]{0}', space=sflag, size = 0x8, scoped, tag = 'scoped memory for discriminator_forward.1']
    #allocation5 [shape = 's32[2]{0}', space=sflag, size = 0x8, scoped, tag = 'scoped memory for discriminator_forward.1']
    #allocation6 [shape = 'u8[196608]{0}', space=vmem, size = 0x30000, scoped, tag = 'input window, operand 4, single buffered']
    #allocation7 [shape = 's32[1]{0}', space=sflag, size = 0x4, scoped, tag = 'scoped memory for discriminator_forward.1']
    #allocation8 [shape = 'u8[196608]{0}', space=vmem, size = 0x30000, scoped, tag = 'input window, operand 5, single buffered']
    #allocation9 [shape = 'u8[196608]{0}', space=vmem, size = 0x30000, scoped, tag = 'input window, operand 6, single buffered']
    #allocation10 [shape = 's32[1]{0}', space=sflag, size = 0x4, scoped, tag = 'scoped memory for discriminator_forward.1']
    #allocation11 [shape = 'u8[196608]{0}', space=vmem, size = 0x30000, scoped, tag = 'input window, operand 7, single buffered']
    #allocation12 [shape = 'u8[32768]{0}', space=vmem, size = 0x8000, scoped, tag = 'input window, operand 8, single buffered']
    #allocation13 [shape = 's32[1]{0}', space=sflag, size = 0x4, scoped, tag = 'scoped memory for discriminator_forward.1']
    #allocation14 [shape = 'u8[4096]{0}', space=vmem, size = 0x1000, scoped, tag = 'input window, operand 11, single buffered']
    #allocation15 [shape = 'u8[512]{0}', space=smem, size = 0x200, scoped, tag = 'input window, operand 13, single buffered']
    %19 = vsyncpa [#allocation4], 0
    %20 = vsyncpa [#allocation7], 0
    %21 = vsyncpa [#allocation10], 0
    %22 = vsyncpa [#allocation13], 0
    %23 = vsyncpa [#allocation5], 0
    loop: start=0, step=1, limit=4
    $region2: #{discriminator_forward.1} parent=1 // loop_pre_header
      _
    $region3: #{discriminator_forward.1} parent=1 // loop_header
      %s25 = sphi 0, %s29
      %p26 = scmp.ge.s32.totalorder %s25, 4
      %s35 = sphi 0, %s37
      %s38 = sphi 0, %s35
      %s39 = sphi 0, %s38
      %s55 = sphi 0, %s39
      %s59 = sphi 0, %s59
      %s61 = sphi 0, %s59
      %s62 = sphi 0, %s61
      %s76 = sphi 0, %s62
      %s80 = sphi 0, %s80
      %s82 = sphi 0, %s80
      %s83 = sphi 0, %s82
      %s97 = sphi 0, %s83
      %s101 = sphi 0, %s101
      %s103 = sphi 0, %s101
      %s104 = sphi 0, %s103
      %s118 = sphi 0, %s104
      %s122 = sphi 0, %s122
      %s124 = sphi 0, %s122
      %s125 = sphi 0, %s124
      %s139 = sphi 0, %s125
      %s143 = sphi 0, %s143
      %s145 = sphi 0, %s143
      %s146 = sphi 0, %s145
      %s160 = sphi 0, %s146
      %s164 = sphi 0, %s164
      %s166 = sphi 0, %s164
      %s167 = sphi 0, %s166
      %s181 = sphi 0, %s167
      %s185 = sphi 0, %s185
      %s187 = sphi 0, %s185
      %s188 = sphi 0, %s187
      %s202 = sphi 0, %s188
      %s206 = sphi 0, %s206
      %s208 = sphi 0, %s206
      %s209 = sphi 0, %s208
      %s223 = sphi 0, %s209
      %s227 = sphi 0, %s227
      %s229 = sphi 0, %s227
      %s230 = sphi 0, %s229
      %s244 = sphi 0, %s230
      %s248 = sphi 0, %s248
      %s250 = sphi 0, %s248
      %s251 = sphi 0, %s250
      %s265 = sphi 0, %s251
      %s269 = sphi 0, %s269
      %s271 = sphi 0, %s269
      %s272 = sphi 0, %s271
      %s286 = sphi 0, %s272
      %s290 = sphi 0, %s290
      %s292 = sphi 0, %s290
      %s293 = sphi 0, %s292
      %s307 = sphi 0, %s293
      %s311 = sphi 0, %s311
      %s313 = sphi 0, %s311
      %s314 = sphi 0, %s313
      %s328 = sphi 0, %s314
      %s334 = sphi 0, %s336
      %s337 = sphi 0, %s334
      %s338 = sphi 0, %s337
      %s354 = sphi 0, %s338
    $region4: #{discriminator_forward.1} parent=1 // loop_header_branch
      %28 = sbr.rel (%p26) target = $region8
    $region5: #{discriminator_forward.1} parent=1 // loop_body
      %s30 = ssub.s32 %s25, 1
      %s31 = ssub.s32 %s25, 2
      %s32 = sadd.s32 %s25, 1
      %s33 = ssub.s32 %s25, %s32
      %p34 = scmp.eq.s32.totalorder %s33, 0
      %s36 = sadd.s32 %s35, 1
      %s37 = scalar_select %p34, %s35, %s36
      %p40 = pneg %p34
      %p41 = scmp.eq.s32.totalorder %s25, 1
      %p42 = por %p40, %p41
      %p43 = scmp.ne.s32.totalorder %s35, %s38
      %p44 = scmp.eq.s32.totalorder %s25, 0
      %p45 = por %p43, %p44
      %p46 = scmp.ne.s32.totalorder %s35, %s38
      %p47 = scmp.eq.s32.totalorder %s30, 1
      %p48 = por %p46, %p47
      %p49 = scmp.ne.s32.totalorder %s38, %s39
      %p50 = scmp.eq.s32.totalorder %s30, 0
      %p51 = por %p49, %p50
      %p52 = scmp.ne.s32.totalorder %s38, %s39
      %p53 = scmp.eq.s32.totalorder %s31, 1
      %p54 = por %p52, %p53
      %p56 = scmp.ne.s32.totalorder %s39, %s55
      %p57 = scmp.eq.s32.totalorder %s31, 0
      %p58 = por %p56, %p57
      %s60 = sadd.s32 %s59, 1
      %p63 = scmp.eq.s32.totalorder %s25, 1
      %p64 = scmp.ne.s32.totalorder %s59, %s61
      %p65 = scmp.eq.s32.totalorder %s25, 0
      %p66 = por %p64, %p65
      %p67 = scmp.ne.s32.totalorder %s59, %s61
      %p68 = scmp.eq.s32.totalorder %s30, 1
      %p69 = por %p67, %p68
      %p70 = scmp.ne.s32.totalorder %s61, %s62
      %p71 = scmp.eq.s32.totalorder %s30, 0
      %p72 = por %p70, %p71
      %p73 = scmp.ne.s32.totalorder %s61, %s62
      %p74 = scmp.eq.s32.totalorder %s31, 1
      %p75 = por %p73, %p74
      %p77 = scmp.ne.s32.totalorder %s62, %s76
      %p78 = scmp.eq.s32.totalorder %s31, 0
      %p79 = por %p77, %p78
      %s81 = sadd.s32 %s80, 1
      %p84 = scmp.eq.s32.totalorder %s25, 1
      %p85 = scmp.ne.s32.totalorder %s80, %s82
      %p86 = scmp.eq.s32.totalorder %s25, 0
      %p87 = por %p85, %p86
      %p88 = scmp.ne.s32.totalorder %s80, %s82
      %p89 = scmp.eq.s32.totalorder %s30, 1
      %p90 = por %p88, %p89
      %p91 = scmp.ne.s32.totalorder %s82, %s83
      %p92 = scmp.eq.s32.totalorder %s30, 0
      %p93 = por %p91, %p92
      %p94 = scmp.ne.s32.totalorder %s82, %s83
      %p95 = scmp.eq.s32.totalorder %s31, 1
      %p96 = por %p94, %p95
      %p98 = scmp.ne.s32.totalorder %s83, %s97
      %p99 = scmp.eq.s32.totalorder %s31, 0
      %p100 = por %p98, %p99
      %s102 = sadd.s32 %s101, 1
      %p105 = scmp.eq.s32.totalorder %s25, 1
      %p106 = scmp.ne.s32.totalorder %s101, %s103
      %p107 = scmp.eq.s32.totalorder %s25, 0
      %p108 = por %p106, %p107
      %p109 = scmp.ne.s32.totalorder %s101, %s103
      %p110 = scmp.eq.s32.totalorder %s30, 1
      %p111 = por %p109, %p110
      %p112 = scmp.ne.s32.totalorder %s103, %s104
      %p113 = scmp.eq.s32.totalorder %s30, 0
      %p114 = por %p112, %p113
      %p115 = scmp.ne.s32.totalorder %s103, %s104
      %p116 = scmp.eq.s32.totalorder %s31, 1
      %p117 = por %p115, %p116
      %p119 = scmp.ne.s32.totalorder %s104, %s118
      %p120 = scmp.eq.s32.totalorder %s31, 0
      %p121 = por %p119, %p120
      %s123 = sadd.s32 %s122, 1
      %p126 = scmp.eq.s32.totalorder %s25, 1
      %p127 = scmp.ne.s32.totalorder %s122, %s124
      %p128 = scmp.eq.s32.totalorder %s25, 0
      %p129 = por %p127, %p128
      %p130 = scmp.ne.s32.totalorder %s122, %s124
      %p131 = scmp.eq.s32.totalorder %s30, 1
      %p132 = por %p130, %p131
      %p133 = scmp.ne.s32.totalorder %s124, %s125
      %p134 = scmp.eq.s32.totalorder %s30, 0
      %p135 = por %p133, %p134
      %p136 = scmp.ne.s32.totalorder %s124, %s125
      %p137 = scmp.eq.s32.totalorder %s31, 1
      %p138 = por %p136, %p137
      %p140 = scmp.ne.s32.totalorder %s125, %s139
      %p141 = scmp.eq.s32.totalorder %s31, 0
      %p142 = por %p140, %p141
      %s144 = sadd.s32 %s143, 1
      %p147 = scmp.eq.s32.totalorder %s25, 1
      %p148 = scmp.ne.s32.totalorder %s143, %s145
      %p149 = scmp.eq.s32.totalorder %s25, 0
      %p150 = por %p148, %p149
      %p151 = scmp.ne.s32.totalorder %s143, %s145
      %p152 = scmp.eq.s32.totalorder %s30, 1
      %p153 = por %p151, %p152
      %p154 = scmp.ne.s32.totalorder %s145, %s146
      %p155 = scmp.eq.s32.totalorder %s30, 0
      %p156 = por %p154, %p155
      %p157 = scmp.ne.s32.totalorder %s145, %s146
      %p158 = scmp.eq.s32.totalorder %s31, 1
      %p159 = por %p157, %p158
      %p161 = scmp.ne.s32.totalorder %s146, %s160
      %p162 = scmp.eq.s32.totalorder %s31, 0
      %p163 = por %p161, %p162
      %s165 = sadd.s32 %s164, 1
      %p168 = scmp.eq.s32.totalorder %s25, 1
      %p169 = scmp.ne.s32.totalorder %s164, %s166
      %p170 = scmp.eq.s32.totalorder %s25, 0
      %p171 = por %p169, %p170
      %p172 = scmp.ne.s32.totalorder %s164, %s166
      %p173 = scmp.eq.s32.totalorder %s30, 1
      %p174 = por %p172, %p173
      %p175 = scmp.ne.s32.totalorder %s166, %s167
      %p176 = scmp.eq.s32.totalorder %s30, 0
      %p177 = por %p175, %p176
      %p178 = scmp.ne.s32.totalorder %s166, %s167
      %p179 = scmp.eq.s32.totalorder %s31, 1
      %p180 = por %p178, %p179
      %p182 = scmp.ne.s32.totalorder %s167, %s181
      %p183 = scmp.eq.s32.totalorder %s31, 0
      %p184 = por %p182, %p183
      %s186 = sadd.s32 %s185, 1
      %p189 = scmp.eq.s32.totalorder %s25, 1
      %p190 = scmp.ne.s32.totalorder %s185, %s187
      %p191 = scmp.eq.s32.totalorder %s25, 0
      %p192 = por %p190, %p191
      %p193 = scmp.ne.s32.totalorder %s185, %s187
      %p194 = scmp.eq.s32.totalorder %s30, 1
      %p195 = por %p193, %p194
      %p196 = scmp.ne.s32.totalorder %s187, %s188
      %p197 = scmp.eq.s32.totalorder %s30, 0
      %p198 = por %p196, %p197
      %p199 = scmp.ne.s32.totalorder %s187, %s188
      %p200 = scmp.eq.s32.totalorder %s31, 1
      %p201 = por %p199, %p200
      %p203 = scmp.ne.s32.totalorder %s188, %s202
      %p204 = scmp.eq.s32.totalorder %s31, 0
      %p205 = por %p203, %p204
      %s207 = sadd.s32 %s206, 1
      %p210 = scmp.eq.s32.totalorder %s25, 1
      %p211 = scmp.ne.s32.totalorder %s206, %s208
      %p212 = scmp.eq.s32.totalorder %s25, 0
      %p213 = por %p211, %p212
      %p214 = scmp.ne.s32.totalorder %s206, %s208
      %p215 = scmp.eq.s32.totalorder %s30, 1
      %p216 = por %p214, %p215
      %p217 = scmp.ne.s32.totalorder %s208, %s209
      %p218 = scmp.eq.s32.totalorder %s30, 0
      %p219 = por %p217, %p218
      %p220 = scmp.ne.s32.totalorder %s208, %s209
      %p221 = scmp.eq.s32.totalorder %s31, 1
      %p222 = por %p220, %p221
      %p224 = scmp.ne.s32.totalorder %s209, %s223
      %p225 = scmp.eq.s32.totalorder %s31, 0
      %p226 = por %p224, %p225
      %s228 = sadd.s32 %s227, 1
      %p231 = scmp.eq.s32.totalorder %s25, 1
      %p232 = scmp.ne.s32.totalorder %s227, %s229
      %p233 = scmp.eq.s32.totalorder %s25, 0
      %p234 = por %p232, %p233
      %p235 = scmp.ne.s32.totalorder %s227, %s229
      %p236 = scmp.eq.s32.totalorder %s30, 1
      %p237 = por %p235, %p236
      %p238 = scmp.ne.s32.totalorder %s229, %s230
      %p239 = scmp.eq.s32.totalorder %s30, 0
      %p240 = por %p238, %p239
      %p241 = scmp.ne.s32.totalorder %s229, %s230
      %p242 = scmp.eq.s32.totalorder %s31, 1
      %p243 = por %p241, %p242
      %p245 = scmp.ne.s32.totalorder %s230, %s244
      %p246 = scmp.eq.s32.totalorder %s31, 0
      %p247 = por %p245, %p246
      %s249 = sadd.s32 %s248, 1
      %p252 = scmp.eq.s32.totalorder %s25, 1
      %p253 = scmp.ne.s32.totalorder %s248, %s250
      %p254 = scmp.eq.s32.totalorder %s25, 0
      %p255 = por %p253, %p254
      %p256 = scmp.ne.s32.totalorder %s248, %s250
      %p257 = scmp.eq.s32.totalorder %s30, 1
      %p258 = por %p256, %p257
      %p259 = scmp.ne.s32.totalorder %s250, %s251
      %p260 = scmp.eq.s32.totalorder %s30, 0
      %p261 = por %p259, %p260
      %p262 = scmp.ne.s32.totalorder %s250, %s251
      %p263 = scmp.eq.s32.totalorder %s31, 1
      %p264 = por %p262, %p263
      %p266 = scmp.ne.s32.totalorder %s251, %s265
      %p267 = scmp.eq.s32.totalorder %s31, 0
      %p268 = por %p266, %p267
      %s270 = sadd.s32 %s269, 1
      %p273 = scmp.eq.s32.totalorder %s25, 1
      %p274 = scmp.ne.s32.totalorder %s269, %s271
      %p275 = scmp.eq.s32.totalorder %s25, 0
      %p276 = por %p274, %p275
      %p277 = scmp.ne.s32.totalorder %s269, %s271
      %p278 = scmp.eq.s32.totalorder %s30, 1
      %p279 = por %p277, %p278
      %p280 = scmp.ne.s32.totalorder %s271, %s272
      %p281 = scmp.eq.s32.totalorder %s30, 0
      %p282 = por %p280, %p281
      %p283 = scmp.ne.s32.totalorder %s271, %s272
      %p284 = scmp.eq.s32.totalorder %s31, 1
      %p285 = por %p283, %p284
      %p287 = scmp.ne.s32.totalorder %s272, %s286
      %p288 = scmp.eq.s32.totalorder %s31, 0
      %p289 = por %p287, %p288
      %s291 = sadd.s32 %s290, 1
      %p294 = scmp.eq.s32.totalorder %s25, 1
      %p295 = scmp.ne.s32.totalorder %s290, %s292
      %p296 = scmp.eq.s32.totalorder %s25, 0
      %p297 = por %p295, %p296
      %p298 = scmp.ne.s32.totalorder %s290, %s292
      %p299 = scmp.eq.s32.totalorder %s30, 1
      %p300 = por %p298, %p299
      %p301 = scmp.ne.s32.totalorder %s292, %s293
      %p302 = scmp.eq.s32.totalorder %s30, 0
      %p303 = por %p301, %p302
      %p304 = scmp.ne.s32.totalorder %s292, %s293
      %p305 = scmp.eq.s32.totalorder %s31, 1
      %p306 = por %p304, %p305
      %p308 = scmp.ne.s32.totalorder %s293, %s307
      %p309 = scmp.eq.s32.totalorder %s31, 0
      %p310 = por %p308, %p309
      %s312 = sadd.s32 %s311, 1
      %p315 = scmp.eq.s32.totalorder %s25, 1
      %p316 = scmp.ne.s32.totalorder %s311, %s313
      %p317 = scmp.eq.s32.totalorder %s25, 0
      %p318 = por %p316, %p317
      %p319 = scmp.ne.s32.totalorder %s311, %s313
      %p320 = scmp.eq.s32.totalorder %s30, 1
      %p321 = por %p319, %p320
      %p322 = scmp.ne.s32.totalorder %s313, %s314
      %p323 = scmp.eq.s32.totalorder %s30, 0
      %p324 = por %p322, %p323
      %p325 = scmp.ne.s32.totalorder %s313, %s314
      %p326 = scmp.eq.s32.totalorder %s31, 1
      %p327 = por %p325, %p326
      %p329 = scmp.ne.s32.totalorder %s314, %s328
      %p330 = scmp.eq.s32.totalorder %s31, 0
      %p331 = por %p329, %p330
      %s332 = ssub.s32 %s25, %s32
      %p333 = scmp.eq.s32.totalorder %s332, 0
      %s335 = sadd.s32 %s334, 1
      %s336 = scalar_select %p333, %s334, %s335
      %p339 = pneg %p333
      %p340 = scmp.eq.s32.totalorder %s25, 1
      %p341 = por %p339, %p340
      %p342 = scmp.ne.s32.totalorder %s334, %s337
      %p343 = scmp.eq.s32.totalorder %s25, 0
      %p344 = por %p342, %p343
      %p345 = scmp.ne.s32.totalorder %s334, %s337
      %p346 = scmp.eq.s32.totalorder %s30, 1
      %p347 = por %p345, %p346
      %p348 = scmp.ne.s32.totalorder %s337, %s338
      %p349 = scmp.eq.s32.totalorder %s30, 0
      %p350 = por %p348, %p349
      %p351 = scmp.ne.s32.totalorder %s337, %s338
      %p352 = scmp.eq.s32.totalorder %s31, 1
      %p353 = por %p351, %p352
      %p355 = scmp.ne.s32.totalorder %s338, %s354
      %p356 = scmp.eq.s32.totalorder %s31, 0
      %p357 = por %p355, %p356
      %p358 = scmp.le.s32.totalorder 1, %s25
      %p359 = scmp.lt.s32.totalorder %s25, 3
      %p360 = pnand %p358, %p359
      %p361 = pneg %p360
      // Predicated region
      $region9: #{discriminator_forward.1} parent=5 // pred_check
        _
      $region10: #{discriminator_forward.1} parent=5 // pred_check_branch
        %363 = sbr.rel (%p360) target = $region12
      $region11: #{discriminator_forward.1} parent=5 // pred_region
        %s364 = ssub.s32 %s25, 1
        // Predicated region
        $region13: #{discriminator_forward.1} parent=11 // pred_check
          %p365 = pneg %p72
        $region14: #{discriminator_forward.1} parent=11 // pred_check_branch
          %367 = sbr.rel (%p365) target = $region16
        $region15: #{discriminator_forward.1} parent=11 // pred_region
          _
        $region16: #{discriminator_forward.1} parent=11 // pred_fallthru
          _
        // Predicated region
        $region17: #{discriminator_forward.1} parent=11 // pred_check
          %p368 = pneg %p93
        $region18: #{discriminator_forward.1} parent=11 // pred_check_branch
          %370 = sbr.rel (%p368) target = $region20
        $region19: #{discriminator_forward.1} parent=11 // pred_region
          _
        $region20: #{discriminator_forward.1} parent=11 // pred_fallthru
          _
        // Predicated region
        $region21: #{discriminator_forward.1} parent=11 // pred_check
          %p371 = pneg %p114
        $region22: #{discriminator_forward.1} parent=11 // pred_check_branch
          %373 = sbr.rel (%p371) target = $region24
        $region23: #{discriminator_forward.1} parent=11 // pred_region
          %s375 = ssub.s32 1024, 1024
          %376 = vsyncadd [#allocation4], %s375
          %s377 = sshll.u32 [#allocation3], 4
          %s378 = int_to_ptr.vmem [resolvable:$true] %s377
          %383 = dma.hbm_to_vmem [thread:$0]  %s3, 1024, %s378, [#allocation4], 64, 64, 4
        $region24: #{discriminator_forward.1} parent=11 // pred_fallthru
          _
        // Predicated region
        $region25: #{discriminator_forward.1} parent=11 // pred_check
          %p384 = pneg %p135
        $region26: #{discriminator_forward.1} parent=11 // pred_check_branch
          %386 = sbr.rel (%p384) target = $region28
        $region27: #{discriminator_forward.1} parent=11 // pred_region
          %s388 = ssub.s32 6144, 6144
          %389 = vsyncadd [#allocation7], %s388
          %s390 = sshll.u32 [#allocation6], 4
          %s391 = int_to_ptr.vmem [resolvable:$true] %s390
          %396 = dma.hbm_to_vmem [thread:$0]  %s4, 6144, %s391, [#allocation7], 64, 64, 4
        $region28: #{discriminator_forward.1} parent=11 // pred_fallthru
          _
        // Predicated region
        $region29: #{discriminator_forward.1} parent=11 // pred_check
          %p397 = pneg %p156
        $region30: #{discriminator_forward.1} parent=11 // pred_check_branch
          %399 = sbr.rel (%p397) target = $region32
        $region31: #{discriminator_forward.1} parent=11 // pred_region
          %s401 = ssub.s32 6144, 6144
          %402 = vsyncadd [#allocation7], %s401
          %s403 = sshll.u32 [#allocation8], 4
          %s404 = int_to_ptr.vmem [resolvable:$true] %s403
          %409 = dma.hbm_to_vmem [thread:$0]  %s5, 6144, %s404, [#allocation7], 64, 64, 4
        $region32: #{discriminator_forward.1} parent=11 // pred_fallthru
          _
        // Predicated region
        $region33: #{discriminator_forward.1} parent=11 // pred_check
          %p410 = pneg %p177
        $region34: #{discriminator_forward.1} parent=11 // pred_check_branch
          %412 = sbr.rel (%p410) target = $region36
        $region35: #{discriminator_forward.1} parent=11 // pred_region
          %s414 = ssub.s32 6144, 6144
          %415 = vsyncadd [#allocation10], %s414
          %s416 = sshll.u32 [#allocation9], 4
          %s417 = int_to_ptr.vmem [resolvable:$true] %s416
          %422 = dma.hbm_to_vmem [thread:$0]  %s6, 6144, %s417, [#allocation10], 64, 64, 4
        $region36: #{discriminator_forward.1} parent=11 // pred_fallthru
          _
        // Predicated region
        $region37: #{discriminator_forward.1} parent=11 // pred_check
          %p423 = pneg %p198
        $region38: #{discriminator_forward.1} parent=11 // pred_check_branch
          %425 = sbr.rel (%p423) target = $region40
        $region39: #{discriminator_forward.1} parent=11 // pred_region
          %s427 = ssub.s32 6144, 6144
          %428 = vsyncadd [#allocation10], %s427
          %s429 = sshll.u32 [#allocation11], 4
          %s430 = int_to_ptr.vmem [resolvable:$true] %s429
          %435 = dma.hbm_to_vmem [thread:$0]  %s7, 6144, %s430, [#allocation10], 64, 64, 4
        $region40: #{discriminator_forward.1} parent=11 // pred_fallthru
          _
        // Predicated region
        $region41: #{discriminator_forward.1} parent=11 // pred_check
          %p436 = pneg %p219
        $region42: #{discriminator_forward.1} parent=11 // pred_check_branch
          %438 = sbr.rel (%p436) target = $region44
        $region43: #{discriminator_forward.1} parent=11 // pred_region
          %s440 = ssub.s32 1024, 1024
          %441 = vsyncadd [#allocation13], %s440
          %s442 = sshll.u32 [#allocation12], 4
          %s443 = int_to_ptr.vmem [resolvable:$true] %s442
          %448 = dma.hbm_to_vmem [thread:$0]  %s8, 1024, %s443, [#allocation13], 64, 64, 4
        $region44: #{discriminator_forward.1} parent=11 // pred_fallthru
          _
        // Predicated region
        $region45: #{discriminator_forward.1} parent=11 // pred_check
          %p449 = pneg %p240
        $region46: #{discriminator_forward.1} parent=11 // pred_check_branch
          %451 = sbr.rel (%p449) target = $region48
        $region47: #{discriminator_forward.1} parent=11 // pred_region
          _
        $region48: #{discriminator_forward.1} parent=11 // pred_fallthru
          _
        // Predicated region
        $region49: #{discriminator_forward.1} parent=11 // pred_check
          %p452 = pneg %p261
        $region50: #{discriminator_forward.1} parent=11 // pred_check_branch
          %454 = sbr.rel (%p452) target = $region52
        $region51: #{discriminator_forward.1} parent=11 // pred_region
          _
        $region52: #{discriminator_forward.1} parent=11 // pred_fallthru
          _
        // Predicated region
        $region53: #{discriminator_forward.1} parent=11 // pred_check
          %p455 = pneg %p282
        $region54: #{discriminator_forward.1} parent=11 // pred_check_branch
          %457 = sbr.rel (%p455) target = $region56
        $region55: #{discriminator_forward.1} parent=11 // pred_region
          %s459 = ssub.s32 128, 128
          %460 = vsyncadd [#allocation13], %s459
          %s462 = sshll.u32 [#allocation14], 4
          %s463 = int_to_ptr.vmem [resolvable:$true] %s462
          %465 = dma.hbm_to_vmem [thread:$0]  %s11, 128, %s463, [#allocation13]
        $region56: #{discriminator_forward.1} parent=11 // pred_fallthru
          _
        // Predicated region
        $region57: #{discriminator_forward.1} parent=11 // pred_check
          %p466 = pneg %p303
        $region58: #{discriminator_forward.1} parent=11 // pred_check_branch
          %468 = sbr.rel (%p466) target = $region60
        $region59: #{discriminator_forward.1} parent=11 // pred_region
          _
        $region60: #{discriminator_forward.1} parent=11 // pred_fallthru
          _
        // Predicated region
        $region61: #{discriminator_forward.1} parent=11 // pred_check
          %p469 = pneg %p324
        $region62: #{discriminator_forward.1} parent=11 // pred_check_branch
          %471 = sbr.rel (%p469) target = $region64
        $region63: #{discriminator_forward.1} parent=11 // pred_region
          %s473 = ssub.s32 16, 16
          %474 = vsyncadd [#allocation5], %s473
          %s476 = sshll.u32 %s13, 4
          %s477 = int_to_ptr.vmem [resolvable:$true] %s476
          %479 = dma.vmem_to_smem %s477, 16, [#allocation15], [#allocation5]
        $region64: #{discriminator_forward.1} parent=11 // pred_fallthru
          _
      $region12: #{discriminator_forward.1} parent=5 // pred_fallthru
        _
      %p480 = scmp.lt.s32.totalorder %s25, 2
      // Predicated region
      $region65: #{discriminator_forward.1} parent=5 // pred_check
        %p481 = pneg %p480
      $region66: #{discriminator_forward.1} parent=5 // pred_check_branch
        %483 = sbr.rel (%p481) target = $region68
      $region67: #{discriminator_forward.1} parent=5 // pred_region
        // Predicated region
        $region69: #{discriminator_forward.1} parent=67 // pred_check
          %p484 = pneg %p45
        $region70: #{discriminator_forward.1} parent=67 // pred_check_branch
          %486 = sbr.rel (%p484) target = $region72
        $region71: #{discriminator_forward.1} parent=67 // pred_region
          %s487 = smul.u32 4, %s25
          %p488 = scmp.lt.s32.totalorder %s487, 7
          %s489 = scalar_select %p488, %s487, 7
          %s490 = smul.addr %s489, 4
          %s491 = scalar_lea.vmem %s0, %s490
          %s492 = smul.u32 4, %s25
        $region72: #{discriminator_forward.1} parent=67 // pred_fallthru
          _
      $region68: #{discriminator_forward.1} parent=5 // pred_fallthru
        _
      %p493 = scmp.le.s32.totalorder 1, %s25
      %p494 = scmp.lt.s32.totalorder %s25, 3
      %p495 = pnand %p493, %p494
      %p496 = pneg %p495
      // Predicated region
      $region73: #{discriminator_forward.1} parent=5 // pred_check
        _
      $region74: #{discriminator_forward.1} parent=5 // pred_check_branch
        %498 = sbr.rel (%p495) target = $region76
      $region75: #{discriminator_forward.1} parent=5 // pred_region
        %s499 = ssub.s32 %s25, 1
        // Predicated region
        $region77: #{discriminator_forward.1} parent=75 // pred_check
          %p500 = pneg %p114
        $region78: #{discriminator_forward.1} parent=75 // pred_check_branch
          %502 = sbr.rel (%p500) target = $region80
        $region79: #{discriminator_forward.1} parent=75 // pred_region
          %503 = dma.done [#allocation4], 1024
        $region80: #{discriminator_forward.1} parent=75 // pred_fallthru
          _
        // Predicated region
        $region81: #{discriminator_forward.1} parent=75 // pred_check
          %p504 = pneg %p135
        $region82: #{discriminator_forward.1} parent=75 // pred_check_branch
          %506 = sbr.rel (%p504) target = $region84
        $region83: #{discriminator_forward.1} parent=75 // pred_region
          %507 = dma.done [#allocation7], 6144
        $region84: #{discriminator_forward.1} parent=75 // pred_fallthru
          _
        // Predicated region
        $region85: #{discriminator_forward.1} parent=75 // pred_check
          %p508 = pneg %p156
        $region86: #{discriminator_forward.1} parent=75 // pred_check_branch
          %510 = sbr.rel (%p508) target = $region88
        $region87: #{discriminator_forward.1} parent=75 // pred_region
          %511 = dma.done [#allocation7], 6144
        $region88: #{discriminator_forward.1} parent=75 // pred_fallthru
          _
        // Predicated region
        $region89: #{discriminator_forward.1} parent=75 // pred_check
          %p512 = pneg %p177
        $region90: #{discriminator_forward.1} parent=75 // pred_check_branch
          %514 = sbr.rel (%p512) target = $region92
        $region91: #{discriminator_forward.1} parent=75 // pred_region
          %515 = dma.done [#allocation10], 6144
        $region92: #{discriminator_forward.1} parent=75 // pred_fallthru
          _
        // Predicated region
        $region93: #{discriminator_forward.1} parent=75 // pred_check
          %p516 = pneg %p198
        $region94: #{discriminator_forward.1} parent=75 // pred_check_branch
          %518 = sbr.rel (%p516) target = $region96
        $region95: #{discriminator_forward.1} parent=75 // pred_region
          %519 = dma.done [#allocation10], 6144
        $region96: #{discriminator_forward.1} parent=75 // pred_fallthru
          _
        // Predicated region
        $region97: #{discriminator_forward.1} parent=75 // pred_check
          %p520 = pneg %p219
        $region98: #{discriminator_forward.1} parent=75 // pred_check_branch
          %522 = sbr.rel (%p520) target = $region100
        $region99: #{discriminator_forward.1} parent=75 // pred_region
          %523 = dma.done [#allocation13], 1024
        $region100: #{discriminator_forward.1} parent=75 // pred_fallthru
          _
        // Predicated region
        $region101: #{discriminator_forward.1} parent=75 // pred_check
          %p524 = pneg %p282
        $region102: #{discriminator_forward.1} parent=75 // pred_check_branch
          %526 = sbr.rel (%p524) target = $region104
        $region103: #{discriminator_forward.1} parent=75 // pred_region
          %527 = dma.done [#allocation13], 128
        $region104: #{discriminator_forward.1} parent=75 // pred_fallthru
          _
        // Predicated region
        $region105: #{discriminator_forward.1} parent=75 // pred_check
          %p528 = pneg %p324
        $region106: #{discriminator_forward.1} parent=75 // pred_check_branch
          %530 = sbr.rel (%p528) target = $region108
        $region107: #{discriminator_forward.1} parent=75 // pred_region
          %531 = dma.done [#allocation5], 16
        $region108: #{discriminator_forward.1} parent=75 // pred_fallthru
          _
        %532 = sfence
        %s533 = smul.u32 4, %s30
        %p534 = scmp.lt.s32.totalorder %s533, 7
        %s535 = scalar_select %p534, %s533, 7
        %s536 = smul.addr %s535, 4
        %s537 = scalar_lea.vmem %s0, %s536
        %p538 = pneg %p51
        %p539 = pneg %p48
        %p540 = pneg %p72
        %p541 = pneg %p69
        %p542 = pneg %p93
        %p543 = pneg %p90
        %p544 = pneg %p114
        %p545 = pneg %p111
        %p546 = pneg %p135
        %p547 = pneg %p132
        %p548 = pneg %p156
        %p549 = pneg %p153
        %p550 = pneg %p177
        %p551 = pneg %p174
        %p552 = pneg %p198
        %p553 = pneg %p195
        %p554 = pneg %p219
        %p555 = pneg %p216
        %p556 = pneg %p240
        %p557 = pneg %p237
        %p558 = pneg %p261
        %p559 = pneg %p258
        %p560 = pneg %p282
        %p561 = pneg %p279
        %p562 = pneg %p303
        %p563 = pneg %p300
        %p564 = pneg %p324
        %p565 = pneg %p321
        %p566 = pneg %p350
        %p567 = pneg %p347
        %s568 = smul.u32 4, %s30
        %p569 = scmp.lt.s32.totalorder %s568, 7
        %s570 = scalar_select %p569, %s568, 7
        %s571 = smul.addr %s570, 8
        %s572 = scalar_lea.vmem %s14, %s571
        %s573 = smul.u32 4, %s30
        %p574 = scmp.lt.s32.totalorder %s573, 7
        %s575 = scalar_select %p574, %s573, 7
        %s576 = smul.addr %s575, 4
        %s577 = scalar_lea.vmem %s0, %s576
        %s578 = smul.u32 4, %s30
        %s579 = smul.u32 4, %s30
        %p580 = scmp.lt.s32.totalorder %s579, 7
        %s581 = scalar_select %p580, %s579, 7
        %s582 = smul.addr %s581, 8
        %s583 = scalar_lea.vmem %s14, %s582
        %s584 = smul.u32 4, %s30
        %586 = vst [vmem:[#allocation2] sm:$0xff] 0.0
        %587 = vst [vmem:[#allocation2 + $0x8] sm:$0xff] 0.0
        %588 = vst [vmem:[#allocation2 + $0x30] sm:$0xff] 0.0
        %589 = vst [vmem:[#allocation2 + $0x38] sm:$0xff] 0.0
        %v590 = vld [vmem:[%s1] sm:$0xff]
        %v591 = vld [vmem:[%s1 + $0x8] sm:$0xff]
        %v592 = vld [vmem:[%s1 + $0x10] sm:$0xff]
        %v593 = vld [vmem:[%s1 + $0x18] sm:$0xff]
        %595 = vset.pattern.permute.xlu0 0
        %596 = vperm.xlu0 %595, %v590
        %v597 = vpop.permute.xlu0 %596
        %600 = vset.pattern.permute.xlu0 0
        %601 = vperm.xlu0 %600, %v591
        %v602 = vpop.permute.xlu0 %601
        %605 = vset.pattern.permute.xlu0 0
        %606 = vperm.xlu0 %605, %v592
        %v607 = vpop.permute.xlu0 %606
        %610 = vset.pattern.permute.xlu0 0
        %611 = vperm.xlu0 %610, %v593
        %v612 = vpop.permute.xlu0 %611
        %s614 = sld [smem:[#allocation15]]
        %s615 = sld [smem:[#allocation15 + $0x1]]
        %s616 = sld [smem:[#allocation15 + $0x2]]
        %s617 = sld [smem:[#allocation15 + $0x3]]
        %s618 = sld [smem:[#allocation15 + $0x4]]
        %s619 = sld [smem:[#allocation15 + $0x5]]
        %s620 = sld [smem:[#allocation15 + $0x6]]
        %s621 = sld [smem:[#allocation15 + $0x7]]
        %s622 = sld [smem:[#allocation15 + $0x8]]
        %s623 = sld [smem:[#allocation15 + $0x9]]
        %s624 = sld [smem:[#allocation15 + $0xa]]
        %s625 = sld [smem:[#allocation15 + $0xb]]
        %s626 = sld [smem:[#allocation15 + $0xc]]
        %s627 = sld [smem:[#allocation15 + $0xd]]
        %v628 = vld [vmem:[%s577] sm:$0xf]
        %v629 = vld [vmem:[%s577 + $0x4] sm:$0xf]
        %v630 = vld [vmem:[%s577 + $0x8] sm:$0xf]
        %v631 = vld [vmem:[%s577 + $0xc] sm:$0xf]
        %v632 = vld [vmem:[%s2] sm:$0xff]
        %v633 = vld [vmem:[%s2 + $0x8] sm:$0xff]
        %v634 = vld [vmem:[%s2 + $0x10] sm:$0xff]
        %v635 = vld [vmem:[%s2 + $0x18] sm:$0xff]
        %v636 = vld [vmem:[%s2 + $0x20] sm:$0xff]
        %v637 = vld [vmem:[%s2 + $0x28] sm:$0xff]
        %v638 = vld [vmem:[%s2 + $0x30] sm:$0xff]
        %v639 = vld [vmem:[%s2 + $0x38] sm:$0xff]
        %v640 = vld [vmem:[%s2 + $0x40] sm:$0xff]
        %v641 = vld [vmem:[%s2 + $0x48] sm:$0xff]
        %v642 = vld [vmem:[%s2 + $0x50] sm:$0xff]
        %v643 = vld [vmem:[%s2 + $0x58] sm:$0xff]
        %v644 = vld [vmem:[%s2 + $0x60] sm:$0xff]
        %v645 = vld [vmem:[%s2 + $0x68] sm:$0xff]
        %v646 = vld [vmem:[%s2 + $0x70] sm:$0xff]
        %v647 = vld [vmem:[%s2 + $0x78] sm:$0xff]
        %v652 = vunpack.c.l.b16 %v628
        %v653 = vunpack.c.l.b16 %v629
        %v654 = vunpack.c.l.b16 %v630
        %v655 = vunpack.c.l.b16 %v631
        %v656 = vpack.c.b16 %v653, %v652
        %v657 = vpack.c.b16 %v655, %v654
        %v676 = vunpack.c.l.b16 %v632
        %v677 = vunpack.c.h.b16 %v632
        %v678 = vunpack.c.l.b16 %v633
        %v679 = vunpack.c.h.b16 %v633
        %v680 = vunpack.c.l.b16 %v634
        %v681 = vunpack.c.h.b16 %v634
        %v682 = vunpack.c.l.b16 %v635
        %v683 = vunpack.c.h.b16 %v635
        %v684 = vunpack.c.l.b16 %v636
        %v685 = vunpack.c.h.b16 %v636
        %v686 = vunpack.c.l.b16 %v637
        %v687 = vunpack.c.h.b16 %v637
        %v688 = vunpack.c.l.b16 %v638
        %v689 = vunpack.c.h.b16 %v638
        %v690 = vunpack.c.l.b16 %v639
        %v691 = vunpack.c.h.b16 %v639
        %v692 = vunpack.c.l.b16 %v640
        %v693 = vunpack.c.h.b16 %v640
        %v694 = vunpack.c.l.b16 %v641
        %v695 = vunpack.c.h.b16 %v641
        %v696 = vunpack.c.l.b16 %v642
        %v697 = vunpack.c.h.b16 %v642
        %v698 = vunpack.c.l.b16 %v643
        %v699 = vunpack.c.h.b16 %v643
        %v700 = vunpack.c.l.b16 %v644
        %v701 = vunpack.c.h.b16 %v644
        %v702 = vunpack.c.l.b16 %v645
        %v703 = vunpack.c.h.b16 %v645
        %v704 = vunpack.c.l.b16 %v646
        %v705 = vunpack.c.h.b16 %v646
        %v706 = vunpack.c.l.b16 %v647
        %v707 = vunpack.c.h.b16 %v647
        %v708 = vpack.c.b16 %v678, %v676
        %v709 = vpack.c.b16 %v679, %v677
        %v710 = vpack.c.b16 %v682, %v680
        %v711 = vpack.c.b16 %v683, %v681
        %v712 = vpack.c.b16 %v686, %v684
        %v713 = vpack.c.b16 %v687, %v685
        %v714 = vpack.c.b16 %v690, %v688
        %v715 = vpack.c.b16 %v691, %v689
        %v716 = vpack.c.b16 %v694, %v692
        %v717 = vpack.c.b16 %v695, %v693
        %v718 = vpack.c.b16 %v698, %v696
        %v719 = vpack.c.b16 %v699, %v697
        %v720 = vpack.c.b16 %v702, %v700
        %v721 = vpack.c.b16 %v703, %v701
        %v722 = vpack.c.b16 %v706, %v704
        %v723 = vpack.c.b16 %v707, %v705
        %740 = vmatprep.subr.bf16.mxu0 %v709
        %741 = vmatpush1.bf16.msra.mxu0 %v708
        %742 = vmatprep.subr.bf16.mxu0 %v711
        %743 = vmatpush1.bf16.msra.mxu0 %v710
        %744 = vmatprep.subr.bf16.mxu0 %v713
        %745 = vmatpush1.bf16.msra.mxu0 %v712
        %746 = vmatprep.subr.bf16.mxu0 %v715
        %747 = vmatpush1.bf16.msra.mxu0 %v714
        %748 = vmatprep.subr.bf16.mxu0 %v717
        %749 = vmatpush1.bf16.msra.mxu0 %v716
        %750 = vmatprep.subr.bf16.mxu0 %v719
        %751 = vmatpush1.bf16.msra.mxu0 %v718
        %752 = vmatprep.subr.bf16.mxu0 %v721
        %753 = vmatpush1.bf16.msra.mxu0 %v720
        %754 = vmatprep.subr.bf16.mxu0 %v723
        %755 = vmatpush1.bf16.msra.mxu0 %v722
        %756 = vmatprep.subr.bf16.mxu0 0
        %757 = vmatpush1.bf16.msra.mxu0 0
        %758 = vmatprep.subr.bf16.mxu0 0
        %759 = vmatpush1.bf16.msra.mxu0 0
        %760 = vmatprep.subr.bf16.mxu0 0
        %761 = vmatpush1.bf16.msra.mxu0 0
        %762 = vmatprep.subr.bf16.mxu0 0
        %763 = vmatpush1.bf16.msra.mxu0 0
        %764 = vmatprep.subr.bf16.mxu0 0
        %765 = vmatpush1.bf16.msra.mxu0 0
        %766 = vmatprep.subr.bf16.mxu0 0
        %767 = vmatpush1.bf16.msra.mxu0 0
        %768 = vmatprep.subr.bf16.mxu0 0
        %769 = vmatpush1.bf16.msra.mxu0 0
        %770 = vmatprep.subr.bf16.mxu0 0
        %771 = vmatpush1.bf16.msra.mxu0 0
        %772 = vmatprep.mubr.bf16.mxu0 0
        %773 = vmatmul.mubr.bf16.gmra.mrb[0].mxu0 %v656
        %v774 = vpop.f32.mrb[0].mxu0
        %v775 = vadd.f32 0.0, %v774
        %v776 = vpop.f32.mrb[0].mxu0
        %v777 = vadd.f32 0.0, %v776
        %v778 = vpop.f32.mrb[0].mxu0
        %v779 = vadd.f32 0.0, %v778
        %v780 = vpop.f32.mrb[0].mxu0
        %v781 = vadd.f32 0.0, %v780
        %782 = vmatprep.mubr.bf16.mxu0 0
        %783 = vmatmul.mubr.bf16.gmra.mrb[0].mxu0 %v657
        %v784 = vpop.f32.mrb[0].mxu0
        %v785 = vadd.f32 0.0, %v784
        %v786 = vpop.f32.mrb[0].mxu0
        %v787 = vadd.f32 0.0, %v786
        %v788 = vpop.f32.mrb[0].mxu0
        %v789 = vadd.f32 0.0, %v788
        %v790 = vpop.f32.mrb[0].mxu0
        %v791 = vadd.f32 0.0, %v790
        %792 = vdwg.mxu0
        %v793 = vld [vmem:[%s10] sm:$0x1]
        %v794 = vlaneseq
        %v795 = vshrl.u32 %v794, 7
        %v796 = vsub.s32 0, %v795
        %v797 = vrot.slane %v793, %v796
        %v798 = vadd.f32 %v775, %v797
        %v799 = vadd.f32 %v779, %v797
        %v800 = vadd.f32 %v785, %v797
        %v801 = vadd.f32 %v789, %v797
        %vm802 = vcmp.ge.f32.partialorder %v798, 0.0
        %vm803 = vcmp.ge.f32.partialorder %v799, 0.0
        %vm804 = vcmp.ge.f32.partialorder %v800, 0.0
        %vm805 = vcmp.ge.f32.partialorder %v801, 0.0
        %v806 = vstv %s614
        %v807 = vmul.f32 %v806, %v798
        %v808 = vmul.f32 %v806, %v799
        %v809 = vmul.f32 %v806, %v800
        %v810 = vmul.f32 %v806, %v801
        %v811 = vsel %vm802, %v798, %v807
        %v812 = vsel %vm803, %v799, %v808
        %v813 = vsel %vm804, %v800, %v809
        %v814 = vsel %vm805, %v801, %v810
        %v815 = vpack.c.bf16 %v812, %v811
        %v816 = vpack.c.bf16 %v814, %v813
        %v817 = vld [vmem:[#allocation3] sm:$0xf]
        %v818 = vld [vmem:[#allocation3 + $0x4] sm:$0xf]
        %v819 = vld [vmem:[#allocation3 + $0x8] sm:$0xf]
        %v820 = vld [vmem:[#allocation3 + $0xc] sm:$0xf]
        %v821 = vld [vmem:[#allocation3 + $0x10] sm:$0xf]
        %v822 = vld [vmem:[#allocation3 + $0x14] sm:$0xf]
        %v823 = vld [vmem:[#allocation3 + $0x18] sm:$0xf]
        %v824 = vld [vmem:[#allocation3 + $0x1c] sm:$0xf]
        %v825 = vld [vmem:[#allocation3 + $0x20] sm:$0xf]
        %v826 = vld [vmem:[#allocation3 + $0x24] sm:$0xf]
        %v827 = vld [vmem:[#allocation3 + $0x28] sm:$0xf]
        %v828 = vld [vmem:[#allocation3 + $0x2c] sm:$0xf]
        %v829 = vld [vmem:[#allocation3 + $0x30] sm:$0xf]
        %v830 = vld [vmem:[#allocation3 + $0x34] sm:$0xf]
        %v831 = vld [vmem:[#allocation3 + $0x38] sm:$0xf]
        %v832 = vld [vmem:[#allocation3 + $0x3c] sm:$0xf]
        %v833 = vld [vmem:[#allocation14] sm:$0x1]
        %v834 = vlaneseq
        %v835 = vshrl.u32 %v834, 7
        %v836 = vsub.s32 0, %v835
        %v837 = vrot.slane %v833, %v836
        %v854 = vunpack.c.l.b16 %v817
        %v855 = vunpack.c.l.b16 %v818
        %v856 = vunpack.c.l.b16 %v819
        %v857 = vunpack.c.l.b16 %v820
        %v858 = vunpack.c.l.b16 %v821
        %v859 = vunpack.c.l.b16 %v822
        %v860 = vunpack.c.l.b16 %v823
        %v861 = vunpack.c.l.b16 %v824
        %v862 = vunpack.c.l.b16 %v825
        %v863 = vunpack.c.l.b16 %v826
        %v864 = vunpack.c.l.b16 %v827
        %v865 = vunpack.c.l.b16 %v828
        %v866 = vunpack.c.l.b16 %v829
        %v867 = vunpack.c.l.b16 %v830
        %v868 = vunpack.c.l.b16 %v831
        %v869 = vunpack.c.l.b16 %v832
        %v870 = vpack.c.b16 %v855, %v854
        %v871 = vpack.c.b16 %v857, %v856
        %v872 = vpack.c.b16 %v859, %v858
        %v873 = vpack.c.b16 %v861, %v860
        %v874 = vpack.c.b16 %v863, %v862
        %v875 = vpack.c.b16 %v865, %v864
        %v876 = vpack.c.b16 %v867, %v866
        %v877 = vpack.c.b16 %v869, %v868
        %886 = vmatprep.subr.bf16.mxu0 0
        %887 = vmatpush1.bf16.msra.mxu0 %v870
        %888 = vmatprep.subr.bf16.mxu0 0
        %889 = vmatpush1.bf16.msra.mxu0 %v871
        %890 = vmatprep.subr.bf16.mxu0 0
        %891 = vmatpush1.bf16.msra.mxu0 %v872
        %892 = vmatprep.subr.bf16.mxu0 0
        %893 = vmatpush1.bf16.msra.mxu0 %v873
        %894 = vmatprep.subr.bf16.mxu0 0
        %895 = vmatpush1.bf16.msra.mxu0 %v874
        %896 = vmatprep.subr.bf16.mxu0 0
        %897 = vmatpush1.bf16.msra.mxu0 %v875
        %898 = vmatprep.subr.bf16.mxu0 0
        %899 = vmatpush1.bf16.msra.mxu0 %v876
        %900 = vmatprep.subr.bf16.mxu0 0
        %901 = vmatpush1.bf16.msra.mxu0 %v877
        %902 = vmatprep.subr.bf16.mxu0 0
        %903 = vmatpush1.bf16.msra.mxu0 0
        %904 = vmatprep.subr.bf16.mxu0 0
        %905 = vmatpush1.bf16.msra.mxu0 0
        %906 = vmatprep.subr.bf16.mxu0 0
        %907 = vmatpush1.bf16.msra.mxu0 0
        %908 = vmatprep.subr.bf16.mxu0 0
        %909 = vmatpush1.bf16.msra.mxu0 0
        %910 = vmatprep.subr.bf16.mxu0 0
        %911 = vmatpush1.bf16.msra.mxu0 0
        %912 = vmatprep.subr.bf16.mxu0 0
        %913 = vmatpush1.bf16.msra.mxu0 0
        %914 = vmatprep.subr.bf16.mxu0 0
        %915 = vmatpush1.bf16.msra.mxu0 0
        %916 = vmatprep.subr.bf16.mxu0 0
        %917 = vmatpush1.bf16.msra.mxu0 0
        %918 = vmatprep.mubr.bf16.mxu0 0
        %919 = vmatmul.mubr.bf16.gmra.mrb[0].mxu0 %v815
        %v920 = vpop.f32.mrb[0].mxu0
        %v921 = vadd.f32 %v837, %v920
        %v922 = vpop.f32.mrb[0].mxu0
        %v923 = vpop.f32.mrb[0].mxu0
        %v924 = vadd.f32 %v837, %v923
        %v925 = vpop.f32.mrb[0].mxu0
        %926 = vmatprep.mubr.bf16.mxu0 0
        %927 = vmatmul.mubr.bf16.gmra.mrb[0].mxu0 %v816
        %v928 = vpop.f32.mrb[0].mxu0
        %v929 = vadd.f32 %v837, %v928
        %v930 = vpop.f32.mrb[0].mxu0
        %v931 = vpop.f32.mrb[0].mxu0
        %v932 = vadd.f32 %v837, %v931
        %v933 = vpop.f32.mrb[0].mxu0
        %934 = vdwg.mxu0
        %vm935 = vcmp.ge.f32.partialorder %v921, 0.0
        %vm936 = vcmp.ge.f32.partialorder %v924, 0.0
        %vm937 = vcmp.ge.f32.partialorder %v929, 0.0
        %vm938 = vcmp.ge.f32.partialorder %v932, 0.0
        %v939 = vstv %s615
        %v940 = vmul.f32 %v939, %v921
        %v941 = vmul.f32 %v939, %v924
        %v942 = vmul.f32 %v939, %v929
        %v943 = vmul.f32 %v939, %v932
        %v944 = vsel %vm935, %v921, %v940
        %v945 = vsel %vm936, %v924, %v941
        %v946 = vsel %vm937, %v929, %v942
        %v947 = vsel %vm938, %v932, %v943
        %v948 = vadd.f32 %v944, %v777
        %v949 = vadd.f32 %v945, %v781
        %v950 = vadd.f32 %v946, %v787
        %v951 = vadd.f32 %v947, %v791
        %v952 = vld [vmem:[%s9] sm:$0x1]
        %v954 = vlaneseq
        %v955 = vshrl.u32 %v954, 7
        %v956 = vsub.s32 0, %v955
        %v957 = vrot.slane %v952, %v956
        %v959 = vadd.f32 %v948, %v957
        %v960 = vadd.f32 %v949, %v957
        %v961 = vadd.f32 %v950, %v957
        %v962 = vadd.f32 %v951, %v957
        %v963 = vld [vmem:[#allocation6] sm:$0xf]
        %v964 = vld [vmem:[#allocation6 + $0x4] sm:$0xf]
        %v965 = vld [vmem:[#allocation6 + $0x8] sm:$0xf]
        %v966 = vld [vmem:[#allocation6 + $0xc] sm:$0xf]
        %v967 = vld [vmem:[#allocation6 + $0x10] sm:$0xf]
        %v968 = vld [vmem:[#allocation6 + $0x14] sm:$0xf]
        %v969 = vld [vmem:[#allocation6 + $0x18] sm:$0xf]
        %v970 = vld [vmem:[#allocation6 + $0x1c] sm:$0xf]
        %v971 = vld [vmem:[#allocation6 + $0x20] sm:$0xf]
        %v972 = vld [vmem:[#allocation6 + $0x24] sm:$0xf]
        %v973 = vld [vmem:[#allocation6 + $0x28] sm:$0xf]
        %v974 = vld [vmem:[#allocation6 + $0x2c] sm:$0xf]
        %v975 = vld [vmem:[#allocation6 + $0x30] sm:$0xf]
        %v976 = vld [vmem:[#allocation6 + $0x34] sm:$0xf]
        %v977 = vld [vmem:[#allocation6 + $0x38] sm:$0xf]
        %v978 = vld [vmem:[#allocation6 + $0x3c] sm:$0xf]
        %v979 = vld [vmem:[#allocation8] sm:$0xf]
        %v980 = vld [vmem:[#allocation8 + $0x4] sm:$0xf]
        %v981 = vld [vmem:[#allocation8 + $0x8] sm:$0xf]
        %v982 = vld [vmem:[#allocation8 + $0xc] sm:$0xf]
        %v983 = vld [vmem:[#allocation8 + $0x10] sm:$0xf]
        %v984 = vld [vmem:[#allocation8 + $0x14] sm:$0xf]
        %v985 = vld [vmem:[#allocation8 + $0x18] sm:$0xf]
        %v986 = vld [vmem:[#allocation8 + $0x1c] sm:$0xf]
        %v987 = vld [vmem:[#allocation8 + $0x20] sm:$0xf]
        %v988 = vld [vmem:[#allocation8 + $0x24] sm:$0xf]
        %v989 = vld [vmem:[#allocation8 + $0x28] sm:$0xf]
        %v990 = vld [vmem:[#allocation8 + $0x2c] sm:$0xf]
        %v991 = vld [vmem:[#allocation8 + $0x30] sm:$0xf]
        %v992 = vld [vmem:[#allocation8 + $0x34] sm:$0xf]
        %v993 = vld [vmem:[#allocation8 + $0x38] sm:$0xf]
        %v994 = vld [vmem:[#allocation8 + $0x3c] sm:$0xf]
        %v995 = vld [vmem:[%s10 + $0x1] sm:$0x1]
        %v996 = vmul.f32 %v959, %v597
        %v997 = vmul.f32 %v960, %v602
        %v998 = vmul.f32 %v961, %v607
        %v999 = vmul.f32 %v962, %v612
        %1000 = vst [vmem:[#allocation2 + $0x10] sm:$0xff] %v996
        %1001 = vst [vmem:[#allocation2 + $0x18] sm:$0xff] %v997
        %1002 = vst [vmem:[#allocation2 + $0x20] sm:$0xff] %v998
        %1003 = vst [vmem:[#allocation2 + $0x28] sm:$0xff] %v999
        %v1004 = vld [vmem:[#allocation2 + $0x10] sm:$0xff]
        %v1005 = vld [vmem:[#allocation2 + $0x18] sm:$0xff]
        %v1006 = vld [vmem:[#allocation2 + $0x20] sm:$0xff]
        %v1007 = vld [vmem:[#allocation2 + $0x28] sm:$0xff]
        %v1008 = vpack.c.bf16 %v1005, %v1004
        %v1009 = vpack.c.bf16 %v1007, %v1006
        %v1010 = vld [vmem:[#allocation2 + $0x11] sm:$0xff]
        %v1011 = vld [vmem:[#allocation2 + $0x19] sm:$0xff]
        %v1012 = vld [vmem:[#allocation2 + $0x21] sm:$0xff]
        %v1013 = vld [vmem:[#allocation2 + $0x29] sm:$0xff]
        %v1014 = vpack.c.bf16 %v1011, %v1010
        %v1015 = vpack.c.bf16 %v1013, %v1012
        %v1032 = vunpack.c.l.b16 %v979
        %v1033 = vunpack.c.l.b16 %v980
        %v1034 = vunpack.c.l.b16 %v981
        %v1035 = vunpack.c.l.b16 %v982
        %v1036 = vunpack.c.l.b16 %v983
        %v1037 = vunpack.c.l.b16 %v984
        %v1038 = vunpack.c.l.b16 %v985
        %v1039 = vunpack.c.l.b16 %v986
        %v1040 = vunpack.c.l.b16 %v987
        %v1041 = vunpack.c.l.b16 %v988
        %v1042 = vunpack.c.l.b16 %v989
        %v1043 = vunpack.c.l.b16 %v990
        %v1044 = vunpack.c.l.b16 %v991
        %v1045 = vunpack.c.l.b16 %v992
        %v1046 = vunpack.c.l.b16 %v993
        %v1047 = vunpack.c.l.b16 %v994
        %v1048 = vpack.c.b16 %v1033, %v1032
        %v1049 = vpack.c.b16 %v1035, %v1034
        %v1050 = vpack.c.b16 %v1037, %v1036
        %v1051 = vpack.c.b16 %v1039, %v1038
        %v1052 = vpack.c.b16 %v1041, %v1040
        %v1053 = vpack.c.b16 %v1043, %v1042
        %v1054 = vpack.c.b16 %v1045, %v1044
        %v1055 = vpack.c.b16 %v1047, %v1046
        %1064 = vmatprep.subr.bf16.mxu0 0
        %1065 = vmatpush1.bf16.msra.mxu0 %v1048
        %1066 = vmatprep.subr.bf16.mxu0 0
        %1067 = vmatpush1.bf16.msra.mxu0 %v1049
        %1068 = vmatprep.subr.bf16.mxu0 0
        %1069 = vmatpush1.bf16.msra.mxu0 %v1050
        %1070 = vmatprep.subr.bf16.mxu0 0
        %1071 = vmatpush1.bf16.msra.mxu0 %v1051
        %1072 = vmatprep.subr.bf16.mxu0 0
        %1073 = vmatpush1.bf16.msra.mxu0 %v1052
        %1074 = vmatprep.subr.bf16.mxu0 0
        %1075 = vmatpush1.bf16.msra.mxu0 %v1053
        %1076 = vmatprep.subr.bf16.mxu0 0
        %1077 = vmatpush1.bf16.msra.mxu0 %v1054
        %1078 = vmatprep.subr.bf16.mxu0 0
        %1079 = vmatpush1.bf16.msra.mxu0 %v1055
        %1080 = vmatprep.subr.bf16.mxu0 0
        %1081 = vmatpush1.bf16.msra.mxu0 0
        %1082 = vmatprep.subr.bf16.mxu0 0
        %1083 = vmatpush1.bf16.msra.mxu0 0
        %1084 = vmatprep.subr.bf16.mxu0 0
        %1085 = vmatpush1.bf16.msra.mxu0 0
        %1086 = vmatprep.subr.bf16.mxu0 0
        %1087 = vmatpush1.bf16.msra.mxu0 0
        %1088 = vmatprep.subr.bf16.mxu0 0
        %1089 = vmatpush1.bf16.msra.mxu0 0
        %1090 = vmatprep.subr.bf16.mxu0 0
        %1091 = vmatpush1.bf16.msra.mxu0 0
        %1092 = vmatprep.subr.bf16.mxu0 0
        %1093 = vmatpush1.bf16.msra.mxu0 0
        %1094 = vmatprep.subr.bf16.mxu0 0
        %1095 = vmatpush1.bf16.msra.mxu0 0
        %1096 = vmatprep.mubr.bf16.mxu0 0
        %1097 = vmatmul.mubr.bf16.gmra.mrb[0].mxu0 %v1014
        %v1098 = vpop.f32.mrb[0].mxu0
        %v1099 = vadd.f32 0.0, %v1098
        %v1100 = vpop.f32.mrb[0].mxu0
        %v1101 = vpop.f32.mrb[0].mxu0
        %v1102 = vadd.f32 0.0, %v1101
        %v1103 = vpop.f32.mrb[0].mxu0
        %1104 = vmatprep.mubr.bf16.mxu0 0
        %1105 = vmatmul.mubr.bf16.gmra.mrb[0].mxu0 %v1015
        %v1106 = vpop.f32.mrb[0].mxu0
        %v1107 = vadd.f32 0.0, %v1106
        %v1108 = vpop.f32.mrb[0].mxu0
        %v1109 = vpop.f32.mrb[0].mxu0
        %v1110 = vadd.f32 0.0, %v1109
        %v1111 = vpop.f32.mrb[0].mxu0
        %1112 = vdwg.mxu0
        %v1129 = vunpack.c.l.b16 %v963
        %v1130 = vunpack.c.l.b16 %v964
        %v1131 = vunpack.c.l.b16 %v965
        %v1132 = vunpack.c.l.b16 %v966
        %v1133 = vunpack.c.l.b16 %v967
        %v1134 = vunpack.c.l.b16 %v968
        %v1135 = vunpack.c.l.b16 %v969
        %v1136 = vunpack.c.l.b16 %v970
        %v1137 = vunpack.c.l.b16 %v971
        %v1138 = vunpack.c.l.b16 %v972
        %v1139 = vunpack.c.l.b16 %v973
        %v1140 = vunpack.c.l.b16 %v974
        %v1141 = vunpack.c.l.b16 %v975
        %v1142 = vunpack.c.l.b16 %v976
        %v1143 = vunpack.c.l.b16 %v977
        %v1144 = vunpack.c.l.b16 %v978
        %v1145 = vpack.c.b16 %v1130, %v1129
        %v1146 = vpack.c.b16 %v1132, %v1131
        %v1147 = vpack.c.b16 %v1134, %v1133
        %v1148 = vpack.c.b16 %v1136, %v1135
        %v1149 = vpack.c.b16 %v1138, %v1137
        %v1150 = vpack.c.b16 %v1140, %v1139
        %v1151 = vpack.c.b16 %v1142, %v1141
        %v1152 = vpack.c.b16 %v1144, %v1143
        %1161 = vmatprep.subr.bf16.mxu0 0
        %1162 = vmatpush1.bf16.msra.mxu0 %v1145
        %1163 = vmatprep.subr.bf16.mxu0 0
        %1164 = vmatpush1.bf16.msra.mxu0 %v1146
        %1165 = vmatprep.subr.bf16.mxu0 0
        %1166 = vmatpush1.bf16.msra.mxu0 %v1147
        %1167 = vmatprep.subr.bf16.mxu0 0
        %1168 = vmatpush1.bf16.msra.mxu0 %v1148
        %1169 = vmatprep.subr.bf16.mxu0 0
        %1170 = vmatpush1.bf16.msra.mxu0 %v1149
        %1171 = vmatprep.subr.bf16.mxu0 0
        %1172 = vmatpush1.bf16.msra.mxu0 %v1150
        %1173 = vmatprep.subr.bf16.mxu0 0
        %1174 = vmatpush1.bf16.msra.mxu0 %v1151
        %1175 = vmatprep.subr.bf16.mxu0 0
        %1176 = vmatpush1.bf16.msra.mxu0 %v1152
        %1177 = vmatprep.subr.bf16.mxu0 0
        %1178 = vmatpush1.bf16.msra.mxu0 0
        %1179 = vmatprep.subr.bf16.mxu0 0
        %1180 = vmatpush1.bf16.msra.mxu0 0
        %1181 = vmatprep.subr.bf16.mxu0 0
        %1182 = vmatpush1.bf16.msra.mxu0 0
        %1183 = vmatprep.subr.bf16.mxu0 0
        %1184 = vmatpush1.bf16.msra.mxu0 0
        %1185 = vmatprep.subr.bf16.mxu0 0
        %1186 = vmatpush1.bf16.msra.mxu0 0
        %1187 = vmatprep.subr.bf16.mxu0 0
        %1188 = vmatpush1.bf16.msra.mxu0 0
        %1189 = vmatprep.subr.bf16.mxu0 0
        %1190 = vmatpush1.bf16.msra.mxu0 0
        %1191 = vmatprep.subr.bf16.mxu0 0
        %1192 = vmatpush1.bf16.msra.mxu0 0
        %1193 = vmatprep.mubr.bf16.mxu0 0
        %1194 = vmatmul.mubr.bf16.gmra.mrb[0].mxu0 %v1008
        %v1195 = vpop.f32.mrb[0].mxu0
        %v1196 = vadd.f32 %v1099, %v1195
        %v1197 = vpop.f32.mrb[0].mxu0
        %v1198 = vpop.f32.mrb[0].mxu0
        %v1199 = vadd.f32 %v1102, %v1198
        %v1200 = vpop.f32.mrb[0].mxu0
        %1201 = vmatprep.mubr.bf16.mxu0 0
        %1202 = vmatmul.mubr.bf16.gmra.mrb[0].mxu0 %v1009
        %v1203 = vpop.f32.mrb[0].mxu0
        %v1204 = vadd.f32 %v1107, %v1203
        %v1205 = vpop.f32.mrb[0].mxu0
        %v1206 = vpop.f32.mrb[0].mxu0
        %v1207 = vadd.f32 %v1110, %v1206
        %v1208 = vpop.f32.mrb[0].mxu0
        %1209 = vdwg.mxu0
        %v1210 = vlaneseq
        %v1211 = vshrl.u32 %v1210, 7
        %v1212 = vsub.s32 0, %v1211
        %v1213 = vrot.slane %v995, %v1212
        %v1214 = vadd.f32 %v1196, %v1213
        %v1215 = vadd.f32 %v1199, %v1213
        %v1216 = vadd.f32 %v1204, %v1213
        %v1217 = vadd.f32 %v1207, %v1213
        %vm1218 = vcmp.ge.f32.partialorder %v1214, 0.0
        %vm1219 = vcmp.ge.f32.partialorder %v1215, 0.0
        %vm1220 = vcmp.ge.f32.partialorder %v1216, 0.0
        %vm1221 = vcmp.ge.f32.partialorder %v1217, 0.0
        %v1222 = vstv %s616
        %v1223 = vmul.f32 %v1222, %v1214
        %v1224 = vmul.f32 %v1222, %v1215
        %v1225 = vmul.f32 %v1222, %v1216
        %v1226 = vmul.f32 %v1222, %v1217
        %v1227 = vsel %vm1218, %v1214, %v1223
        %v1228 = vsel %vm1219, %v1215, %v1224
        %v1229 = vsel %vm1220, %v1216, %v1225
        %v1230 = vsel %vm1221, %v1217, %v1226
        %v1231 = vld [vmem:[#allocation9] sm:$0xf]
        %v1232 = vld [vmem:[#allocation9 + $0x4] sm:$0xf]
        %v1233 = vld [vmem:[#allocation9 + $0x8] sm:$0xf]
        %v1234 = vld [vmem:[#allocation9 + $0xc] sm:$0xf]
        %v1235 = vld [vmem:[#allocation9 + $0x10] sm:$0xf]
        %v1236 = vld [vmem:[#allocation9 + $0x14] sm:$0xf]
        %v1237 = vld [vmem:[#allocation9 + $0x18] sm:$0xf]
        %v1238 = vld [vmem:[#allocation9 + $0x1c] sm:$0xf]
        %v1239 = vld [vmem:[#allocation9 + $0x20] sm:$0xf]
        %v1240 = vld [vmem:[#allocation9 + $0x24] sm:$0xf]
        %v1241 = vld [vmem:[#allocation9 + $0x28] sm:$0xf]
        %v1242 = vld [vmem:[#allocation9 + $0x2c] sm:$0xf]
        %v1243 = vld [vmem:[#allocation9 + $0x30] sm:$0xf]
        %v1244 = vld [vmem:[#allocation9 + $0x34] sm:$0xf]
        %v1245 = vld [vmem:[#allocation9 + $0x38] sm:$0xf]
        %v1246 = vld [vmem:[#allocation9 + $0x3c] sm:$0xf]
        %v1247 = vld [vmem:[#allocation11] sm:$0xf]
        %v1248 = vld [vmem:[#allocation11 + $0x4] sm:$0xf]
        %v1249 = vld [vmem:[#allocation11 + $0x8] sm:$0xf]
        %v1250 = vld [vmem:[#allocation11 + $0xc] sm:$0xf]
        %v1251 = vld [vmem:[#allocation11 + $0x10] sm:$0xf]
        %v1252 = vld [vmem:[#allocation11 + $0x14] sm:$0xf]
        %v1253 = vld [vmem:[#allocation11 + $0x18] sm:$0xf]
        %v1254 = vld [vmem:[#allocation11 + $0x1c] sm:$0xf]
        %v1255 = vld [vmem:[#allocation11 + $0x20] sm:$0xf]
        %v1256 = vld [vmem:[#allocation11 + $0x24] sm:$0xf]
        %v1257 = vld [vmem:[#allocation11 + $0x28] sm:$0xf]
        %v1258 = vld [vmem:[#allocation11 + $0x2c] sm:$0xf]
        %v1259 = vld [vmem:[#allocation11 + $0x30] sm:$0xf]
        %v1260 = vld [vmem:[#allocation11 + $0x34] sm:$0xf]
        %v1261 = vld [vmem:[#allocation11 + $0x38] sm:$0xf]
        %v1262 = vld [vmem:[#allocation11 + $0x3c] sm:$0xf]
        %v1263 = vld [vmem:[#allocation14 + $0x1] sm:$0x1]
        %v1264 = vmul.f32 %v1227, %v597
        %v1265 = vmul.f32 %v1228, %v602
        %v1266 = vmul.f32 %v1229, %v607
        %v1267 = vmul.f32 %v1230, %v612
        %1268 = vst [vmem:[#allocation2 + $0x10] sm:$0xff] %v1264
        %1269 = vst [vmem:[#allocation2 + $0x18] sm:$0xff] %v1265
        %1270 = vst [vmem:[#allocation2 + $0x20] sm:$0xff] %v1266
        %1271 = vst [vmem:[#allocation2 + $0x28] sm:$0xff] %v1267
        %v1272 = vld [vmem:[#allocation2 + $0x10] sm:$0xff]
        %v1273 = vld [vmem:[#allocation2 + $0x18] sm:$0xff]
        %v1274 = vld [vmem:[#allocation2 + $0x20] sm:$0xff]
        %v1275 = vld [vmem:[#allocation2 + $0x28] sm:$0xff]
        %v1276 = vpack.c.bf16 %v1273, %v1272
        %v1277 = vpack.c.bf16 %v1275, %v1274
        %v1278 = vld [vmem:[#allocation2 + $0x11] sm:$0xff]
        %v1279 = vld [vmem:[#allocation2 + $0x19] sm:$0xff]
        %v1280 = vld [vmem:[#allocation2 + $0x21] sm:$0xff]
        %v1281 = vld [vmem:[#allocation2 + $0x29] sm:$0xff]
        %v1282 = vpack.c.bf16 %v1279, %v1278
        %v1283 = vpack.c.bf16 %v1281, %v1280
        %v1300 = vunpack.c.l.b16 %v1247
        %v1301 = vunpack.c.l.b16 %v1248
        %v1302 = vunpack.c.l.b16 %v1249
        %v1303 = vunpack.c.l.b16 %v1250
        %v1304 = vunpack.c.l.b16 %v1251
        %v1305 = vunpack.c.l.b16 %v1252
        %v1306 = vunpack.c.l.b16 %v1253
        %v1307 = vunpack.c.l.b16 %v1254
        %v1308 = vunpack.c.l.b16 %v1255
        %v1309 = vunpack.c.l.b16 %v1256
        %v1310 = vunpack.c.l.b16 %v1257
        %v1311 = vunpack.c.l.b16 %v1258
        %v1312 = vunpack.c.l.b16 %v1259
        %v1313 = vunpack.c.l.b16 %v1260
        %v1314 = vunpack.c.l.b16 %v1261
        %v1315 = vunpack.c.l.b16 %v1262
        %v1316 = vpack.c.b16 %v1301, %v1300
        %v1317 = vpack.c.b16 %v1303, %v1302
        %v1318 = vpack.c.b16 %v1305, %v1304
        %v1319 = vpack.c.b16 %v1307, %v1306
        %v1320 = vpack.c.b16 %v1309, %v1308
        %v1321 = vpack.c.b16 %v1311, %v1310
        %v1322 = vpack.c.b16 %v1313, %v1312
        %v1323 = vpack.c.b16 %v1315, %v1314
        %1332 = vmatprep.subr.bf16.mxu0 0
        %1333 = vmatpush1.bf16.msra.mxu0 %v1316
        %1334 = vmatprep.subr.bf16.mxu0 0
        %1335 = vmatpush1.bf16.msra.mxu0 %v1317
        %1336 = vmatprep.subr.bf16.mxu0 0
        %1337 = vmatpush1.bf16.msra.mxu0 %v1318
        %1338 = vmatprep.subr.bf16.mxu0 0
        %1339 = vmatpush1.bf16.msra.mxu0 %v1319
        %1340 = vmatprep.subr.bf16.mxu0 0
        %1341 = vmatpush1.bf16.msra.mxu0 %v1320
        %1342 = vmatprep.subr.bf16.mxu0 0
        %1343 = vmatpush1.bf16.msra.mxu0 %v1321
        %1344 = vmatprep.subr.bf16.mxu0 0
        %1345 = vmatpush1.bf16.msra.mxu0 %v1322
        %1346 = vmatprep.subr.bf16.mxu0 0
        %1347 = vmatpush1.bf16.msra.mxu0 %v1323
        %1348 = vmatprep.subr.bf16.mxu0 0
        %1349 = vmatpush1.bf16.msra.mxu0 0
        %1350 = vmatprep.subr.bf16.mxu0 0
        %1351 = vmatpush1.bf16.msra.mxu0 0
        %1352 = vmatprep.subr.bf16.mxu0 0
        %1353 = vmatpush1.bf16.msra.mxu0 0
        %1354 = vmatprep.subr.bf16.mxu0 0
        %1355 = vmatpush1.bf16.msra.mxu0 0
        %1356 = vmatprep.subr.bf16.mxu0 0
        %1357 = vmatpush1.bf16.msra.mxu0 0
        %1358 = vmatprep.subr.bf16.mxu0 0
        %1359 = vmatpush1.bf16.msra.mxu0 0
        %1360 = vmatprep.subr.bf16.mxu0 0
        %1361 = vmatpush1.bf16.msra.mxu0 0
        %1362 = vmatprep.subr.bf16.mxu0 0
        %1363 = vmatpush1.bf16.msra.mxu0 0
        %1364 = vmatprep.mubr.bf16.mxu0 0
        %1365 = vmatmul.mubr.bf16.gmra.mrb[0].mxu0 %v1282
        %v1366 = vpop.f32.mrb[0].mxu0
        %v1367 = vadd.f32 0.0, %v1366
        %v1368 = vpop.f32.mrb[0].mxu0
        %v1369 = vpop.f32.mrb[0].mxu0
        %v1370 = vadd.f32 0.0, %v1369
        %v1371 = vpop.f32.mrb[0].mxu0
        %1372 = vmatprep.mubr.bf16.mxu0 0
        %1373 = vmatmul.mubr.bf16.gmra.mrb[0].mxu0 %v1283
        %v1374 = vpop.f32.mrb[0].mxu0
        %v1375 = vadd.f32 0.0, %v1374
        %v1376 = vpop.f32.mrb[0].mxu0
        %v1377 = vpop.f32.mrb[0].mxu0
        %v1378 = vadd.f32 0.0, %v1377
        %v1379 = vpop.f32.mrb[0].mxu0
        %1380 = vdwg.mxu0
        %v1397 = vunpack.c.l.b16 %v1231
        %v1398 = vunpack.c.l.b16 %v1232
        %v1399 = vunpack.c.l.b16 %v1233
        %v1400 = vunpack.c.l.b16 %v1234
        %v1401 = vunpack.c.l.b16 %v1235
        %v1402 = vunpack.c.l.b16 %v1236
        %v1403 = vunpack.c.l.b16 %v1237
        %v1404 = vunpack.c.l.b16 %v1238
        %v1405 = vunpack.c.l.b16 %v1239
        %v1406 = vunpack.c.l.b16 %v1240
        %v1407 = vunpack.c.l.b16 %v1241
        %v1408 = vunpack.c.l.b16 %v1242
        %v1409 = vunpack.c.l.b16 %v1243
        %v1410 = vunpack.c.l.b16 %v1244
        %v1411 = vunpack.c.l.b16 %v1245
        %v1412 = vunpack.c.l.b16 %v1246
        %v1413 = vpack.c.b16 %v1398, %v1397
        %v1414 = vpack.c.b16 %v1400, %v1399
        %v1415 = vpack.c.b16 %v1402, %v1401
        %v1416 = vpack.c.b16 %v1404, %v1403
        %v1417 = vpack.c.b16 %v1406, %v1405
        %v1418 = vpack.c.b16 %v1408, %v1407
        %v1419 = vpack.c.b16 %v1410, %v1409
        %v1420 = vpack.c.b16 %v1412, %v1411
        %1429 = vmatprep.subr.bf16.mxu0 0
        %1430 = vmatpush1.bf16.msra.mxu0 %v1413
        %1431 = vmatprep.subr.bf16.mxu0 0
        %1432 = vmatpush1.bf16.msra.mxu0 %v1414
        %1433 = vmatprep.subr.bf16.mxu0 0
        %1434 = vmatpush1.bf16.msra.mxu0 %v1415
        %1435 = vmatprep.subr.bf16.mxu0 0
        %1436 = vmatpush1.bf16.msra.mxu0 %v1416
        %1437 = vmatprep.subr.bf16.mxu0 0
        %1438 = vmatpush1.bf16.msra.mxu0 %v1417
        %1439 = vmatprep.subr.bf16.mxu0 0
        %1440 = vmatpush1.bf16.msra.mxu0 %v1418
        %1441 = vmatprep.subr.bf16.mxu0 0
        %1442 = vmatpush1.bf16.msra.mxu0 %v1419
        %1443 = vmatprep.subr.bf16.mxu0 0
        %1444 = vmatpush1.bf16.msra.mxu0 %v1420
        %1445 = vmatprep.subr.bf16.mxu0 0
        %1446 = vmatpush1.bf16.msra.mxu0 0
        %1447 = vmatprep.subr.bf16.mxu0 0
        %1448 = vmatpush1.bf16.msra.mxu0 0
        %1449 = vmatprep.subr.bf16.mxu0 0
        %1450 = vmatpush1.bf16.msra.mxu0 0
        %1451 = vmatprep.subr.bf16.mxu0 0
        %1452 = vmatpush1.bf16.msra.mxu0 0
        %1453 = vmatprep.subr.bf16.mxu0 0
        %1454 = vmatpush1.bf16.msra.mxu0 0
        %1455 = vmatprep.subr.bf16.mxu0 0
        %1456 = vmatpush1.bf16.msra.mxu0 0
        %1457 = vmatprep.subr.bf16.mxu0 0
        %1458 = vmatpush1.bf16.msra.mxu0 0
        %1459 = vmatprep.subr.bf16.mxu0 0
        %1460 = vmatpush1.bf16.msra.mxu0 0
        %1461 = vmatprep.mubr.bf16.mxu0 0
        %1462 = vmatmul.mubr.bf16.gmra.mrb[0].mxu0 %v1276
        %v1463 = vpop.f32.mrb[0].mxu0
        %v1464 = vadd.f32 %v1367, %v1463
        %v1465 = vpop.f32.mrb[0].mxu0
        %v1466 = vpop.f32.mrb[0].mxu0
        %v1467 = vadd.f32 %v1370, %v1466
        %v1468 = vpop.f32.mrb[0].mxu0
        %1469 = vmatprep.mubr.bf16.mxu0 0
        %1470 = vmatmul.mubr.bf16.gmra.mrb[0].mxu0 %v1277
        %v1471 = vpop.f32.mrb[0].mxu0
        %v1472 = vadd.f32 %v1375, %v1471
        %v1473 = vpop.f32.mrb[0].mxu0
        %v1474 = vpop.f32.mrb[0].mxu0
        %v1475 = vadd.f32 %v1378, %v1474
        %v1476 = vpop.f32.mrb[0].mxu0
        %1477 = vdwg.mxu0
        %v1478 = vlaneseq
        %v1479 = vshrl.u32 %v1478, 7
        %v1480 = vsub.s32 0, %v1479
        %v1481 = vrot.slane %v1263, %v1480
        %v1482 = vadd.f32 %v1464, %v1481
        %v1483 = vadd.f32 %v1467, %v1481
        %v1484 = vadd.f32 %v1472, %v1481
        %v1485 = vadd.f32 %v1475, %v1481
        %vm1486 = vcmp.ge.f32.partialorder %v1482, 0.0
        %vm1487 = vcmp.ge.f32.partialorder %v1483, 0.0
        %vm1488 = vcmp.ge.f32.partialorder %v1484, 0.0
        %vm1489 = vcmp.ge.f32.partialorder %v1485, 0.0
        %v1490 = vstv %s617
        %v1491 = vmul.f32 %v1490, %v1482
        %v1492 = vmul.f32 %v1490, %v1483
        %v1493 = vmul.f32 %v1490, %v1484
        %v1494 = vmul.f32 %v1490, %v1485
        %v1495 = vsel %vm1486, %v1482, %v1491
        %v1496 = vsel %vm1487, %v1483, %v1492
        %v1497 = vsel %vm1488, %v1484, %v1493
        %v1498 = vsel %vm1489, %v1485, %v1494
        %v1499 = vadd.f32 %v1495, %v959
        %v1500 = vadd.f32 %v1496, %v960
        %v1501 = vadd.f32 %v1497, %v961
        %v1502 = vadd.f32 %v1498, %v962
        %s1503 = scalar_lea.vmem [#allocation6], 64
        %v1504 = vld [vmem:[%s1503] sm:$0xf]
        %v1505 = vld [vmem:[%s1503 + $0x4] sm:$0xf]
        %v1506 = vld [vmem:[%s1503 + $0x8] sm:$0xf]
        %v1507 = vld [vmem:[%s1503 + $0xc] sm:$0xf]
        %v1508 = vld [vmem:[%s1503 + $0x10] sm:$0xf]
        %v1509 = vld [vmem:[%s1503 + $0x14] sm:$0xf]
        %v1510 = vld [vmem:[%s1503 + $0x18] sm:$0xf]
        %v1511 = vld [vmem:[%s1503 + $0x1c] sm:$0xf]
        %v1512 = vld [vmem:[%s1503 + $0x20] sm:$0xf]
        %v1513 = vld [vmem:[%s1503 + $0x24] sm:$0xf]
        %v1514 = vld [vmem:[%s1503 + $0x28] sm:$0xf]
        %v1515 = vld [vmem:[%s1503 + $0x2c] sm:$0xf]
        %v1516 = vld [vmem:[%s1503 + $0x30] sm:$0xf]
        %v1517 = vld [vmem:[%s1503 + $0x34] sm:$0xf]
        %v1518 = vld [vmem:[%s1503 + $0x38] sm:$0xf]
        %v1519 = vld [vmem:[%s1503 + $0x3c] sm:$0xf]
        %s1520 = scalar_lea.vmem [#allocation8], 64
        %v1521 = vld [vmem:[%s1520] sm:$0xf]
        %v1522 = vld [vmem:[%s1520 + $0x4] sm:$0xf]
        %v1523 = vld [vmem:[%s1520 + $0x8] sm:$0xf]
        %v1524 = vld [vmem:[%s1520 + $0xc] sm:$0xf]
        %v1525 = vld [vmem:[%s1520 + $0x10] sm:$0xf]
        %v1526 = vld [vmem:[%s1520 + $0x14] sm:$0xf]
        %v1527 = vld [vmem:[%s1520 + $0x18] sm:$0xf]
        %v1528 = vld [vmem:[%s1520 + $0x1c] sm:$0xf]
        %v1529 = vld [vmem:[%s1520 + $0x20] sm:$0xf]
        %v1530 = vld [vmem:[%s1520 + $0x24] sm:$0xf]
        %v1531 = vld [vmem:[%s1520 + $0x28] sm:$0xf]
        %v1532 = vld [vmem:[%s1520 + $0x2c] sm:$0xf]
        %v1533 = vld [vmem:[%s1520 + $0x30] sm:$0xf]
        %v1534 = vld [vmem:[%s1520 + $0x34] sm:$0xf]
        %v1535 = vld [vmem:[%s1520 + $0x38] sm:$0xf]
        %v1536 = vld [vmem:[%s1520 + $0x3c] sm:$0xf]
        %v1537 = vld [vmem:[%s10 + $0x2] sm:$0x1]
        %v1538 = vmul.f32 %v1499, %v597
        %v1539 = vmul.f32 %v1500, %v602
        %v1540 = vmul.f32 %v1501, %v607
        %v1541 = vmul.f32 %v1502, %v612
        %1542 = vst [vmem:[#allocation2 + $0x10] sm:$0xff] %v1538
        %1543 = vst [vmem:[#allocation2 + $0x18] sm:$0xff] %v1539
        %1544 = vst [vmem:[#allocation2 + $0x20] sm:$0xff] %v1540
        %1545 = vst [vmem:[#allocation2 + $0x28] sm:$0xff] %v1541
        %v1546 = vld [vmem:[#allocation2 + $0xf] sm:$0xff]
        %v1547 = vld [vmem:[#allocation2 + $0x17] sm:$0xff]
        %v1548 = vld [vmem:[#allocation2 + $0x1f] sm:$0xff]
        %v1549 = vld [vmem:[#allocation2 + $0x27] sm:$0xff]
        %v1550 = vpack.c.bf16 %v1547, %v1546
        %v1551 = vpack.c.bf16 %v1549, %v1548
        %v1552 = vld [vmem:[#allocation2 + $0x11] sm:$0xff]
        %v1553 = vld [vmem:[#allocation2 + $0x19] sm:$0xff]
        %v1554 = vld [vmem:[#allocation2 + $0x21] sm:$0xff]
        %v1555 = vld [vmem:[#allocation2 + $0x29] sm:$0xff]
        %v1556 = vpack.c.bf16 %v1553, %v1552
        %v1557 = vpack.c.bf16 %v1555, %v1554
        %v1574 = vunpack.c.l.b16 %v1521
        %v1575 = vunpack.c.l.b16 %v1522
        %v1576 = vunpack.c.l.b16 %v1523
        %v1577 = vunpack.c.l.b16 %v1524
        %v1578 = vunpack.c.l.b16 %v1525
        %v1579 = vunpack.c.l.b16 %v1526
        %v1580 = vunpack.c.l.b16 %v1527
        %v1581 = vunpack.c.l.b16 %v1528
        %v1582 = vunpack.c.l.b16 %v1529
        %v1583 = vunpack.c.l.b16 %v1530
        %v1584 = vunpack.c.l.b16 %v1531
        %v1585 = vunpack.c.l.b16 %v1532
        %v1586 = vunpack.c.l.b16 %v1533
        %v1587 = vunpack.c.l.b16 %v1534
        %v1588 = vunpack.c.l.b16 %v1535
        %v1589 = vunpack.c.l.b16 %v1536
        %v1590 = vpack.c.b16 %v1575, %v1574
        %v1591 = vpack.c.b16 %v1577, %v1576
        %v1592 = vpack.c.b16 %v1579, %v1578
        %v1593 = vpack.c.b16 %v1581, %v1580
        %v1594 = vpack.c.b16 %v1583, %v1582
        %v1595 = vpack.c.b16 %v1585, %v1584
        %v1596 = vpack.c.b16 %v1587, %v1586
        %v1597 = vpack.c.b16 %v1589, %v1588
        %1606 = vmatprep.subr.bf16.mxu0 0
        %1607 = vmatpush1.bf16.msra.mxu0 %v1590
        %1608 = vmatprep.subr.bf16.mxu0 0
        %1609 = vmatpush1.bf16.msra.mxu0 %v1591
        %1610 = vmatprep.subr.bf16.mxu0 0
        %1611 = vmatpush1.bf16.msra.mxu0 %v1592
        %1612 = vmatprep.subr.bf16.mxu0 0
        %1613 = vmatpush1.bf16.msra.mxu0 %v1593
        %1614 = vmatprep.subr.bf16.mxu0 0
        %1615 = vmatpush1.bf16.msra.mxu0 %v1594
        %1616 = vmatprep.subr.bf16.mxu0 0
        %1617 = vmatpush1.bf16.msra.mxu0 %v1595
        %1618 = vmatprep.subr.bf16.mxu0 0
        %1619 = vmatpush1.bf16.msra.mxu0 %v1596
        %1620 = vmatprep.subr.bf16.mxu0 0
        %1621 = vmatpush1.bf16.msra.mxu0 %v1597
        %1622 = vmatprep.subr.bf16.mxu0 0
        %1623 = vmatpush1.bf16.msra.mxu0 0
        %1624 = vmatprep.subr.bf16.mxu0 0
        %1625 = vmatpush1.bf16.msra.mxu0 0
        %1626 = vmatprep.subr.bf16.mxu0 0
        %1627 = vmatpush1.bf16.msra.mxu0 0
        %1628 = vmatprep.subr.bf16.mxu0 0
        %1629 = vmatpush1.bf16.msra.mxu0 0
        %1630 = vmatprep.subr.bf16.mxu0 0
        %1631 = vmatpush1.bf16.msra.mxu0 0
        %1632 = vmatprep.subr.bf16.mxu0 0
        %1633 = vmatpush1.bf16.msra.mxu0 0
        %1634 = vmatprep.subr.bf16.mxu0 0
        %1635 = vmatpush1.bf16.msra.mxu0 0
        %1636 = vmatprep.subr.bf16.mxu0 0
        %1637 = vmatpush1.bf16.msra.mxu0 0
        %1638 = vmatprep.mubr.bf16.mxu0 0
        %1639 = vmatmul.mubr.bf16.gmra.mrb[0].mxu0 %v1556
        %v1640 = vpop.f32.mrb[0].mxu0
        %v1641 = vadd.f32 0.0, %v1640
        %v1642 = vpop.f32.mrb[0].mxu0
        %v1643 = vpop.f32.mrb[0].mxu0
        %v1644 = vadd.f32 0.0, %v1643
        %v1645 = vpop.f32.mrb[0].mxu0
        %1646 = vmatprep.mubr.bf16.mxu0 0
        %1647 = vmatmul.mubr.bf16.gmra.mrb[0].mxu0 %v1557
        %v1648 = vpop.f32.mrb[0].mxu0
        %v1649 = vadd.f32 0.0, %v1648
        %v1650 = vpop.f32.mrb[0].mxu0
        %v1651 = vpop.f32.mrb[0].mxu0
        %v1652 = vadd.f32 0.0, %v1651
        %v1653 = vpop.f32.mrb[0].mxu0
        %1654 = vdwg.mxu0
        %v1671 = vunpack.c.l.b16 %v1504
        %v1672 = vunpack.c.l.b16 %v1505
        %v1673 = vunpack.c.l.b16 %v1506
        %v1674 = vunpack.c.l.b16 %v1507
        %v1675 = vunpack.c.l.b16 %v1508
        %v1676 = vunpack.c.l.b16 %v1509
        %v1677 = vunpack.c.l.b16 %v1510
        %v1678 = vunpack.c.l.b16 %v1511
        %v1679 = vunpack.c.l.b16 %v1512
        %v1680 = vunpack.c.l.b16 %v1513
        %v1681 = vunpack.c.l.b16 %v1514
        %v1682 = vunpack.c.l.b16 %v1515
        %v1683 = vunpack.c.l.b16 %v1516
        %v1684 = vunpack.c.l.b16 %v1517
        %v1685 = vunpack.c.l.b16 %v1518
        %v1686 = vunpack.c.l.b16 %v1519
        %v1687 = vpack.c.b16 %v1672, %v1671
        %v1688 = vpack.c.b16 %v1674, %v1673
        %v1689 = vpack.c.b16 %v1676, %v1675
        %v1690 = vpack.c.b16 %v1678, %v1677
        %v1691 = vpack.c.b16 %v1680, %v1679
        %v1692 = vpack.c.b16 %v1682, %v1681
        %v1693 = vpack.c.b16 %v1684, %v1683
        %v1694 = vpack.c.b16 %v1686, %v1685
        %1703 = vmatprep.subr.bf16.mxu0 0
        %1704 = vmatpush1.bf16.msra.mxu0 %v1687
        %1705 = vmatprep.subr.bf16.mxu0 0
        %1706 = vmatpush1.bf16.msra.mxu0 %v1688
        %1707 = vmatprep.subr.bf16.mxu0 0
        %1708 = vmatpush1.bf16.msra.mxu0 %v1689
        %1709 = vmatprep.subr.bf16.mxu0 0
        %1710 = vmatpush1.bf16.msra.mxu0 %v1690
        %1711 = vmatprep.subr.bf16.mxu0 0
        %1712 = vmatpush1.bf16.msra.mxu0 %v1691
        %1713 = vmatprep.subr.bf16.mxu0 0
        %1714 = vmatpush1.bf16.msra.mxu0 %v1692
        %1715 = vmatprep.subr.bf16.mxu0 0
        %1716 = vmatpush1.bf16.msra.mxu0 %v1693
        %1717 = vmatprep.subr.bf16.mxu0 0
        %1718 = vmatpush1.bf16.msra.mxu0 %v1694
        %1719 = vmatprep.subr.bf16.mxu0 0
        %1720 = vmatpush1.bf16.msra.mxu0 0
        %1721 = vmatprep.subr.bf16.mxu0 0
        %1722 = vmatpush1.bf16.msra.mxu0 0
        %1723 = vmatprep.subr.bf16.mxu0 0
        %1724 = vmatpush1.bf16.msra.mxu0 0
        %1725 = vmatprep.subr.bf16.mxu0 0
        %1726 = vmatpush1.bf16.msra.mxu0 0
        %1727 = vmatprep.subr.bf16.mxu0 0
        %1728 = vmatpush1.bf16.msra.mxu0 0
        %1729 = vmatprep.subr.bf16.mxu0 0
        %1730 = vmatpush1.bf16.msra.mxu0 0
        %1731 = vmatprep.subr.bf16.mxu0 0
        %1732 = vmatpush1.bf16.msra.mxu0 0
        %1733 = vmatprep.subr.bf16.mxu0 0
        %1734 = vmatpush1.bf16.msra.mxu0 0
        %1735 = vmatprep.mubr.bf16.mxu0 0
        %1736 = vmatmul.mubr.bf16.gmra.mrb[0].mxu0 %v1550
        %v1737 = vpop.f32.mrb[0].mxu0
        %v1738 = vadd.f32 %v1641, %v1737
        %v1739 = vpop.f32.mrb[0].mxu0
        %v1740 = vpop.f32.mrb[0].mxu0
        %v1741 = vadd.f32 %v1644, %v1740
        %v1742 = vpop.f32.mrb[0].mxu0
        %1743 = vmatprep.mubr.bf16.mxu0 0
        %1744 = vmatmul.mubr.bf16.gmra.mrb[0].mxu0 %v1551
        %v1745 = vpop.f32.mrb[0].mxu0
        %v1746 = vadd.f32 %v1649, %v1745
        %v1747 = vpop.f32.mrb[0].mxu0
        %v1748 = vpop.f32.mrb[0].mxu0
        %v1749 = vadd.f32 %v1652, %v1748
        %v1750 = vpop.f32.mrb[0].mxu0
        %1751 = vdwg.mxu0
        %v1752 = vlaneseq
        %v1753 = vshrl.u32 %v1752, 7
        %v1754 = vsub.s32 0, %v1753
        %v1755 = vrot.slane %v1537, %v1754
        %v1756 = vadd.f32 %v1738, %v1755
        %v1757 = vadd.f32 %v1741, %v1755
        %v1758 = vadd.f32 %v1746, %v1755
        %v1759 = vadd.f32 %v1749, %v1755
        %vm1760 = vcmp.ge.f32.partialorder %v1756, 0.0
        %vm1761 = vcmp.ge.f32.partialorder %v1757, 0.0
        %vm1762 = vcmp.ge.f32.partialorder %v1758, 0.0
        %vm1763 = vcmp.ge.f32.partialorder %v1759, 0.0
        %v1764 = vstv %s618
        %v1765 = vmul.f32 %v1764, %v1756
        %v1766 = vmul.f32 %v1764, %v1757
        %v1767 = vmul.f32 %v1764, %v1758
        %v1768 = vmul.f32 %v1764, %v1759
        %v1769 = vsel %vm1760, %v1756, %v1765
        %v1770 = vsel %vm1761, %v1757, %v1766
        %v1771 = vsel %vm1762, %v1758, %v1767
        %v1772 = vsel %vm1763, %v1759, %v1768
        %s1773 = scalar_lea.vmem [#allocation9], 64
        %v1774 = vld [vmem:[%s1773] sm:$0xf]
        %v1775 = vld [vmem:[%s1773 + $0x4] sm:$0xf]
        %v1776 = vld [vmem:[%s1773 + $0x8] sm:$0xf]
        %v1777 = vld [vmem:[%s1773 + $0xc] sm:$0xf]
        %v1778 = vld [vmem:[%s1773 + $0x10] sm:$0xf]
        %v1779 = vld [vmem:[%s1773 + $0x14] sm:$0xf]
        %v1780 = vld [vmem:[%s1773 + $0x18] sm:$0xf]
        %v1781 = vld [vmem:[%s1773 + $0x1c] sm:$0xf]
        %v1782 = vld [vmem:[%s1773 + $0x20] sm:$0xf]
        %v1783 = vld [vmem:[%s1773 + $0x24] sm:$0xf]
        %v1784 = vld [vmem:[%s1773 + $0x28] sm:$0xf]
        %v1785 = vld [vmem:[%s1773 + $0x2c] sm:$0xf]
        %v1786 = vld [vmem:[%s1773 + $0x30] sm:$0xf]
        %v1787 = vld [vmem:[%s1773 + $0x34] sm:$0xf]
        %v1788 = vld [vmem:[%s1773 + $0x38] sm:$0xf]
        %v1789 = vld [vmem:[%s1773 + $0x3c] sm:$0xf]
        %s1790 = scalar_lea.vmem [#allocation11], 64
        %v1791 = vld [vmem:[%s1790] sm:$0xf]
        %v1792 = vld [vmem:[%s1790 + $0x4] sm:$0xf]
        %v1793 = vld [vmem:[%s1790 + $0x8] sm:$0xf]
        %v1794 = vld [vmem:[%s1790 + $0xc] sm:$0xf]
        %v1795 = vld [vmem:[%s1790 + $0x10] sm:$0xf]
        %v1796 = vld [vmem:[%s1790 + $0x14] sm:$0xf]
        %v1797 = vld [vmem:[%s1790 + $0x18] sm:$0xf]
        %v1798 = vld [vmem:[%s1790 + $0x1c] sm:$0xf]
        %v1799 = vld [vmem:[%s1790 + $0x20] sm:$0xf]
        %v1800 = vld [vmem:[%s1790 + $0x24] sm:$0xf]
        %v1801 = vld [vmem:[%s1790 + $0x28] sm:$0xf]
        %v1802 = vld [vmem:[%s1790 + $0x2c] sm:$0xf]
        %v1803 = vld [vmem:[%s1790 + $0x30] sm:$0xf]
        %v1804 = vld [vmem:[%s1790 + $0x34] sm:$0xf]
        %v1805 = vld [vmem:[%s1790 + $0x38] sm:$0xf]
        %v1806 = vld [vmem:[%s1790 + $0x3c] sm:$0xf]
        %v1807 = vld [vmem:[#allocation14 + $0x2] sm:$0x1]
        %v1808 = vmul.f32 %v1769, %v597
        %v1809 = vmul.f32 %v1770, %v602
        %v1810 = vmul.f32 %v1771, %v607
        %v1811 = vmul.f32 %v1772, %v612
        %1812 = vst [vmem:[#allocation2 + $0x10] sm:$0xff] %v1808
        %1813 = vst [vmem:[#allocation2 + $0x18] sm:$0xff] %v1809
        %1814 = vst [vmem:[#allocation2 + $0x20] sm:$0xff] %v1810
        %1815 = vst [vmem:[#allocation2 + $0x28] sm:$0xff] %v1811
        %v1816 = vld [vmem:[#allocation2 + $0xf] sm:$0xff]
        %v1817 = vld [vmem:[#allocation2 + $0x17] sm:$0xff]
        %v1818 = vld [vmem:[#allocation2 + $0x1f] sm:$0xff]
        %v1819 = vld [vmem:[#allocation2 + $0x27] sm:$0xff]
        %v1820 = vpack.c.bf16 %v1817, %v1816
        %v1821 = vpack.c.bf16 %v1819, %v1818
        %v1822 = vld [vmem:[#allocation2 + $0x11] sm:$0xff]
        %v1823 = vld [vmem:[#allocation2 + $0x19] sm:$0xff]
        %v1824 = vld [vmem:[#allocation2 + $0x21] sm:$0xff]
        %v1825 = vld [vmem:[#allocation2 + $0x29] sm:$0xff]
        %v1826 = vpack.c.bf16 %v1823, %v1822
        %v1827 = vpack.c.bf16 %v1825, %v1824
        %v1844 = vunpack.c.l.b16 %v1791
        %v1845 = vunpack.c.l.b16 %v1792
        %v1846 = vunpack.c.l.b16 %v1793
        %v1847 = vunpack.c.l.b16 %v1794
        %v1848 = vunpack.c.l.b16 %v1795
        %v1849 = vunpack.c.l.b16 %v1796
        %v1850 = vunpack.c.l.b16 %v1797
        %v1851 = vunpack.c.l.b16 %v1798
        %v1852 = vunpack.c.l.b16 %v1799
        %v1853 = vunpack.c.l.b16 %v1800
        %v1854 = vunpack.c.l.b16 %v1801
        %v1855 = vunpack.c.l.b16 %v1802
        %v1856 = vunpack.c.l.b16 %v1803
        %v1857 = vunpack.c.l.b16 %v1804
        %v1858 = vunpack.c.l.b16 %v1805
        %v1859 = vunpack.c.l.b16 %v1806
        %v1860 = vpack.c.b16 %v1845, %v1844
        %v1861 = vpack.c.b16 %v1847, %v1846
        %v1862 = vpack.c.b16 %v1849, %v1848
        %v1863 = vpack.c.b16 %v1851, %v1850
        %v1864 = vpack.c.b16 %v1853, %v1852
        %v1865 = vpack.c.b16 %v1855, %v1854
        %v1866 = vpack.c.b16 %v1857, %v1856
        %v1867 = vpack.c.b16 %v1859, %v1858
        %1876 = vmatprep.subr.bf16.mxu0 0
        %1877 = vmatpush1.bf16.msra.mxu0 %v1860
        %1878 = vmatprep.subr.bf16.mxu0 0
        %1879 = vmatpush1.bf16.msra.mxu0 %v1861
        %1880 = vmatprep.subr.bf16.mxu0 0
        %1881 = vmatpush1.bf16.msra.mxu0 %v1862
        %1882 = vmatprep.subr.bf16.mxu0 0
        %1883 = vmatpush1.bf16.msra.mxu0 %v1863
        %1884 = vmatprep.subr.bf16.mxu0 0
        %1885 = vmatpush1.bf16.msra.mxu0 %v1864
        %1886 = vmatprep.subr.bf16.mxu0 0
        %1887 = vmatpush1.bf16.msra.mxu0 %v1865
        %1888 = vmatprep.subr.bf16.mxu0 0
        %1889 = vmatpush1.bf16.msra.mxu0 %v1866
        %1890 = vmatprep.subr.bf16.mxu0 0
        %1891 = vmatpush1.bf16.msra.mxu0 %v1867
        %1892 = vmatprep.subr.bf16.mxu0 0
        %1893 = vmatpush1.bf16.msra.mxu0 0
        %1894 = vmatprep.subr.bf16.mxu0 0
        %1895 = vmatpush1.bf16.msra.mxu0 0
        %1896 = vmatprep.subr.bf16.mxu0 0
        %1897 = vmatpush1.bf16.msra.mxu0 0
        %1898 = vmatprep.subr.bf16.mxu0 0
        %1899 = vmatpush1.bf16.msra.mxu0 0
        %1900 = vmatprep.subr.bf16.mxu0 0
        %1901 = vmatpush1.bf16.msra.mxu0 0
        %1902 = vmatprep.subr.bf16.mxu0 0
        %1903 = vmatpush1.bf16.msra.mxu0 0
        %1904 = vmatprep.subr.bf16.mxu0 0
        %1905 = vmatpush1.bf16.msra.mxu0 0
        %1906 = vmatprep.subr.bf16.mxu0 0
        %1907 = vmatpush1.bf16.msra.mxu0 0
        %1908 = vmatprep.mubr.bf16.mxu0 0
        %1909 = vmatmul.mubr.bf16.gmra.mrb[0].mxu0 %v1826
        %v1910 = vpop.f32.mrb[0].mxu0
        %v1911 = vadd.f32 0.0, %v1910
        %v1912 = vpop.f32.mrb[0].mxu0
        %v1913 = vpop.f32.mrb[0].mxu0
        %v1914 = vadd.f32 0.0, %v1913
        %v1915 = vpop.f32.mrb[0].mxu0
        %1916 = vmatprep.mubr.bf16.mxu0 0
        %1917 = vmatmul.mubr.bf16.gmra.mrb[0].mxu0 %v1827
        %v1918 = vpop.f32.mrb[0].mxu0
        %v1919 = vadd.f32 0.0, %v1918
        %v1920 = vpop.f32.mrb[0].mxu0
        %v1921 = vpop.f32.mrb[0].mxu0
        %v1922 = vadd.f32 0.0, %v1921
        %v1923 = vpop.f32.mrb[0].mxu0
        %1924 = vdwg.mxu0
        %v1941 = vunpack.c.l.b16 %v1774
        %v1942 = vunpack.c.l.b16 %v1775
        %v1943 = vunpack.c.l.b16 %v1776
        %v1944 = vunpack.c.l.b16 %v1777
        %v1945 = vunpack.c.l.b16 %v1778
        %v1946 = vunpack.c.l.b16 %v1779
        %v1947 = vunpack.c.l.b16 %v1780
        %v1948 = vunpack.c.l.b16 %v1781
        %v1949 = vunpack.c.l.b16 %v1782
        %v1950 = vunpack.c.l.b16 %v1783
        %v1951 = vunpack.c.l.b16 %v1784
        %v1952 = vunpack.c.l.b16 %v1785
        %v1953 = vunpack.c.l.b16 %v1786
        %v1954 = vunpack.c.l.b16 %v1787
        %v1955 = vunpack.c.l.b16 %v1788
        %v1956 = vunpack.c.l.b16 %v1789
        %v1957 = vpack.c.b16 %v1942, %v1941
        %v1958 = vpack.c.b16 %v1944, %v1943
        %v1959 = vpack.c.b16 %v1946, %v1945
        %v1960 = vpack.c.b16 %v1948, %v1947
        %v1961 = vpack.c.b16 %v1950, %v1949
        %v1962 = vpack.c.b16 %v1952, %v1951
        %v1963 = vpack.c.b16 %v1954, %v1953
        %v1964 = vpack.c.b16 %v1956, %v1955
        %1973 = vmatprep.subr.bf16.mxu0 0
        %1974 = vmatpush1.bf16.msra.mxu0 %v1957
        %1975 = vmatprep.subr.bf16.mxu0 0
        %1976 = vmatpush1.bf16.msra.mxu0 %v1958
        %1977 = vmatprep.subr.bf16.mxu0 0
        %1978 = vmatpush1.bf16.msra.mxu0 %v1959
        %1979 = vmatprep.subr.bf16.mxu0 0
        %1980 = vmatpush1.bf16.msra.mxu0 %v1960
        %1981 = vmatprep.subr.bf16.mxu0 0
        %1982 = vmatpush1.bf16.msra.mxu0 %v1961
        %1983 = vmatprep.subr.bf16.mxu0 0
        %1984 = vmatpush1.bf16.msra.mxu0 %v1962
        %1985 = vmatprep.subr.bf16.mxu0 0
        %1986 = vmatpush1.bf16.msra.mxu0 %v1963
        %1987 = vmatprep.subr.bf16.mxu0 0
        %1988 = vmatpush1.bf16.msra.mxu0 %v1964
        %1989 = vmatprep.subr.bf16.mxu0 0
        %1990 = vmatpush1.bf16.msra.mxu0 0
        %1991 = vmatprep.subr.bf16.mxu0 0
        %1992 = vmatpush1.bf16.msra.mxu0 0
        %1993 = vmatprep.subr.bf16.mxu0 0
        %1994 = vmatpush1.bf16.msra.mxu0 0
        %1995 = vmatprep.subr.bf16.mxu0 0
        %1996 = vmatpush1.bf16.msra.mxu0 0
        %1997 = vmatprep.subr.bf16.mxu0 0
        %1998 = vmatpush1.bf16.msra.mxu0 0
        %1999 = vmatprep.subr.bf16.mxu0 0
        %2000 = vmatpush1.bf16.msra.mxu0 0
        %2001 = vmatprep.subr.bf16.mxu0 0
        %2002 = vmatpush1.bf16.msra.mxu0 0
        %2003 = vmatprep.subr.bf16.mxu0 0
        %2004 = vmatpush1.bf16.msra.mxu0 0
        %2005 = vmatprep.mubr.bf16.mxu0 0
        %2006 = vmatmul.mubr.bf16.gmra.mrb[0].mxu0 %v1820
        %v2007 = vpop.f32.mrb[0].mxu0
        %v2008 = vadd.f32 %v1911, %v2007
        %v2009 = vpop.f32.mrb[0].mxu0
        %v2010 = vpop.f32.mrb[0].mxu0
        %v2011 = vadd.f32 %v1914, %v2010
        %v2012 = vpop.f32.mrb[0].mxu0
        %2013 = vmatprep.mubr.bf16.mxu0 0
        %2014 = vmatmul.mubr.bf16.gmra.mrb[0].mxu0 %v1821
        %v2015 = vpop.f32.mrb[0].mxu0
        %v2016 = vadd.f32 %v1919, %v2015
        %v2017 = vpop.f32.mrb[0].mxu0
        %v2018 = vpop.f32.mrb[0].mxu0
        %v2019 = vadd.f32 %v1922, %v2018
        %v2020 = vpop.f32.mrb[0].mxu0
        %2021 = vdwg.mxu0
        %v2022 = vlaneseq
        %v2023 = vshrl.u32 %v2022, 7
        %v2024 = vsub.s32 0, %v2023
        %v2025 = vrot.slane %v1807, %v2024
        %v2026 = vadd.f32 %v2008, %v2025
        %v2027 = vadd.f32 %v2011, %v2025
        %v2028 = vadd.f32 %v2016, %v2025
        %v2029 = vadd.f32 %v2019, %v2025
        %vm2030 = vcmp.ge.f32.partialorder %v2026, 0.0
        %vm2031 = vcmp.ge.f32.partialorder %v2027, 0.0
        %vm2032 = vcmp.ge.f32.partialorder %v2028, 0.0
        %vm2033 = vcmp.ge.f32.partialorder %v2029, 0.0
        %v2034 = vstv %s619
        %v2035 = vmul.f32 %v2034, %v2026
        %v2036 = vmul.f32 %v2034, %v2027
        %v2037 = vmul.f32 %v2034, %v2028
        %v2038 = vmul.f32 %v2034, %v2029
        %v2039 = vsel %vm2030, %v2026, %v2035
        %v2040 = vsel %vm2031, %v2027, %v2036
        %v2041 = vsel %vm2032, %v2028, %v2037
        %v2042 = vsel %vm2033, %v2029, %v2038
        %v2043 = vadd.f32 %v2039, %v1499
        %v2044 = vadd.f32 %v2040, %v1500
        %v2045 = vadd.f32 %v2041, %v1501
        %v2046 = vadd.f32 %v2042, %v1502
        %s2047 = scalar_lea.vmem [#allocation6], 128
        %v2048 = vld [vmem:[%s2047] sm:$0xf]
        %v2049 = vld [vmem:[%s2047 + $0x4] sm:$0xf]
        %v2050 = vld [vmem:[%s2047 + $0x8] sm:$0xf]
        %v2051 = vld [vmem:[%s2047 + $0xc] sm:$0xf]
        %v2052 = vld [vmem:[%s2047 + $0x10] sm:$0xf]
        %v2053 = vld [vmem:[%s2047 + $0x14] sm:$0xf]
        %v2054 = vld [vmem:[%s2047 + $0x18] sm:$0xf]
        %v2055 = vld [vmem:[%s2047 + $0x1c] sm:$0xf]
        %v2056 = vld [vmem:[%s2047 + $0x20] sm:$0xf]
        %v2057 = vld [vmem:[%s2047 + $0x24] sm:$0xf]
        %v2058 = vld [vmem:[%s2047 + $0x28] sm:$0xf]
        %v2059 = vld [vmem:[%s2047 + $0x2c] sm:$0xf]
        %v2060 = vld [vmem:[%s2047 + $0x30] sm:$0xf]
        %v2061 = vld [vmem:[%s2047 + $0x34] sm:$0xf]
        %v2062 = vld [vmem:[%s2047 + $0x38] sm:$0xf]
        %v2063 = vld [vmem:[%s2047 + $0x3c] sm:$0xf]
        %s2064 = scalar_lea.vmem [#allocation8], 128
        %v2065 = vld [vmem:[%s2064] sm:$0xf]
        %v2066 = vld [vmem:[%s2064 + $0x4] sm:$0xf]
        %v2067 = vld [vmem:[%s2064 + $0x8] sm:$0xf]
        %v2068 = vld [vmem:[%s2064 + $0xc] sm:$0xf]
        %v2069 = vld [vmem:[%s2064 + $0x10] sm:$0xf]
        %v2070 = vld [vmem:[%s2064 + $0x14] sm:$0xf]
        %v2071 = vld [vmem:[%s2064 + $0x18] sm:$0xf]
        %v2072 = vld [vmem:[%s2064 + $0x1c] sm:$0xf]
        %v2073 = vld [vmem:[%s2064 + $0x20] sm:$0xf]
        %v2074 = vld [vmem:[%s2064 + $0x24] sm:$0xf]
        %v2075 = vld [vmem:[%s2064 + $0x28] sm:$0xf]
        %v2076 = vld [vmem:[%s2064 + $0x2c] sm:$0xf]
        %v2077 = vld [vmem:[%s2064 + $0x30] sm:$0xf]
        %v2078 = vld [vmem:[%s2064 + $0x34] sm:$0xf]
        %v2079 = vld [vmem:[%s2064 + $0x38] sm:$0xf]
        %v2080 = vld [vmem:[%s2064 + $0x3c] sm:$0xf]
        %v2081 = vld [vmem:[%s10 + $0x3] sm:$0x1]
        %v2082 = vmul.f32 %v2043, %v597
        %v2083 = vmul.f32 %v2044, %v602
        %v2084 = vmul.f32 %v2045, %v607
        %v2085 = vmul.f32 %v2046, %v612
        %2086 = vst [vmem:[#allocation2 + $0x10] sm:$0xff] %v2082
        %2087 = vst [vmem:[#allocation2 + $0x18] sm:$0xff] %v2083
        %2088 = vst [vmem:[#allocation2 + $0x20] sm:$0xff] %v2084
        %2089 = vst [vmem:[#allocation2 + $0x28] sm:$0xff] %v2085
        %v2090 = vld [vmem:[#allocation2 + $0xe] sm:$0xff]
        %v2091 = vld [vmem:[#allocation2 + $0x16] sm:$0xff]
        %v2092 = vld [vmem:[#allocation2 + $0x1e] sm:$0xff]
        %v2093 = vld [vmem:[#allocation2 + $0x26] sm:$0xff]
        %v2094 = vpack.c.bf16 %v2091, %v2090
        %v2095 = vpack.c.bf16 %v2093, %v2092
        %v2096 = vld [vmem:[#allocation2 + $0x12] sm:$0xff]
        %v2097 = vld [vmem:[#allocation2 + $0x1a] sm:$0xff]
        %v2098 = vld [vmem:[#allocation2 + $0x22] sm:$0xff]
        %v2099 = vld [vmem:[#allocation2 + $0x2a] sm:$0xff]
        %v2100 = vpack.c.bf16 %v2097, %v2096
        %v2101 = vpack.c.bf16 %v2099, %v2098
        %v2118 = vunpack.c.l.b16 %v2065
        %v2119 = vunpack.c.l.b16 %v2066
        %v2120 = vunpack.c.l.b16 %v2067
        %v2121 = vunpack.c.l.b16 %v2068
        %v2122 = vunpack.c.l.b16 %v2069
        %v2123 = vunpack.c.l.b16 %v2070
        %v2124 = vunpack.c.l.b16 %v2071
        %v2125 = vunpack.c.l.b16 %v2072
        %v2126 = vunpack.c.l.b16 %v2073
        %v2127 = vunpack.c.l.b16 %v2074
        %v2128 = vunpack.c.l.b16 %v2075
        %v2129 = vunpack.c.l.b16 %v2076
        %v2130 = vunpack.c.l.b16 %v2077
        %v2131 = vunpack.c.l.b16 %v2078
        %v2132 = vunpack.c.l.b16 %v2079
        %v2133 = vunpack.c.l.b16 %v2080
        %v2134 = vpack.c.b16 %v2119, %v2118
        %v2135 = vpack.c.b16 %v2121, %v2120
        %v2136 = vpack.c.b16 %v2123, %v2122
        %v2137 = vpack.c.b16 %v2125, %v2124
        %v2138 = vpack.c.b16 %v2127, %v2126
        %v2139 = vpack.c.b16 %v2129, %v2128
        %v2140 = vpack.c.b16 %v2131, %v2130
        %v2141 = vpack.c.b16 %v2133, %v2132
        %2150 = vmatprep.subr.bf16.mxu0 0
        %2151 = vmatpush1.bf16.msra.mxu0 %v2134
        %2152 = vmatprep.subr.bf16.mxu0 0
        %2153 = vmatpush1.bf16.msra.mxu0 %v2135
        %2154 = vmatprep.subr.bf16.mxu0 0
        %2155 = vmatpush1.bf16.msra.mxu0 %v2136
        %2156 = vmatprep.subr.bf16.mxu0 0
        %2157 = vmatpush1.bf16.msra.mxu0 %v2137
        %2158 = vmatprep.subr.bf16.mxu0 0
        %2159 = vmatpush1.bf16.msra.mxu0 %v2138
        %2160 = vmatprep.subr.bf16.mxu0 0
        %2161 = vmatpush1.bf16.msra.mxu0 %v2139
        %2162 = vmatprep.subr.bf16.mxu0 0
        %2163 = vmatpush1.bf16.msra.mxu0 %v2140
        %2164 = vmatprep.subr.bf16.mxu0 0
        %2165 = vmatpush1.bf16.msra.mxu0 %v2141
        %2166 = vmatprep.subr.bf16.mxu0 0
        %2167 = vmatpush1.bf16.msra.mxu0 0
        %2168 = vmatprep.subr.bf16.mxu0 0
        %2169 = vmatpush1.bf16.msra.mxu0 0
        %2170 = vmatprep.subr.bf16.mxu0 0
        %2171 = vmatpush1.bf16.msra.mxu0 0
        %2172 = vmatprep.subr.bf16.mxu0 0
        %2173 = vmatpush1.bf16.msra.mxu0 0
        %2174 = vmatprep.subr.bf16.mxu0 0
        %2175 = vmatpush1.bf16.msra.mxu0 0
        %2176 = vmatprep.subr.bf16.mxu0 0
        %2177 = vmatpush1.bf16.msra.mxu0 0
        %2178 = vmatprep.subr.bf16.mxu0 0
        %2179 = vmatpush1.bf16.msra.mxu0 0
        %2180 = vmatprep.subr.bf16.mxu0 0
        %2181 = vmatpush1.bf16.msra.mxu0 0
        %2182 = vmatprep.mubr.bf16.mxu0 0
        %2183 = vmatmul.mubr.bf16.gmra.mrb[0].mxu0 %v2100
        %v2184 = vpop.f32.mrb[0].mxu0
        %v2185 = vadd.f32 0.0, %v2184
        %v2186 = vpop.f32.mrb[0].mxu0
        %v2187 = vpop.f32.mrb[0].mxu0
        %v2188 = vadd.f32 0.0, %v2187
        %v2189 = vpop.f32.mrb[0].mxu0
        %2190 = vmatprep.mubr.bf16.mxu0 0
        %2191 = vmatmul.mubr.bf16.gmra.mrb[0].mxu0 %v2101
        %v2192 = vpop.f32.mrb[0].mxu0
        %v2193 = vadd.f32 0.0, %v2192
        %v2194 = vpop.f32.mrb[0].mxu0
        %v2195 = vpop.f32.mrb[0].mxu0
        %v2196 = vadd.f32 0.0, %v2195
        %v2197 = vpop.f32.mrb[0].mxu0
        %2198 = vdwg.mxu0
        %v2215 = vunpack.c.l.b16 %v2048
        %v2216 = vunpack.c.l.b16 %v2049
        %v2217 = vunpack.c.l.b16 %v2050
        %v2218 = vunpack.c.l.b16 %v2051
        %v2219 = vunpack.c.l.b16 %v2052
        %v2220 = vunpack.c.l.b16 %v2053
        %v2221 = vunpack.c.l.b16 %v2054
        %v2222 = vunpack.c.l.b16 %v2055
        %v2223 = vunpack.c.l.b16 %v2056
        %v2224 = vunpack.c.l.b16 %v2057
        %v2225 = vunpack.c.l.b16 %v2058
        %v2226 = vunpack.c.l.b16 %v2059
        %v2227 = vunpack.c.l.b16 %v2060
        %v2228 = vunpack.c.l.b16 %v2061
        %v2229 = vunpack.c.l.b16 %v2062
        %v2230 = vunpack.c.l.b16 %v2063
        %v2231 = vpack.c.b16 %v2216, %v2215
        %v2232 = vpack.c.b16 %v2218, %v2217
        %v2233 = vpack.c.b16 %v2220, %v2219
        %v2234 = vpack.c.b16 %v2222, %v2221
        %v2235 = vpack.c.b16 %v2224, %v2223
        %v2236 = vpack.c.b16 %v2226, %v2225
        %v2237 = vpack.c.b16 %v2228, %v2227
        %v2238 = vpack.c.b16 %v2230, %v2229
        %2247 = vmatprep.subr.bf16.mxu0 0
        %2248 = vmatpush1.bf16.msra.mxu0 %v2231
        %2249 = vmatprep.subr.bf16.mxu0 0
        %2250 = vmatpush1.bf16.msra.mxu0 %v2232
        %2251 = vmatprep.subr.bf16.mxu0 0
        %2252 = vmatpush1.bf16.msra.mxu0 %v2233
        %2253 = vmatprep.subr.bf16.mxu0 0
        %2254 = vmatpush1.bf16.msra.mxu0 %v2234
        %2255 = vmatprep.subr.bf16.mxu0 0
        %2256 = vmatpush1.bf16.msra.mxu0 %v2235
        %2257 = vmatprep.subr.bf16.mxu0 0
        %2258 = vmatpush1.bf16.msra.mxu0 %v2236
        %2259 = vmatprep.subr.bf16.mxu0 0
        %2260 = vmatpush1.bf16.msra.mxu0 %v2237
        %2261 = vmatprep.subr.bf16.mxu0 0
        %2262 = vmatpush1.bf16.msra.mxu0 %v2238
        %2263 = vmatprep.subr.bf16.mxu0 0
        %2264 = vmatpush1.bf16.msra.mxu0 0
        %2265 = vmatprep.subr.bf16.mxu0 0
        %2266 = vmatpush1.bf16.msra.mxu0 0
        %2267 = vmatprep.subr.bf16.mxu0 0
        %2268 = vmatpush1.bf16.msra.mxu0 0
        %2269 = vmatprep.subr.bf16.mxu0 0
        %2270 = vmatpush1.bf16.msra.mxu0 0
        %2271 = vmatprep.subr.bf16.mxu0 0
        %2272 = vmatpush1.bf16.msra.mxu0 0
        %2273 = vmatprep.subr.bf16.mxu0 0
        %2274 = vmatpush1.bf16.msra.mxu0 0
        %2275 = vmatprep.subr.bf16.mxu0 0
        %2276 = vmatpush1.bf16.msra.mxu0 0
        %2277 = vmatprep.subr.bf16.mxu0 0
        %2278 = vmatpush1.bf16.msra.mxu0 0
        %2279 = vmatprep.mubr.bf16.mxu0 0
        %2280 = vmatmul.mubr.bf16.gmra.mrb[0].mxu0 %v2094
        %v2281 = vpop.f32.mrb[0].mxu0
        %v2282 = vadd.f32 %v2185, %v2281
        %v2283 = vpop.f32.mrb[0].mxu0
        %v2284 = vpop.f32.mrb[0].mxu0
        %v2285 = vadd.f32 %v2188, %v2284
        %v2286 = vpop.f32.mrb[0].mxu0
        %2287 = vmatprep.mubr.bf16.mxu0 0
        %2288 = vmatmul.mubr.bf16.gmra.mrb[0].mxu0 %v2095
        %v2289 = vpop.f32.mrb[0].mxu0
        %v2290 = vadd.f32 %v2193, %v2289
        %v2291 = vpop.f32.mrb[0].mxu0
        %v2292 = vpop.f32.mrb[0].mxu0
        %v2293 = vadd.f32 %v2196, %v2292
        %v2294 = vpop.f32.mrb[0].mxu0
        %2295 = vdwg.mxu0
        %v2296 = vlaneseq
        %v2297 = vshrl.u32 %v2296, 7
        %v2298 = vsub.s32 0, %v2297
        %v2299 = vrot.slane %v2081, %v2298
        %v2300 = vadd.f32 %v2282, %v2299
        %v2301 = vadd.f32 %v2285, %v2299
        %v2302 = vadd.f32 %v2290, %v2299
        %v2303 = vadd.f32 %v2293, %v2299
        %vm2304 = vcmp.ge.f32.partialorder %v2300, 0.0
        %vm2305 = vcmp.ge.f32.partialorder %v2301, 0.0
        %vm2306 = vcmp.ge.f32.partialorder %v2302, 0.0
        %vm2307 = vcmp.ge.f32.partialorder %v2303, 0.0
        %v2308 = vstv %s620
        %v2309 = vmul.f32 %v2308, %v2300
        %v2310 = vmul.f32 %v2308, %v2301
        %v2311 = vmul.f32 %v2308, %v2302
        %v2312 = vmul.f32 %v2308, %v2303
        %v2313 = vsel %vm2304, %v2300, %v2309
        %v2314 = vsel %vm2305, %v2301, %v2310
        %v2315 = vsel %vm2306, %v2302, %v2311
        %v2316 = vsel %vm2307, %v2303, %v2312
        %s2317 = scalar_lea.vmem [#allocation9], 128
        %v2318 = vld [vmem:[%s2317] sm:$0xf]
        %v2319 = vld [vmem:[%s2317 + $0x4] sm:$0xf]
        %v2320 = vld [vmem:[%s2317 + $0x8] sm:$0xf]
        %v2321 = vld [vmem:[%s2317 + $0xc] sm:$0xf]
        %v2322 = vld [vmem:[%s2317 + $0x10] sm:$0xf]
        %v2323 = vld [vmem:[%s2317 + $0x14] sm:$0xf]
        %v2324 = vld [vmem:[%s2317 + $0x18] sm:$0xf]
        %v2325 = vld [vmem:[%s2317 + $0x1c] sm:$0xf]
        %v2326 = vld [vmem:[%s2317 + $0x20] sm:$0xf]
        %v2327 = vld [vmem:[%s2317 + $0x24] sm:$0xf]
        %v2328 = vld [vmem:[%s2317 + $0x28] sm:$0xf]
        %v2329 = vld [vmem:[%s2317 + $0x2c] sm:$0xf]
        %v2330 = vld [vmem:[%s2317 + $0x30] sm:$0xf]
        %v2331 = vld [vmem:[%s2317 + $0x34] sm:$0xf]
        %v2332 = vld [vmem:[%s2317 + $0x38] sm:$0xf]
        %v2333 = vld [vmem:[%s2317 + $0x3c] sm:$0xf]
        %s2334 = scalar_lea.vmem [#allocation11], 128
        %v2335 = vld [vmem:[%s2334] sm:$0xf]
        %v2336 = vld [vmem:[%s2334 + $0x4] sm:$0xf]
        %v2337 = vld [vmem:[%s2334 + $0x8] sm:$0xf]
        %v2338 = vld [vmem:[%s2334 + $0xc] sm:$0xf]
        %v2339 = vld [vmem:[%s2334 + $0x10] sm:$0xf]
        %v2340 = vld [vmem:[%s2334 + $0x14] sm:$0xf]
        %v2341 = vld [vmem:[%s2334 + $0x18] sm:$0xf]
        %v2342 = vld [vmem:[%s2334 + $0x1c] sm:$0xf]
        %v2343 = vld [vmem:[%s2334 + $0x20] sm:$0xf]
        %v2344 = vld [vmem:[%s2334 + $0x24] sm:$0xf]
        %v2345 = vld [vmem:[%s2334 + $0x28] sm:$0xf]
        %v2346 = vld [vmem:[%s2334 + $0x2c] sm:$0xf]
        %v2347 = vld [vmem:[%s2334 + $0x30] sm:$0xf]
        %v2348 = vld [vmem:[%s2334 + $0x34] sm:$0xf]
        %v2349 = vld [vmem:[%s2334 + $0x38] sm:$0xf]
        %v2350 = vld [vmem:[%s2334 + $0x3c] sm:$0xf]
        %v2351 = vld [vmem:[#allocation14 + $0x3] sm:$0x1]
        %v2352 = vmul.f32 %v2313, %v597
        %v2353 = vmul.f32 %v2314, %v602
        %v2354 = vmul.f32 %v2315, %v607
        %v2355 = vmul.f32 %v2316, %v612
        %2356 = vst [vmem:[#allocation2 + $0x10] sm:$0xff] %v2352
        %2357 = vst [vmem:[#allocation2 + $0x18] sm:$0xff] %v2353
        %2358 = vst [vmem:[#allocation2 + $0x20] sm:$0xff] %v2354
        %2359 = vst [vmem:[#allocation2 + $0x28] sm:$0xff] %v2355
        %v2360 = vld [vmem:[#allocation2 + $0xe] sm:$0xff]
        %v2361 = vld [vmem:[#allocation2 + $0x16] sm:$0xff]
        %v2362 = vld [vmem:[#allocation2 + $0x1e] sm:$0xff]
        %v2363 = vld [vmem:[#allocation2 + $0x26] sm:$0xff]
        %v2364 = vpack.c.bf16 %v2361, %v2360
        %v2365 = vpack.c.bf16 %v2363, %v2362
        %v2366 = vld [vmem:[#allocation2 + $0x12] sm:$0xff]
        %v2367 = vld [vmem:[#allocation2 + $0x1a] sm:$0xff]
        %v2368 = vld [vmem:[#allocation2 + $0x22] sm:$0xff]
        %v2369 = vld [vmem:[#allocation2 + $0x2a] sm:$0xff]
        %v2370 = vpack.c.bf16 %v2367, %v2366
        %v2371 = vpack.c.bf16 %v2369, %v2368
        %v2388 = vunpack.c.l.b16 %v2335
        %v2389 = vunpack.c.l.b16 %v2336
        %v2390 = vunpack.c.l.b16 %v2337
        %v2391 = vunpack.c.l.b16 %v2338
        %v2392 = vunpack.c.l.b16 %v2339
        %v2393 = vunpack.c.l.b16 %v2340
        %v2394 = vunpack.c.l.b16 %v2341
        %v2395 = vunpack.c.l.b16 %v2342
        %v2396 = vunpack.c.l.b16 %v2343
        %v2397 = vunpack.c.l.b16 %v2344
        %v2398 = vunpack.c.l.b16 %v2345
        %v2399 = vunpack.c.l.b16 %v2346
        %v2400 = vunpack.c.l.b16 %v2347
        %v2401 = vunpack.c.l.b16 %v2348
        %v2402 = vunpack.c.l.b16 %v2349
        %v2403 = vunpack.c.l.b16 %v2350
        %v2404 = vpack.c.b16 %v2389, %v2388
        %v2405 = vpack.c.b16 %v2391, %v2390
        %v2406 = vpack.c.b16 %v2393, %v2392
        %v2407 = vpack.c.b16 %v2395, %v2394
        %v2408 = vpack.c.b16 %v2397, %v2396
        %v2409 = vpack.c.b16 %v2399, %v2398
        %v2410 = vpack.c.b16 %v2401, %v2400
        %v2411 = vpack.c.b16 %v2403, %v2402
        %2420 = vmatprep.subr.bf16.mxu0 0
        %2421 = vmatpush1.bf16.msra.mxu0 %v2404
        %2422 = vmatprep.subr.bf16.mxu0 0
        %2423 = vmatpush1.bf16.msra.mxu0 %v2405
        %2424 = vmatprep.subr.bf16.mxu0 0
        %2425 = vmatpush1.bf16.msra.mxu0 %v2406
        %2426 = vmatprep.subr.bf16.mxu0 0
        %2427 = vmatpush1.bf16.msra.mxu0 %v2407
        %2428 = vmatprep.subr.bf16.mxu0 0
        %2429 = vmatpush1.bf16.msra.mxu0 %v2408
        %2430 = vmatprep.subr.bf16.mxu0 0
        %2431 = vmatpush1.bf16.msra.mxu0 %v2409
        %2432 = vmatprep.subr.bf16.mxu0 0
        %2433 = vmatpush1.bf16.msra.mxu0 %v2410
        %2434 = vmatprep.subr.bf16.mxu0 0
        %2435 = vmatpush1.bf16.msra.mxu0 %v2411
        %2436 = vmatprep.subr.bf16.mxu0 0
        %2437 = vmatpush1.bf16.msra.mxu0 0
        %2438 = vmatprep.subr.bf16.mxu0 0
        %2439 = vmatpush1.bf16.msra.mxu0 0
        %2440 = vmatprep.subr.bf16.mxu0 0
        %2441 = vmatpush1.bf16.msra.mxu0 0
        %2442 = vmatprep.subr.bf16.mxu0 0
        %2443 = vmatpush1.bf16.msra.mxu0 0
        %2444 = vmatprep.subr.bf16.mxu0 0
        %2445 = vmatpush1.bf16.msra.mxu0 0
        %2446 = vmatprep.subr.bf16.mxu0 0
        %2447 = vmatpush1.bf16.msra.mxu0 0
        %2448 = vmatprep.subr.bf16.mxu0 0
        %2449 = vmatpush1.bf16.msra.mxu0 0
        %2450 = vmatprep.subr.bf16.mxu0 0
        %2451 = vmatpush1.bf16.msra.mxu0 0
        %2452 = vmatprep.mubr.bf16.mxu0 0
        %2453 = vmatmul.mubr.bf16.gmra.mrb[0].mxu0 %v2370
        %v2454 = vpop.f32.mrb[0].mxu0
        %v2455 = vadd.f32 0.0, %v2454
        %v2456 = vpop.f32.mrb[0].mxu0
        %v2457 = vpop.f32.mrb[0].mxu0
        %v2458 = vadd.f32 0.0, %v2457
        %v2459 = vpop.f32.mrb[0].mxu0
        %2460 = vmatprep.mubr.bf16.mxu0 0
        %2461 = vmatmul.mubr.bf16.gmra.mrb[0].mxu0 %v2371
        %v2462 = vpop.f32.mrb[0].mxu0
        %v2463 = vadd.f32 0.0, %v2462
        %v2464 = vpop.f32.mrb[0].mxu0
        %v2465 = vpop.f32.mrb[0].mxu0
        %v2466 = vadd.f32 0.0, %v2465
        %v2467 = vpop.f32.mrb[0].mxu0
        %2468 = vdwg.mxu0
        %v2485 = vunpack.c.l.b16 %v2318
        %v2486 = vunpack.c.l.b16 %v2319
        %v2487 = vunpack.c.l.b16 %v2320
        %v2488 = vunpack.c.l.b16 %v2321
        %v2489 = vunpack.c.l.b16 %v2322
        %v2490 = vunpack.c.l.b16 %v2323
        %v2491 = vunpack.c.l.b16 %v2324
        %v2492 = vunpack.c.l.b16 %v2325
        %v2493 = vunpack.c.l.b16 %v2326
        %v2494 = vunpack.c.l.b16 %v2327
        %v2495 = vunpack.c.l.b16 %v2328
        %v2496 = vunpack.c.l.b16 %v2329
        %v2497 = vunpack.c.l.b16 %v2330
        %v2498 = vunpack.c.l.b16 %v2331
        %v2499 = vunpack.c.l.b16 %v2332
        %v2500 = vunpack.c.l.b16 %v2333
        %v2501 = vpack.c.b16 %v2486, %v2485
        %v2502 = vpack.c.b16 %v2488, %v2487
        %v2503 = vpack.c.b16 %v2490, %v2489
        %v2504 = vpack.c.b16 %v2492, %v2491
        %v2505 = vpack.c.b16 %v2494, %v2493
        %v2506 = vpack.c.b16 %v2496, %v2495
        %v2507 = vpack.c.b16 %v2498, %v2497
        %v2508 = vpack.c.b16 %v2500, %v2499
        %2517 = vmatprep.subr.bf16.mxu0 0
        %2518 = vmatpush1.bf16.msra.mxu0 %v2501
        %2519 = vmatprep.subr.bf16.mxu0 0
        %2520 = vmatpush1.bf16.msra.mxu0 %v2502
        %2521 = vmatprep.subr.bf16.mxu0 0
        %2522 = vmatpush1.bf16.msra.mxu0 %v2503
        %2523 = vmatprep.subr.bf16.mxu0 0
        %2524 = vmatpush1.bf16.msra.mxu0 %v2504
        %2525 = vmatprep.subr.bf16.mxu0 0
        %2526 = vmatpush1.bf16.msra.mxu0 %v2505
        %2527 = vmatprep.subr.bf16.mxu0 0
        %2528 = vmatpush1.bf16.msra.mxu0 %v2506
        %2529 = vmatprep.subr.bf16.mxu0 0
        %2530 = vmatpush1.bf16.msra.mxu0 %v2507
        %2531 = vmatprep.subr.bf16.mxu0 0
        %2532 = vmatpush1.bf16.msra.mxu0 %v2508
        %2533 = vmatprep.subr.bf16.mxu0 0
        %2534 = vmatpush1.bf16.msra.mxu0 0
        %2535 = vmatprep.subr.bf16.mxu0 0
        %2536 = vmatpush1.bf16.msra.mxu0 0
        %2537 = vmatprep.subr.bf16.mxu0 0
        %2538 = vmatpush1.bf16.msra.mxu0 0
        %2539 = vmatprep.subr.bf16.mxu0 0
        %2540 = vmatpush1.bf16.msra.mxu0 0
        %2541 = vmatprep.subr.bf16.mxu0 0
        %2542 = vmatpush1.bf16.msra.mxu0 0
        %2543 = vmatprep.subr.bf16.mxu0 0
        %2544 = vmatpush1.bf16.msra.mxu0 0
        %2545 = vmatprep.subr.bf16.mxu0 0
        %2546 = vmatpush1.bf16.msra.mxu0 0
        %2547 = vmatprep.subr.bf16.mxu0 0
        %2548 = vmatpush1.bf16.msra.mxu0 0
        %2549 = vmatprep.mubr.bf16.mxu0 0
        %2550 = vmatmul.mubr.bf16.gmra.mrb[0].mxu0 %v2364
        %v2551 = vpop.f32.mrb[0].mxu0
        %v2552 = vadd.f32 %v2455, %v2551
        %v2553 = vpop.f32.mrb[0].mxu0
        %v2554 = vpop.f32.mrb[0].mxu0
        %v2555 = vadd.f32 %v2458, %v2554
        %v2556 = vpop.f32.mrb[0].mxu0
        %2557 = vmatprep.mubr.bf16.mxu0 0
        %2558 = vmatmul.mubr.bf16.gmra.mrb[0].mxu0 %v2365
        %v2559 = vpop.f32.mrb[0].mxu0
        %v2560 = vadd.f32 %v2463, %v2559
        %v2561 = vpop.f32.mrb[0].mxu0
        %v2562 = vpop.f32.mrb[0].mxu0
        %v2563 = vadd.f32 %v2466, %v2562
        %v2564 = vpop.f32.mrb[0].mxu0
        %2565 = vdwg.mxu0
        %v2566 = vlaneseq
        %v2567 = vshrl.u32 %v2566, 7
        %v2568 = vsub.s32 0, %v2567
        %v2569 = vrot.slane %v2351, %v2568
        %v2570 = vadd.f32 %v2552, %v2569
        %v2571 = vadd.f32 %v2555, %v2569
        %v2572 = vadd.f32 %v2560, %v2569
        %v2573 = vadd.f32 %v2563, %v2569
        %vm2574 = vcmp.ge.f32.partialorder %v2570, 0.0
        %vm2575 = vcmp.ge.f32.partialorder %v2571, 0.0
        %vm2576 = vcmp.ge.f32.partialorder %v2572, 0.0
        %vm2577 = vcmp.ge.f32.partialorder %v2573, 0.0
        %v2578 = vstv %s621
        %v2579 = vmul.f32 %v2578, %v2570
        %v2580 = vmul.f32 %v2578, %v2571
        %v2581 = vmul.f32 %v2578, %v2572
        %v2582 = vmul.f32 %v2578, %v2573
        %v2583 = vsel %vm2574, %v2570, %v2579
        %v2584 = vsel %vm2575, %v2571, %v2580
        %v2585 = vsel %vm2576, %v2572, %v2581
        %v2586 = vsel %vm2577, %v2573, %v2582
        %v2587 = vadd.f32 %v2583, %v2043
        %v2588 = vadd.f32 %v2584, %v2044
        %v2589 = vadd.f32 %v2585, %v2045
        %v2590 = vadd.f32 %v2586, %v2046
        %s2591 = scalar_lea.vmem [#allocation6], 192
        %v2592 = vld [vmem:[%s2591] sm:$0xf]
        %v2593 = vld [vmem:[%s2591 + $0x4] sm:$0xf]
        %v2594 = vld [vmem:[%s2591 + $0x8] sm:$0xf]
        %v2595 = vld [vmem:[%s2591 + $0xc] sm:$0xf]
        %v2596 = vld [vmem:[%s2591 + $0x10] sm:$0xf]
        %v2597 = vld [vmem:[%s2591 + $0x14] sm:$0xf]
        %v2598 = vld [vmem:[%s2591 + $0x18] sm:$0xf]
        %v2599 = vld [vmem:[%s2591 + $0x1c] sm:$0xf]
        %v2600 = vld [vmem:[%s2591 + $0x20] sm:$0xf]
        %v2601 = vld [vmem:[%s2591 + $0x24] sm:$0xf]
        %v2602 = vld [vmem:[%s2591 + $0x28] sm:$0xf]
        %v2603 = vld [vmem:[%s2591 + $0x2c] sm:$0xf]
        %v2604 = vld [vmem:[%s2591 + $0x30] sm:$0xf]
        %v2605 = vld [vmem:[%s2591 + $0x34] sm:$0xf]
        %v2606 = vld [vmem:[%s2591 + $0x38] sm:$0xf]
        %v2607 = vld [vmem:[%s2591 + $0x3c] sm:$0xf]
        %s2608 = scalar_lea.vmem [#allocation8], 192
        %v2609 = vld [vmem:[%s2608] sm:$0xf]
        %v2610 = vld [vmem:[%s2608 + $0x4] sm:$0xf]
        %v2611 = vld [vmem:[%s2608 + $0x8] sm:$0xf]
        %v2612 = vld [vmem:[%s2608 + $0xc] sm:$0xf]
        %v2613 = vld [vmem:[%s2608 + $0x10] sm:$0xf]
        %v2614 = vld [vmem:[%s2608 + $0x14] sm:$0xf]
        %v2615 = vld [vmem:[%s2608 + $0x18] sm:$0xf]
        %v2616 = vld [vmem:[%s2608 + $0x1c] sm:$0xf]
        %v2617 = vld [vmem:[%s2608 + $0x20] sm:$0xf]
        %v2618 = vld [vmem:[%s2608 + $0x24] sm:$0xf]
        %v2619 = vld [vmem:[%s2608 + $0x28] sm:$0xf]
        %v2620 = vld [vmem:[%s2608 + $0x2c] sm:$0xf]
        %v2621 = vld [vmem:[%s2608 + $0x30] sm:$0xf]
        %v2622 = vld [vmem:[%s2608 + $0x34] sm:$0xf]
        %v2623 = vld [vmem:[%s2608 + $0x38] sm:$0xf]
        %v2624 = vld [vmem:[%s2608 + $0x3c] sm:$0xf]
        %v2625 = vld [vmem:[%s10 + $0x4] sm:$0x1]
        %v2626 = vmul.f32 %v2587, %v597
        %v2627 = vmul.f32 %v2588, %v602
        %v2628 = vmul.f32 %v2589, %v607
        %v2629 = vmul.f32 %v2590, %v612
        %2630 = vst [vmem:[#allocation2 + $0x10] sm:$0xff] %v2626
        %2631 = vst [vmem:[#allocation2 + $0x18] sm:$0xff] %v2627
        %2632 = vst [vmem:[#allocation2 + $0x20] sm:$0xff] %v2628
        %2633 = vst [vmem:[#allocation2 + $0x28] sm:$0xff] %v2629
        %v2634 = vld [vmem:[#allocation2 + $0xc] sm:$0xff]
        %v2635 = vld [vmem:[#allocation2 + $0x14] sm:$0xff]
        %v2636 = vld [vmem:[#allocation2 + $0x1c] sm:$0xff]
        %v2637 = vld [vmem:[#allocation2 + $0x24] sm:$0xff]
        %v2638 = vpack.c.bf16 %v2635, %v2634
        %v2639 = vpack.c.bf16 %v2637, %v2636
        %v2640 = vld [vmem:[#allocation2 + $0x2c] sm:$0xff]
        %v2641 = vpack.c.bf16 %v2636, %v2635
        %v2642 = vpack.c.bf16 %v2640, %v2637
        %v2659 = vunpack.c.l.b16 %v2609
        %v2660 = vunpack.c.l.b16 %v2610
        %v2661 = vunpack.c.l.b16 %v2611
        %v2662 = vunpack.c.l.b16 %v2612
        %v2663 = vunpack.c.l.b16 %v2613
        %v2664 = vunpack.c.l.b16 %v2614
        %v2665 = vunpack.c.l.b16 %v2615
        %v2666 = vunpack.c.l.b16 %v2616
        %v2667 = vunpack.c.l.b16 %v2617
        %v2668 = vunpack.c.l.b16 %v2618
        %v2669 = vunpack.c.l.b16 %v2619
        %v2670 = vunpack.c.l.b16 %v2620
        %v2671 = vunpack.c.l.b16 %v2621
        %v2672 = vunpack.c.l.b16 %v2622
        %v2673 = vunpack.c.l.b16 %v2623
        %v2674 = vunpack.c.l.b16 %v2624
        %v2675 = vpack.c.b16 %v2660, %v2659
        %v2676 = vpack.c.b16 %v2662, %v2661
        %v2677 = vpack.c.b16 %v2664, %v2663
        %v2678 = vpack.c.b16 %v2666, %v2665
        %v2679 = vpack.c.b16 %v2668, %v2667
        %v2680 = vpack.c.b16 %v2670, %v2669
        %v2681 = vpack.c.b16 %v2672, %v2671
        %v2682 = vpack.c.b16 %v2674, %v2673
        %2691 = vmatprep.subr.bf16.mxu0 0
        %2692 = vmatpush1.bf16.msra.mxu0 %v2675
        %2693 = vmatprep.subr.bf16.mxu0 0
        %2694 = vmatpush1.bf16.msra.mxu0 %v2676
        %2695 = vmatprep.subr.bf16.mxu0 0
        %2696 = vmatpush1.bf16.msra.mxu0 %v2677
        %2697 = vmatprep.subr.bf16.mxu0 0
        %2698 = vmatpush1.bf16.msra.mxu0 %v2678
        %2699 = vmatprep.subr.bf16.mxu0 0
        %2700 = vmatpush1.bf16.msra.mxu0 %v2679
        %2701 = vmatprep.subr.bf16.mxu0 0
        %2702 = vmatpush1.bf16.msra.mxu0 %v2680
        %2703 = vmatprep.subr.bf16.mxu0 0
        %2704 = vmatpush1.bf16.msra.mxu0 %v2681
        %2705 = vmatprep.subr.bf16.mxu0 0
        %2706 = vmatpush1.bf16.msra.mxu0 %v2682
        %2707 = vmatprep.subr.bf16.mxu0 0
        %2708 = vmatpush1.bf16.msra.mxu0 0
        %2709 = vmatprep.subr.bf16.mxu0 0
        %2710 = vmatpush1.bf16.msra.mxu0 0
        %2711 = vmatprep.subr.bf16.mxu0 0
        %2712 = vmatpush1.bf16.msra.mxu0 0
        %2713 = vmatprep.subr.bf16.mxu0 0
        %2714 = vmatpush1.bf16.msra.mxu0 0
        %2715 = vmatprep.subr.bf16.mxu0 0
        %2716 = vmatpush1.bf16.msra.mxu0 0
        %2717 = vmatprep.subr.bf16.mxu0 0
        %2718 = vmatpush1.bf16.msra.mxu0 0
        %2719 = vmatprep.subr.bf16.mxu0 0
        %2720 = vmatpush1.bf16.msra.mxu0 0
        %2721 = vmatprep.subr.bf16.mxu0 0
        %2722 = vmatpush1.bf16.msra.mxu0 0
        %2723 = vmatprep.mubr.bf16.mxu0 0
        %2724 = vmatmul.mubr.bf16.gmra.mrb[0].mxu0 %v2641
        %v2725 = vpop.f32.mrb[0].mxu0
        %v2726 = vadd.f32 0.0, %v2725
        %v2727 = vpop.f32.mrb[0].mxu0
        %v2728 = vpop.f32.mrb[0].mxu0
        %v2729 = vadd.f32 0.0, %v2728
        %v2730 = vpop.f32.mrb[0].mxu0
        %2731 = vmatprep.mubr.bf16.mxu0 0
        %2732 = vmatmul.mubr.bf16.gmra.mrb[0].mxu0 %v2642
        %v2733 = vpop.f32.mrb[0].mxu0
        %v2734 = vadd.f32 0.0, %v2733
        %v2735 = vpop.f32.mrb[0].mxu0
        %v2736 = vpop.f32.mrb[0].mxu0
        %v2737 = vadd.f32 0.0, %v2736
        %v2738 = vpop.f32.mrb[0].mxu0
        %2739 = vdwg.mxu0
        %v2756 = vunpack.c.l.b16 %v2592
        %v2757 = vunpack.c.l.b16 %v2593
        %v2758 = vunpack.c.l.b16 %v2594
        %v2759 = vunpack.c.l.b16 %v2595
        %v2760 = vunpack.c.l.b16 %v2596
        %v2761 = vunpack.c.l.b16 %v2597
        %v2762 = vunpack.c.l.b16 %v2598
        %v2763 = vunpack.c.l.b16 %v2599
        %v2764 = vunpack.c.l.b16 %v2600
        %v2765 = vunpack.c.l.b16 %v2601
        %v2766 = vunpack.c.l.b16 %v2602
        %v2767 = vunpack.c.l.b16 %v2603
        %v2768 = vunpack.c.l.b16 %v2604
        %v2769 = vunpack.c.l.b16 %v2605
        %v2770 = vunpack.c.l.b16 %v2606
        %v2771 = vunpack.c.l.b16 %v2607
        %v2772 = vpack.c.b16 %v2757, %v2756
        %v2773 = vpack.c.b16 %v2759, %v2758
        %v2774 = vpack.c.b16 %v2761, %v2760
        %v2775 = vpack.c.b16 %v2763, %v2762
        %v2776 = vpack.c.b16 %v2765, %v2764
        %v2777 = vpack.c.b16 %v2767, %v2766
        %v2778 = vpack.c.b16 %v2769, %v2768
        %v2779 = vpack.c.b16 %v2771, %v2770
        %2788 = vmatprep.subr.bf16.mxu0 0
        %2789 = vmatpush1.bf16.msra.mxu0 %v2772
        %2790 = vmatprep.subr.bf16.mxu0 0
        %2791 = vmatpush1.bf16.msra.mxu0 %v2773
        %2792 = vmatprep.subr.bf16.mxu0 0
        %2793 = vmatpush1.bf16.msra.mxu0 %v2774
        %2794 = vmatprep.subr.bf16.mxu0 0
        %2795 = vmatpush1.bf16.msra.mxu0 %v2775
        %2796 = vmatprep.subr.bf16.mxu0 0
        %2797 = vmatpush1.bf16.msra.mxu0 %v2776
        %2798 = vmatprep.subr.bf16.mxu0 0
        %2799 = vmatpush1.bf16.msra.mxu0 %v2777
        %2800 = vmatprep.subr.bf16.mxu0 0
        %2801 = vmatpush1.bf16.msra.mxu0 %v2778
        %2802 = vmatprep.subr.bf16.mxu0 0
        %2803 = vmatpush1.bf16.msra.mxu0 %v2779
        %2804 = vmatprep.subr.bf16.mxu0 0
        %2805 = vmatpush1.bf16.msra.mxu0 0
        %2806 = vmatprep.subr.bf16.mxu0 0
        %2807 = vmatpush1.bf16.msra.mxu0 0
        %2808 = vmatprep.subr.bf16.mxu0 0
        %2809 = vmatpush1.bf16.msra.mxu0 0
        %2810 = vmatprep.subr.bf16.mxu0 0
        %2811 = vmatpush1.bf16.msra.mxu0 0
        %2812 = vmatprep.subr.bf16.mxu0 0
        %2813 = vmatpush1.bf16.msra.mxu0 0
        %2814 = vmatprep.subr.bf16.mxu0 0
        %2815 = vmatpush1.bf16.msra.mxu0 0
        %2816 = vmatprep.subr.bf16.mxu0 0
        %2817 = vmatpush1.bf16.msra.mxu0 0
        %2818 = vmatprep.subr.bf16.mxu0 0
        %2819 = vmatpush1.bf16.msra.mxu0 0
        %2820 = vmatprep.mubr.bf16.mxu0 0
        %2821 = vmatmul.mubr.bf16.gmra.mrb[0].mxu0 %v2638
        %v2822 = vpop.f32.mrb[0].mxu0
        %v2823 = vadd.f32 %v2726, %v2822
        %v2824 = vpop.f32.mrb[0].mxu0
        %v2825 = vpop.f32.mrb[0].mxu0
        %v2826 = vadd.f32 %v2729, %v2825
        %v2827 = vpop.f32.mrb[0].mxu0
        %2828 = vmatprep.mubr.bf16.mxu0 0
        %2829 = vmatmul.mubr.bf16.gmra.mrb[0].mxu0 %v2639
        %v2830 = vpop.f32.mrb[0].mxu0
        %v2831 = vadd.f32 %v2734, %v2830
        %v2832 = vpop.f32.mrb[0].mxu0
        %v2833 = vpop.f32.mrb[0].mxu0
        %v2834 = vadd.f32 %v2737, %v2833
        %v2835 = vpop.f32.mrb[0].mxu0
        %2836 = vdwg.mxu0
        %v2837 = vlaneseq
        %v2838 = vshrl.u32 %v2837, 7
        %v2839 = vsub.s32 0, %v2838
        %v2840 = vrot.slane %v2625, %v2839
        %v2841 = vadd.f32 %v2823, %v2840
        %v2842 = vadd.f32 %v2826, %v2840
        %v2843 = vadd.f32 %v2831, %v2840
        %v2844 = vadd.f32 %v2834, %v2840
        %vm2845 = vcmp.ge.f32.partialorder %v2841, 0.0
        %vm2846 = vcmp.ge.f32.partialorder %v2842, 0.0
        %vm2847 = vcmp.ge.f32.partialorder %v2843, 0.0
        %vm2848 = vcmp.ge.f32.partialorder %v2844, 0.0
        %v2849 = vstv %s622
        %v2850 = vmul.f32 %v2849, %v2841
        %v2851 = vmul.f32 %v2849, %v2842
        %v2852 = vmul.f32 %v2849, %v2843
        %v2853 = vmul.f32 %v2849, %v2844
        %v2854 = vsel %vm2845, %v2841, %v2850
        %v2855 = vsel %vm2846, %v2842, %v2851
        %v2856 = vsel %vm2847, %v2843, %v2852
        %v2857 = vsel %vm2848, %v2844, %v2853
        %s2858 = scalar_lea.vmem [#allocation9], 192
        %v2859 = vld [vmem:[%s2858] sm:$0xf]
        %v2860 = vld [vmem:[%s2858 + $0x4] sm:$0xf]
        %v2861 = vld [vmem:[%s2858 + $0x8] sm:$0xf]
        %v2862 = vld [vmem:[%s2858 + $0xc] sm:$0xf]
        %v2863 = vld [vmem:[%s2858 + $0x10] sm:$0xf]
        %v2864 = vld [vmem:[%s2858 + $0x14] sm:$0xf]
        %v2865 = vld [vmem:[%s2858 + $0x18] sm:$0xf]
        %v2866 = vld [vmem:[%s2858 + $0x1c] sm:$0xf]
        %v2867 = vld [vmem:[%s2858 + $0x20] sm:$0xf]
        %v2868 = vld [vmem:[%s2858 + $0x24] sm:$0xf]
        %v2869 = vld [vmem:[%s2858 + $0x28] sm:$0xf]
        %v2870 = vld [vmem:[%s2858 + $0x2c] sm:$0xf]
        %v2871 = vld [vmem:[%s2858 + $0x30] sm:$0xf]
        %v2872 = vld [vmem:[%s2858 + $0x34] sm:$0xf]
        %v2873 = vld [vmem:[%s2858 + $0x38] sm:$0xf]
        %v2874 = vld [vmem:[%s2858 + $0x3c] sm:$0xf]
        %s2875 = scalar_lea.vmem [#allocation11], 192
        %v2876 = vld [vmem:[%s2875] sm:$0xf]
        %v2877 = vld [vmem:[%s2875 + $0x4] sm:$0xf]
        %v2878 = vld [vmem:[%s2875 + $0x8] sm:$0xf]
        %v2879 = vld [vmem:[%s2875 + $0xc] sm:$0xf]
        %v2880 = vld [vmem:[%s2875 + $0x10] sm:$0xf]
        %v2881 = vld [vmem:[%s2875 + $0x14] sm:$0xf]
        %v2882 = vld [vmem:[%s2875 + $0x18] sm:$0xf]
        %v2883 = vld [vmem:[%s2875 + $0x1c] sm:$0xf]
        %v2884 = vld [vmem:[%s2875 + $0x20] sm:$0xf]
        %v2885 = vld [vmem:[%s2875 + $0x24] sm:$0xf]
        %v2886 = vld [vmem:[%s2875 + $0x28] sm:$0xf]
        %v2887 = vld [vmem:[%s2875 + $0x2c] sm:$0xf]
        %v2888 = vld [vmem:[%s2875 + $0x30] sm:$0xf]
        %v2889 = vld [vmem:[%s2875 + $0x34] sm:$0xf]
        %v2890 = vld [vmem:[%s2875 + $0x38] sm:$0xf]
        %v2891 = vld [vmem:[%s2875 + $0x3c] sm:$0xf]
        %v2892 = vld [vmem:[#allocation14 + $0x4] sm:$0x1]
        %v2893 = vmul.f32 %v2854, %v597
        %v2894 = vmul.f32 %v2855, %v602
        %v2895 = vmul.f32 %v2856, %v607
        %v2896 = vmul.f32 %v2857, %v612
        %2897 = vst [vmem:[#allocation2 + $0x10] sm:$0xff] %v2893
        %2898 = vst [vmem:[#allocation2 + $0x18] sm:$0xff] %v2894
        %2899 = vst [vmem:[#allocation2 + $0x20] sm:$0xff] %v2895
        %2900 = vst [vmem:[#allocation2 + $0x28] sm:$0xff] %v2896
        %v2901 = vld [vmem:[#allocation2 + $0xc] sm:$0xff]
        %v2902 = vld [vmem:[#allocation2 + $0x14] sm:$0xff]
        %v2903 = vld [vmem:[#allocation2 + $0x1c] sm:$0xff]
        %v2904 = vld [vmem:[#allocation2 + $0x24] sm:$0xff]
        %v2905 = vpack.c.bf16 %v2902, %v2901
        %v2906 = vpack.c.bf16 %v2904, %v2903
        %v2907 = vld [vmem:[#allocation2 + $0x2c] sm:$0xff]
        %v2908 = vpack.c.bf16 %v2903, %v2902
        %v2909 = vpack.c.bf16 %v2907, %v2904
        %v2926 = vunpack.c.l.b16 %v2876
        %v2927 = vunpack.c.l.b16 %v2877
        %v2928 = vunpack.c.l.b16 %v2878
        %v2929 = vunpack.c.l.b16 %v2879
        %v2930 = vunpack.c.l.b16 %v2880
        %v2931 = vunpack.c.l.b16 %v2881
        %v2932 = vunpack.c.l.b16 %v2882
        %v2933 = vunpack.c.l.b16 %v2883
        %v2934 = vunpack.c.l.b16 %v2884
        %v2935 = vunpack.c.l.b16 %v2885
        %v2936 = vunpack.c.l.b16 %v2886
        %v2937 = vunpack.c.l.b16 %v2887
        %v2938 = vunpack.c.l.b16 %v2888
        %v2939 = vunpack.c.l.b16 %v2889
        %v2940 = vunpack.c.l.b16 %v2890
        %v2941 = vunpack.c.l.b16 %v2891
        %v2942 = vpack.c.b16 %v2927, %v2926
        %v2943 = vpack.c.b16 %v2929, %v2928
        %v2944 = vpack.c.b16 %v2931, %v2930
        %v2945 = vpack.c.b16 %v2933, %v2932
        %v2946 = vpack.c.b16 %v2935, %v2934
        %v2947 = vpack.c.b16 %v2937, %v2936
        %v2948 = vpack.c.b16 %v2939, %v2938
        %v2949 = vpack.c.b16 %v2941, %v2940
        %2958 = vmatprep.subr.bf16.mxu0 0
        %2959 = vmatpush1.bf16.msra.mxu0 %v2942
        %2960 = vmatprep.subr.bf16.mxu0 0
        %2961 = vmatpush1.bf16.msra.mxu0 %v2943
        %2962 = vmatprep.subr.bf16.mxu0 0
        %2963 = vmatpush1.bf16.msra.mxu0 %v2944
        %2964 = vmatprep.subr.bf16.mxu0 0
        %2965 = vmatpush1.bf16.msra.mxu0 %v2945
        %2966 = vmatprep.subr.bf16.mxu0 0
        %2967 = vmatpush1.bf16.msra.mxu0 %v2946
        %2968 = vmatprep.subr.bf16.mxu0 0
        %2969 = vmatpush1.bf16.msra.mxu0 %v2947
        %2970 = vmatprep.subr.bf16.mxu0 0
        %2971 = vmatpush1.bf16.msra.mxu0 %v2948
        %2972 = vmatprep.subr.bf16.mxu0 0
        %2973 = vmatpush1.bf16.msra.mxu0 %v2949
        %2974 = vmatprep.subr.bf16.mxu0 0
        %2975 = vmatpush1.bf16.msra.mxu0 0
        %2976 = vmatprep.subr.bf16.mxu0 0
        %2977 = vmatpush1.bf16.msra.mxu0 0
        %2978 = vmatprep.subr.bf16.mxu0 0
        %2979 = vmatpush1.bf16.msra.mxu0 0
        %2980 = vmatprep.subr.bf16.mxu0 0
        %2981 = vmatpush1.bf16.msra.mxu0 0
        %2982 = vmatprep.subr.bf16.mxu0 0
        %2983 = vmatpush1.bf16.msra.mxu0 0
        %2984 = vmatprep.subr.bf16.mxu0 0
        %2985 = vmatpush1.bf16.msra.mxu0 0
        %2986 = vmatprep.subr.bf16.mxu0 0
        %2987 = vmatpush1.bf16.msra.mxu0 0
        %2988 = vmatprep.subr.bf16.mxu0 0
        %2989 = vmatpush1.bf16.msra.mxu0 0
        %2990 = vmatprep.mubr.bf16.mxu0 0
        %2991 = vmatmul.mubr.bf16.gmra.mrb[0].mxu0 %v2908
        %v2992 = vpop.f32.mrb[0].mxu0
        %v2993 = vadd.f32 0.0, %v2992
        %v2994 = vpop.f32.mrb[0].mxu0
        %v2995 = vpop.f32.mrb[0].mxu0
        %v2996 = vadd.f32 0.0, %v2995
        %v2997 = vpop.f32.mrb[0].mxu0
        %2998 = vmatprep.mubr.bf16.mxu0 0
        %2999 = vmatmul.mubr.bf16.gmra.mrb[0].mxu0 %v2909
        %v3000 = vpop.f32.mrb[0].mxu0
        %v3001 = vadd.f32 0.0, %v3000
        %v3002 = vpop.f32.mrb[0].mxu0
        %v3003 = vpop.f32.mrb[0].mxu0
        %v3004 = vadd.f32 0.0, %v3003
        %v3005 = vpop.f32.mrb[0].mxu0
        %3006 = vdwg.mxu0
        %v3023 = vunpack.c.l.b16 %v2859
        %v3024 = vunpack.c.l.b16 %v2860
        %v3025 = vunpack.c.l.b16 %v2861
        %v3026 = vunpack.c.l.b16 %v2862
        %v3027 = vunpack.c.l.b16 %v2863
        %v3028 = vunpack.c.l.b16 %v2864
        %v3029 = vunpack.c.l.b16 %v2865
        %v3030 = vunpack.c.l.b16 %v2866
        %v3031 = vunpack.c.l.b16 %v2867
        %v3032 = vunpack.c.l.b16 %v2868
        %v3033 = vunpack.c.l.b16 %v2869
        %v3034 = vunpack.c.l.b16 %v2870
        %v3035 = vunpack.c.l.b16 %v2871
        %v3036 = vunpack.c.l.b16 %v2872
        %v3037 = vunpack.c.l.b16 %v2873
        %v3038 = vunpack.c.l.b16 %v2874
        %v3039 = vpack.c.b16 %v3024, %v3023
        %v3040 = vpack.c.b16 %v3026, %v3025
        %v3041 = vpack.c.b16 %v3028, %v3027
        %v3042 = vpack.c.b16 %v3030, %v3029
        %v3043 = vpack.c.b16 %v3032, %v3031
        %v3044 = vpack.c.b16 %v3034, %v3033
        %v3045 = vpack.c.b16 %v3036, %v3035
        %v3046 = vpack.c.b16 %v3038, %v3037
        %3055 = vmatprep.subr.bf16.mxu0 0
        %3056 = vmatpush1.bf16.msra.mxu0 %v3039
        %3057 = vmatprep.subr.bf16.mxu0 0
        %3058 = vmatpush1.bf16.msra.mxu0 %v3040
        %3059 = vmatprep.subr.bf16.mxu0 0
        %3060 = vmatpush1.bf16.msra.mxu0 %v3041
        %3061 = vmatprep.subr.bf16.mxu0 0
        %3062 = vmatpush1.bf16.msra.mxu0 %v3042
        %3063 = vmatprep.subr.bf16.mxu0 0
        %3064 = vmatpush1.bf16.msra.mxu0 %v3043
        %3065 = vmatprep.subr.bf16.mxu0 0
        %3066 = vmatpush1.bf16.msra.mxu0 %v3044
        %3067 = vmatprep.subr.bf16.mxu0 0
        %3068 = vmatpush1.bf16.msra.mxu0 %v3045
        %3069 = vmatprep.subr.bf16.mxu0 0
        %3070 = vmatpush1.bf16.msra.mxu0 %v3046
        %3071 = vmatprep.subr.bf16.mxu0 0
        %3072 = vmatpush1.bf16.msra.mxu0 0
        %3073 = vmatprep.subr.bf16.mxu0 0
        %3074 = vmatpush1.bf16.msra.mxu0 0
        %3075 = vmatprep.subr.bf16.mxu0 0
        %3076 = vmatpush1.bf16.msra.mxu0 0
        %3077 = vmatprep.subr.bf16.mxu0 0
        %3078 = vmatpush1.bf16.msra.mxu0 0
        %3079 = vmatprep.subr.bf16.mxu0 0
        %3080 = vmatpush1.bf16.msra.mxu0 0
        %3081 = vmatprep.subr.bf16.mxu0 0
        %3082 = vmatpush1.bf16.msra.mxu0 0
        %3083 = vmatprep.subr.bf16.mxu0 0
        %3084 = vmatpush1.bf16.msra.mxu0 0
        %3085 = vmatprep.subr.bf16.mxu0 0
        %3086 = vmatpush1.bf16.msra.mxu0 0
        %3087 = vmatprep.mubr.bf16.mxu0 0
        %3088 = vmatmul.mubr.bf16.gmra.mrb[0].mxu0 %v2905
        %v3089 = vpop.f32.mrb[0].mxu0
        %v3090 = vadd.f32 %v2993, %v3089
        %v3091 = vpop.f32.mrb[0].mxu0
        %v3092 = vpop.f32.mrb[0].mxu0
        %v3093 = vadd.f32 %v2996, %v3092
        %v3094 = vpop.f32.mrb[0].mxu0
        %3095 = vmatprep.mubr.bf16.mxu0 0
        %3096 = vmatmul.mubr.bf16.gmra.mrb[0].mxu0 %v2906
        %v3097 = vpop.f32.mrb[0].mxu0
        %v3098 = vadd.f32 %v3001, %v3097
        %v3099 = vpop.f32.mrb[0].mxu0
        %v3100 = vpop.f32.mrb[0].mxu0
        %v3101 = vadd.f32 %v3004, %v3100
        %v3102 = vpop.f32.mrb[0].mxu0
        %3103 = vdwg.mxu0
        %v3104 = vlaneseq
        %v3105 = vshrl.u32 %v3104, 7
        %v3106 = vsub.s32 0, %v3105
        %v3107 = vrot.slane %v2892, %v3106
        %v3108 = vadd.f32 %v3090, %v3107
        %v3109 = vadd.f32 %v3093, %v3107
        %v3110 = vadd.f32 %v3098, %v3107
        %v3111 = vadd.f32 %v3101, %v3107
        %vm3112 = vcmp.ge.f32.partialorder %v3108, 0.0
        %vm3113 = vcmp.ge.f32.partialorder %v3109, 0.0
        %vm3114 = vcmp.ge.f32.partialorder %v3110, 0.0
        %vm3115 = vcmp.ge.f32.partialorder %v3111, 0.0
        %v3116 = vstv %s623
        %v3117 = vmul.f32 %v3116, %v3108
        %v3118 = vmul.f32 %v3116, %v3109
        %v3119 = vmul.f32 %v3116, %v3110
        %v3120 = vmul.f32 %v3116, %v3111
        %v3121 = vsel %vm3112, %v3108, %v3117
        %v3122 = vsel %vm3113, %v3109, %v3118
        %v3123 = vsel %vm3114, %v3110, %v3119
        %v3124 = vsel %vm3115, %v3111, %v3120
        %v3125 = vadd.f32 %v3121, %v2587
        %v3126 = vadd.f32 %v3122, %v2588
        %v3127 = vadd.f32 %v3123, %v2589
        %v3128 = vadd.f32 %v3124, %v2590
        %s3129 = scalar_lea.vmem [#allocation6], 256
        %v3130 = vld [vmem:[%s3129] sm:$0xf]
        %v3131 = vld [vmem:[%s3129 + $0x4] sm:$0xf]
        %v3132 = vld [vmem:[%s3129 + $0x8] sm:$0xf]
        %v3133 = vld [vmem:[%s3129 + $0xc] sm:$0xf]
        %v3134 = vld [vmem:[%s3129 + $0x10] sm:$0xf]
        %v3135 = vld [vmem:[%s3129 + $0x14] sm:$0xf]
        %v3136 = vld [vmem:[%s3129 + $0x18] sm:$0xf]
        %v3137 = vld [vmem:[%s3129 + $0x1c] sm:$0xf]
        %v3138 = vld [vmem:[%s3129 + $0x20] sm:$0xf]
        %v3139 = vld [vmem:[%s3129 + $0x24] sm:$0xf]
        %v3140 = vld [vmem:[%s3129 + $0x28] sm:$0xf]
        %v3141 = vld [vmem:[%s3129 + $0x2c] sm:$0xf]
        %v3142 = vld [vmem:[%s3129 + $0x30] sm:$0xf]
        %v3143 = vld [vmem:[%s3129 + $0x34] sm:$0xf]
        %v3144 = vld [vmem:[%s3129 + $0x38] sm:$0xf]
        %v3145 = vld [vmem:[%s3129 + $0x3c] sm:$0xf]
        %s3146 = scalar_lea.vmem [#allocation8], 256
        %v3147 = vld [vmem:[%s3146] sm:$0xf]
        %v3148 = vld [vmem:[%s3146 + $0x4] sm:$0xf]
        %v3149 = vld [vmem:[%s3146 + $0x8] sm:$0xf]
        %v3150 = vld [vmem:[%s3146 + $0xc] sm:$0xf]
        %v3151 = vld [vmem:[%s3146 + $0x10] sm:$0xf]
        %v3152 = vld [vmem:[%s3146 + $0x14] sm:$0xf]
        %v3153 = vld [vmem:[%s3146 + $0x18] sm:$0xf]
        %v3154 = vld [vmem:[%s3146 + $0x1c] sm:$0xf]
        %v3155 = vld [vmem:[%s3146 + $0x20] sm:$0xf]
        %v3156 = vld [vmem:[%s3146 + $0x24] sm:$0xf]
        %v3157 = vld [vmem:[%s3146 + $0x28] sm:$0xf]
        %v3158 = vld [vmem:[%s3146 + $0x2c] sm:$0xf]
        %v3159 = vld [vmem:[%s3146 + $0x30] sm:$0xf]
        %v3160 = vld [vmem:[%s3146 + $0x34] sm:$0xf]
        %v3161 = vld [vmem:[%s3146 + $0x38] sm:$0xf]
        %v3162 = vld [vmem:[%s3146 + $0x3c] sm:$0xf]
        %v3163 = vld [vmem:[%s10 + $0x5] sm:$0x1]
        %v3164 = vmul.f32 %v3125, %v597
        %v3165 = vmul.f32 %v3126, %v602
        %v3166 = vmul.f32 %v3127, %v607
        %v3167 = vmul.f32 %v3128, %v612
        %3168 = vst [vmem:[#allocation2 + $0x10] sm:$0xff] %v3164
        %3169 = vst [vmem:[#allocation2 + $0x18] sm:$0xff] %v3165
        %3170 = vst [vmem:[#allocation2 + $0x20] sm:$0xff] %v3166
        %3171 = vst [vmem:[#allocation2 + $0x28] sm:$0xff] %v3167
        %v3172 = vld [vmem:[#allocation2 + $0x8] sm:$0xff]
        %v3173 = vld [vmem:[#allocation2 + $0x10] sm:$0xff]
        %v3174 = vld [vmem:[#allocation2 + $0x18] sm:$0xff]
        %v3175 = vld [vmem:[#allocation2 + $0x20] sm:$0xff]
        %v3176 = vpack.c.bf16 %v3173, %v3172
        %v3177 = vpack.c.bf16 %v3175, %v3174
        %v3178 = vld [vmem:[#allocation2 + $0x28] sm:$0xff]
        %v3179 = vld [vmem:[#allocation2 + $0x30] sm:$0xff]
        %v3180 = vpack.c.bf16 %v3179, %v3178
        %v3197 = vunpack.c.l.b16 %v3147
        %v3198 = vunpack.c.l.b16 %v3148
        %v3199 = vunpack.c.l.b16 %v3149
        %v3200 = vunpack.c.l.b16 %v3150
        %v3201 = vunpack.c.l.b16 %v3151
        %v3202 = vunpack.c.l.b16 %v3152
        %v3203 = vunpack.c.l.b16 %v3153
        %v3204 = vunpack.c.l.b16 %v3154
        %v3205 = vunpack.c.l.b16 %v3155
        %v3206 = vunpack.c.l.b16 %v3156
        %v3207 = vunpack.c.l.b16 %v3157
        %v3208 = vunpack.c.l.b16 %v3158
        %v3209 = vunpack.c.l.b16 %v3159
        %v3210 = vunpack.c.l.b16 %v3160
        %v3211 = vunpack.c.l.b16 %v3161
        %v3212 = vunpack.c.l.b16 %v3162
        %v3213 = vpack.c.b16 %v3198, %v3197
        %v3214 = vpack.c.b16 %v3200, %v3199
        %v3215 = vpack.c.b16 %v3202, %v3201
        %v3216 = vpack.c.b16 %v3204, %v3203
        %v3217 = vpack.c.b16 %v3206, %v3205
        %v3218 = vpack.c.b16 %v3208, %v3207
        %v3219 = vpack.c.b16 %v3210, %v3209
        %v3220 = vpack.c.b16 %v3212, %v3211
        %3229 = vmatprep.subr.bf16.mxu0 0
        %3230 = vmatpush1.bf16.msra.mxu0 %v3213
        %3231 = vmatprep.subr.bf16.mxu0 0
        %3232 = vmatpush1.bf16.msra.mxu0 %v3214
        %3233 = vmatprep.subr.bf16.mxu0 0
        %3234 = vmatpush1.bf16.msra.mxu0 %v3215
        %3235 = vmatprep.subr.bf16.mxu0 0
        %3236 = vmatpush1.bf16.msra.mxu0 %v3216
        %3237 = vmatprep.subr.bf16.mxu0 0
        %3238 = vmatpush1.bf16.msra.mxu0 %v3217
        %3239 = vmatprep.subr.bf16.mxu0 0
        %3240 = vmatpush1.bf16.msra.mxu0 %v3218
        %3241 = vmatprep.subr.bf16.mxu0 0
        %3242 = vmatpush1.bf16.msra.mxu0 %v3219
        %3243 = vmatprep.subr.bf16.mxu0 0
        %3244 = vmatpush1.bf16.msra.mxu0 %v3220
        %3245 = vmatprep.subr.bf16.mxu0 0
        %3246 = vmatpush1.bf16.msra.mxu0 0
        %3247 = vmatprep.subr.bf16.mxu0 0
        %3248 = vmatpush1.bf16.msra.mxu0 0
        %3249 = vmatprep.subr.bf16.mxu0 0
        %3250 = vmatpush1.bf16.msra.mxu0 0
        %3251 = vmatprep.subr.bf16.mxu0 0
        %3252 = vmatpush1.bf16.msra.mxu0 0
        %3253 = vmatprep.subr.bf16.mxu0 0
        %3254 = vmatpush1.bf16.msra.mxu0 0
        %3255 = vmatprep.subr.bf16.mxu0 0
        %3256 = vmatpush1.bf16.msra.mxu0 0
        %3257 = vmatprep.subr.bf16.mxu0 0
        %3258 = vmatpush1.bf16.msra.mxu0 0
        %3259 = vmatprep.subr.bf16.mxu0 0
        %3260 = vmatpush1.bf16.msra.mxu0 0
        %3261 = vmatprep.mubr.bf16.mxu0 0
        %3262 = vmatmul.mubr.bf16.gmra.mrb[0].mxu0 %v3177
        %v3263 = vpop.f32.mrb[0].mxu0
        %v3264 = vadd.f32 0.0, %v3263
        %v3265 = vpop.f32.mrb[0].mxu0
        %v3266 = vpop.f32.mrb[0].mxu0
        %v3267 = vadd.f32 0.0, %v3266
        %v3268 = vpop.f32.mrb[0].mxu0
        %3269 = vmatprep.mubr.bf16.mxu0 0
        %3270 = vmatmul.mubr.bf16.gmra.mrb[0].mxu0 %v3180
        %v3271 = vpop.f32.mrb[0].mxu0
        %v3272 = vadd.f32 0.0, %v3271
        %v3273 = vpop.f32.mrb[0].mxu0
        %v3274 = vpop.f32.mrb[0].mxu0
        %v3275 = vadd.f32 0.0, %v3274
        %v3276 = vpop.f32.mrb[0].mxu0
        %3277 = vdwg.mxu0
        %v3294 = vunpack.c.l.b16 %v3130
        %v3295 = vunpack.c.l.b16 %v3131
        %v3296 = vunpack.c.l.b16 %v3132
        %v3297 = vunpack.c.l.b16 %v3133
        %v3298 = vunpack.c.l.b16 %v3134
        %v3299 = vunpack.c.l.b16 %v3135
        %v3300 = vunpack.c.l.b16 %v3136
        %v3301 = vunpack.c.l.b16 %v3137
        %v3302 = vunpack.c.l.b16 %v3138
        %v3303 = vunpack.c.l.b16 %v3139
        %v3304 = vunpack.c.l.b16 %v3140
        %v3305 = vunpack.c.l.b16 %v3141
        %v3306 = vunpack.c.l.b16 %v3142
        %v3307 = vunpack.c.l.b16 %v3143
        %v3308 = vunpack.c.l.b16 %v3144
        %v3309 = vunpack.c.l.b16 %v3145
        %v3310 = vpack.c.b16 %v3295, %v3294
        %v3311 = vpack.c.b16 %v3297, %v3296
        %v3312 = vpack.c.b16 %v3299, %v3298
        %v3313 = vpack.c.b16 %v3301, %v3300
        %v3314 = vpack.c.b16 %v3303, %v3302
        %v3315 = vpack.c.b16 %v3305, %v3304
        %v3316 = vpack.c.b16 %v3307, %v3306
        %v3317 = vpack.c.b16 %v3309, %v3308
        %3326 = vmatprep.subr.bf16.mxu0 0
        %3327 = vmatpush1.bf16.msra.mxu0 %v3310
        %3328 = vmatprep.subr.bf16.mxu0 0
        %3329 = vmatpush1.bf16.msra.mxu0 %v3311
        %3330 = vmatprep.subr.bf16.mxu0 0
        %3331 = vmatpush1.bf16.msra.mxu0 %v3312
        %3332 = vmatprep.subr.bf16.mxu0 0
        %3333 = vmatpush1.bf16.msra.mxu0 %v3313
        %3334 = vmatprep.subr.bf16.mxu0 0
        %3335 = vmatpush1.bf16.msra.mxu0 %v3314
        %3336 = vmatprep.subr.bf16.mxu0 0
        %3337 = vmatpush1.bf16.msra.mxu0 %v3315
        %3338 = vmatprep.subr.bf16.mxu0 0
        %3339 = vmatpush1.bf16.msra.mxu0 %v3316
        %3340 = vmatprep.subr.bf16.mxu0 0
        %3341 = vmatpush1.bf16.msra.mxu0 %v3317
        %3342 = vmatprep.subr.bf16.mxu0 0
        %3343 = vmatpush1.bf16.msra.mxu0 0
        %3344 = vmatprep.subr.bf16.mxu0 0
        %3345 = vmatpush1.bf16.msra.mxu0 0
        %3346 = vmatprep.subr.bf16.mxu0 0
        %3347 = vmatpush1.bf16.msra.mxu0 0
        %3348 = vmatprep.subr.bf16.mxu0 0
        %3349 = vmatpush1.bf16.msra.mxu0 0
        %3350 = vmatprep.subr.bf16.mxu0 0
        %3351 = vmatpush1.bf16.msra.mxu0 0
        %3352 = vmatprep.subr.bf16.mxu0 0
        %3353 = vmatpush1.bf16.msra.mxu0 0
        %3354 = vmatprep.subr.bf16.mxu0 0
        %3355 = vmatpush1.bf16.msra.mxu0 0
        %3356 = vmatprep.subr.bf16.mxu0 0
        %3357 = vmatpush1.bf16.msra.mxu0 0
        %3358 = vmatprep.mubr.bf16.mxu0 0
        %3359 = vmatmul.mubr.bf16.gmra.mrb[0].mxu0 %v3176
        %v3360 = vpop.f32.mrb[0].mxu0
        %v3361 = vadd.f32 %v3264, %v3360
        %v3362 = vpop.f32.mrb[0].mxu0
        %v3363 = vpop.f32.mrb[0].mxu0
        %v3364 = vadd.f32 %v3267, %v3363
        %v3365 = vpop.f32.mrb[0].mxu0
        %3366 = vmatprep.mubr.bf16.mxu0 0
        %3367 = vmatmul.mubr.bf16.gmra.mrb[0].mxu0 %v3177
        %v3368 = vpop.f32.mrb[0].mxu0
        %v3369 = vadd.f32 %v3272, %v3368
        %v3370 = vpop.f32.mrb[0].mxu0
        %v3371 = vpop.f32.mrb[0].mxu0
        %v3372 = vadd.f32 %v3275, %v3371
        %v3373 = vpop.f32.mrb[0].mxu0
        %3374 = vdwg.mxu0
        %v3375 = vlaneseq
        %v3376 = vshrl.u32 %v3375, 7
        %v3377 = vsub.s32 0, %v3376
        %v3378 = vrot.slane %v3163, %v3377
        %v3379 = vadd.f32 %v3361, %v3378
        %v3380 = vadd.f32 %v3364, %v3378
        %v3381 = vadd.f32 %v3369, %v3378
        %v3382 = vadd.f32 %v3372, %v3378
        %vm3383 = vcmp.ge.f32.partialorder %v3379, 0.0
        %vm3384 = vcmp.ge.f32.partialorder %v3380, 0.0
        %vm3385 = vcmp.ge.f32.partialorder %v3381, 0.0
        %vm3386 = vcmp.ge.f32.partialorder %v3382, 0.0
        %v3387 = vstv %s624
        %v3388 = vmul.f32 %v3387, %v3379
        %v3389 = vmul.f32 %v3387, %v3380
        %v3390 = vmul.f32 %v3387, %v3381
        %v3391 = vmul.f32 %v3387, %v3382
        %v3392 = vsel %vm3383, %v3379, %v3388
        %v3393 = vsel %vm3384, %v3380, %v3389
        %v3394 = vsel %vm3385, %v3381, %v3390
        %v3395 = vsel %vm3386, %v3382, %v3391
        %s3396 = scalar_lea.vmem [#allocation9], 256
        %v3397 = vld [vmem:[%s3396] sm:$0xf]
        %v3398 = vld [vmem:[%s3396 + $0x4] sm:$0xf]
        %v3399 = vld [vmem:[%s3396 + $0x8] sm:$0xf]
        %v3400 = vld [vmem:[%s3396 + $0xc] sm:$0xf]
        %v3401 = vld [vmem:[%s3396 + $0x10] sm:$0xf]
        %v3402 = vld [vmem:[%s3396 + $0x14] sm:$0xf]
        %v3403 = vld [vmem:[%s3396 + $0x18] sm:$0xf]
        %v3404 = vld [vmem:[%s3396 + $0x1c] sm:$0xf]
        %v3405 = vld [vmem:[%s3396 + $0x20] sm:$0xf]
        %v3406 = vld [vmem:[%s3396 + $0x24] sm:$0xf]
        %v3407 = vld [vmem:[%s3396 + $0x28] sm:$0xf]
        %v3408 = vld [vmem:[%s3396 + $0x2c] sm:$0xf]
        %v3409 = vld [vmem:[%s3396 + $0x30] sm:$0xf]
        %v3410 = vld [vmem:[%s3396 + $0x34] sm:$0xf]
        %v3411 = vld [vmem:[%s3396 + $0x38] sm:$0xf]
        %v3412 = vld [vmem:[%s3396 + $0x3c] sm:$0xf]
        %s3413 = scalar_lea.vmem [#allocation11], 256
        %v3414 = vld [vmem:[%s3413] sm:$0xf]
        %v3415 = vld [vmem:[%s3413 + $0x4] sm:$0xf]
        %v3416 = vld [vmem:[%s3413 + $0x8] sm:$0xf]
        %v3417 = vld [vmem:[%s3413 + $0xc] sm:$0xf]
        %v3418 = vld [vmem:[%s3413 + $0x10] sm:$0xf]
        %v3419 = vld [vmem:[%s3413 + $0x14] sm:$0xf]
        %v3420 = vld [vmem:[%s3413 + $0x18] sm:$0xf]
        %v3421 = vld [vmem:[%s3413 + $0x1c] sm:$0xf]
        %v3422 = vld [vmem:[%s3413 + $0x20] sm:$0xf]
        %v3423 = vld [vmem:[%s3413 + $0x24] sm:$0xf]
        %v3424 = vld [vmem:[%s3413 + $0x28] sm:$0xf]
        %v3425 = vld [vmem:[%s3413 + $0x2c] sm:$0xf]
        %v3426 = vld [vmem:[%s3413 + $0x30] sm:$0xf]
        %v3427 = vld [vmem:[%s3413 + $0x34] sm:$0xf]
        %v3428 = vld [vmem:[%s3413 + $0x38] sm:$0xf]
        %v3429 = vld [vmem:[%s3413 + $0x3c] sm:$0xf]
        %v3430 = vld [vmem:[#allocation14 + $0x5] sm:$0x1]
        %v3431 = vmul.f32 %v3392, %v597
        %v3432 = vmul.f32 %v3393, %v602
        %v3433 = vmul.f32 %v3394, %v607
        %v3434 = vmul.f32 %v3395, %v612
        %3435 = vst [vmem:[#allocation2 + $0x10] sm:$0xff] %v3431
        %3436 = vst [vmem:[#allocation2 + $0x18] sm:$0xff] %v3432
        %3437 = vst [vmem:[#allocation2 + $0x20] sm:$0xff] %v3433
        %3438 = vst [vmem:[#allocation2 + $0x28] sm:$0xff] %v3434
        %v3439 = vld [vmem:[#allocation2 + $0x8] sm:$0xff]
        %v3440 = vld [vmem:[#allocation2 + $0x10] sm:$0xff]
        %v3441 = vld [vmem:[#allocation2 + $0x18] sm:$0xff]
        %v3442 = vld [vmem:[#allocation2 + $0x20] sm:$0xff]
        %v3443 = vpack.c.bf16 %v3440, %v3439
        %v3444 = vpack.c.bf16 %v3442, %v3441
        %v3445 = vld [vmem:[#allocation2 + $0x28] sm:$0xff]
        %v3446 = vld [vmem:[#allocation2 + $0x30] sm:$0xff]
        %v3447 = vpack.c.bf16 %v3446, %v3445
        %v3464 = vunpack.c.l.b16 %v3414
        %v3465 = vunpack.c.l.b16 %v3415
        %v3466 = vunpack.c.l.b16 %v3416
        %v3467 = vunpack.c.l.b16 %v3417
        %v3468 = vunpack.c.l.b16 %v3418
        %v3469 = vunpack.c.l.b16 %v3419
        %v3470 = vunpack.c.l.b16 %v3420
        %v3471 = vunpack.c.l.b16 %v3421
        %v3472 = vunpack.c.l.b16 %v3422
        %v3473 = vunpack.c.l.b16 %v3423
        %v3474 = vunpack.c.l.b16 %v3424
        %v3475 = vunpack.c.l.b16 %v3425
        %v3476 = vunpack.c.l.b16 %v3426
        %v3477 = vunpack.c.l.b16 %v3427
        %v3478 = vunpack.c.l.b16 %v3428
        %v3479 = vunpack.c.l.b16 %v3429
        %v3480 = vpack.c.b16 %v3465, %v3464
        %v3481 = vpack.c.b16 %v3467, %v3466
        %v3482 = vpack.c.b16 %v3469, %v3468
        %v3483 = vpack.c.b16 %v3471, %v3470
        %v3484 = vpack.c.b16 %v3473, %v3472
        %v3485 = vpack.c.b16 %v3475, %v3474
        %v3486 = vpack.c.b16 %v3477, %v3476
        %v3487 = vpack.c.b16 %v3479, %v3478
        %3496 = vmatprep.subr.bf16.mxu0 0
        %3497 = vmatpush1.bf16.msra.mxu0 %v3480
        %3498 = vmatprep.subr.bf16.mxu0 0
        %3499 = vmatpush1.bf16.msra.mxu0 %v3481
        %3500 = vmatprep.subr.bf16.mxu0 0
        %3501 = vmatpush1.bf16.msra.mxu0 %v3482
        %3502 = vmatprep.subr.bf16.mxu0 0
        %3503 = vmatpush1.bf16.msra.mxu0 %v3483
        %3504 = vmatprep.subr.bf16.mxu0 0
        %3505 = vmatpush1.bf16.msra.mxu0 %v3484
        %3506 = vmatprep.subr.bf16.mxu0 0
        %3507 = vmatpush1.bf16.msra.mxu0 %v3485
        %3508 = vmatprep.subr.bf16.mxu0 0
        %3509 = vmatpush1.bf16.msra.mxu0 %v3486
        %3510 = vmatprep.subr.bf16.mxu0 0
        %3511 = vmatpush1.bf16.msra.mxu0 %v3487
        %3512 = vmatprep.subr.bf16.mxu0 0
        %3513 = vmatpush1.bf16.msra.mxu0 0
        %3514 = vmatprep.subr.bf16.mxu0 0
        %3515 = vmatpush1.bf16.msra.mxu0 0
        %3516 = vmatprep.subr.bf16.mxu0 0
        %3517 = vmatpush1.bf16.msra.mxu0 0
        %3518 = vmatprep.subr.bf16.mxu0 0
        %3519 = vmatpush1.bf16.msra.mxu0 0
        %3520 = vmatprep.subr.bf16.mxu0 0
        %3521 = vmatpush1.bf16.msra.mxu0 0
        %3522 = vmatprep.subr.bf16.mxu0 0
        %3523 = vmatpush1.bf16.msra.mxu0 0
        %3524 = vmatprep.subr.bf16.mxu0 0
        %3525 = vmatpush1.bf16.msra.mxu0 0
        %3526 = vmatprep.subr.bf16.mxu0 0
        %3527 = vmatpush1.bf16.msra.mxu0 0
        %3528 = vmatprep.mubr.bf16.mxu0 0
        %3529 = vmatmul.mubr.bf16.gmra.mrb[0].mxu0 %v3444
        %v3530 = vpop.f32.mrb[0].mxu0
        %v3531 = vadd.f32 0.0, %v3530
        %v3532 = vpop.f32.mrb[0].mxu0
        %v3533 = vpop.f32.mrb[0].mxu0
        %v3534 = vadd.f32 0.0, %v3533
        %v3535 = vpop.f32.mrb[0].mxu0
        %3536 = vmatprep.mubr.bf16.mxu0 0
        %3537 = vmatmul.mubr.bf16.gmra.mrb[0].mxu0 %v3447
        %v3538 = vpop.f32.mrb[0].mxu0
        %v3539 = vadd.f32 0.0, %v3538
        %v3540 = vpop.f32.mrb[0].mxu0
        %v3541 = vpop.f32.mrb[0].mxu0
        %v3542 = vadd.f32 0.0, %v3541
        %v3543 = vpop.f32.mrb[0].mxu0
        %3544 = vdwg.mxu0
        %v3561 = vunpack.c.l.b16 %v3397
        %v3562 = vunpack.c.l.b16 %v3398
        %v3563 = vunpack.c.l.b16 %v3399
        %v3564 = vunpack.c.l.b16 %v3400
        %v3565 = vunpack.c.l.b16 %v3401
        %v3566 = vunpack.c.l.b16 %v3402
        %v3567 = vunpack.c.l.b16 %v3403
        %v3568 = vunpack.c.l.b16 %v3404
        %v3569 = vunpack.c.l.b16 %v3405
        %v3570 = vunpack.c.l.b16 %v3406
        %v3571 = vunpack.c.l.b16 %v3407
        %v3572 = vunpack.c.l.b16 %v3408
        %v3573 = vunpack.c.l.b16 %v3409
        %v3574 = vunpack.c.l.b16 %v3410
        %v3575 = vunpack.c.l.b16 %v3411
        %v3576 = vunpack.c.l.b16 %v3412
        %v3577 = vpack.c.b16 %v3562, %v3561
        %v3578 = vpack.c.b16 %v3564, %v3563
        %v3579 = vpack.c.b16 %v3566, %v3565
        %v3580 = vpack.c.b16 %v3568, %v3567
        %v3581 = vpack.c.b16 %v3570, %v3569
        %v3582 = vpack.c.b16 %v3572, %v3571
        %v3583 = vpack.c.b16 %v3574, %v3573
        %v3584 = vpack.c.b16 %v3576, %v3575
        %3593 = vmatprep.subr.bf16.mxu0 0
        %3594 = vmatpush1.bf16.msra.mxu0 %v3577
        %3595 = vmatprep.subr.bf16.mxu0 0
        %3596 = vmatpush1.bf16.msra.mxu0 %v3578
        %3597 = vmatprep.subr.bf16.mxu0 0
        %3598 = vmatpush1.bf16.msra.mxu0 %v3579
        %3599 = vmatprep.subr.bf16.mxu0 0
        %3600 = vmatpush1.bf16.msra.mxu0 %v3580
        %3601 = vmatprep.subr.bf16.mxu0 0
        %3602 = vmatpush1.bf16.msra.mxu0 %v3581
        %3603 = vmatprep.subr.bf16.mxu0 0
        %3604 = vmatpush1.bf16.msra.mxu0 %v3582
        %3605 = vmatprep.subr.bf16.mxu0 0
        %3606 = vmatpush1.bf16.msra.mxu0 %v3583
        %3607 = vmatprep.subr.bf16.mxu0 0
        %3608 = vmatpush1.bf16.msra.mxu0 %v3584
        %3609 = vmatprep.subr.bf16.mxu0 0
        %3610 = vmatpush1.bf16.msra.mxu0 0
        %3611 = vmatprep.subr.bf16.mxu0 0
        %3612 = vmatpush1.bf16.msra.mxu0 0
        %3613 = vmatprep.subr.bf16.mxu0 0
        %3614 = vmatpush1.bf16.msra.mxu0 0
        %3615 = vmatprep.subr.bf16.mxu0 0
        %3616 = vmatpush1.bf16.msra.mxu0 0
        %3617 = vmatprep.subr.bf16.mxu0 0
        %3618 = vmatpush1.bf16.msra.mxu0 0
        %3619 = vmatprep.subr.bf16.mxu0 0
        %3620 = vmatpush1.bf16.msra.mxu0 0
        %3621 = vmatprep.subr.bf16.mxu0 0
        %3622 = vmatpush1.bf16.msra.mxu0 0
        %3623 = vmatprep.subr.bf16.mxu0 0
        %3624 = vmatpush1.bf16.msra.mxu0 0
        %3625 = vmatprep.mubr.bf16.mxu0 0
        %3626 = vmatmul.mubr.bf16.gmra.mrb[0].mxu0 %v3443
        %v3627 = vpop.f32.mrb[0].mxu0
        %v3628 = vadd.f32 %v3531, %v3627
        %v3629 = vpop.f32.mrb[0].mxu0
        %v3630 = vpop.f32.mrb[0].mxu0
        %v3631 = vadd.f32 %v3534, %v3630
        %v3632 = vpop.f32.mrb[0].mxu0
        %3633 = vmatprep.mubr.bf16.mxu0 0
        %3634 = vmatmul.mubr.bf16.gmra.mrb[0].mxu0 %v3444
        %v3635 = vpop.f32.mrb[0].mxu0
        %v3636 = vadd.f32 %v3539, %v3635
        %v3637 = vpop.f32.mrb[0].mxu0
        %v3638 = vpop.f32.mrb[0].mxu0
        %v3639 = vadd.f32 %v3542, %v3638
        %v3640 = vpop.f32.mrb[0].mxu0
        %3641 = vdwg.mxu0
        %v3642 = vlaneseq
        %v3643 = vshrl.u32 %v3642, 7
        %v3644 = vsub.s32 0, %v3643
        %v3645 = vrot.slane %v3430, %v3644
        %v3646 = vadd.f32 %v3628, %v3645
        %v3647 = vadd.f32 %v3631, %v3645
        %v3648 = vadd.f32 %v3636, %v3645
        %v3649 = vadd.f32 %v3639, %v3645
        %vm3650 = vcmp.ge.f32.partialorder %v3646, 0.0
        %vm3651 = vcmp.ge.f32.partialorder %v3647, 0.0
        %vm3652 = vcmp.ge.f32.partialorder %v3648, 0.0
        %vm3653 = vcmp.ge.f32.partialorder %v3649, 0.0
        %v3654 = vstv %s625
        %v3655 = vmul.f32 %v3654, %v3646
        %v3656 = vmul.f32 %v3654, %v3647
        %v3657 = vmul.f32 %v3654, %v3648
        %v3658 = vmul.f32 %v3654, %v3649
        %v3659 = vsel %vm3650, %v3646, %v3655
        %v3660 = vsel %vm3651, %v3647, %v3656
        %v3661 = vsel %vm3652, %v3648, %v3657
        %v3662 = vsel %vm3653, %v3649, %v3658
        %v3663 = vadd.f32 %v3659, %v3125
        %v3664 = vadd.f32 %v3660, %v3126
        %v3665 = vadd.f32 %v3661, %v3127
        %v3666 = vadd.f32 %v3662, %v3128
        %s3667 = scalar_lea.vmem [#allocation6], 320
        %v3668 = vld [vmem:[%s3667] sm:$0xf]
        %v3669 = vld [vmem:[%s3667 + $0x4] sm:$0xf]
        %v3670 = vld [vmem:[%s3667 + $0x8] sm:$0xf]
        %v3671 = vld [vmem:[%s3667 + $0xc] sm:$0xf]
        %v3672 = vld [vmem:[%s3667 + $0x10] sm:$0xf]
        %v3673 = vld [vmem:[%s3667 + $0x14] sm:$0xf]
        %v3674 = vld [vmem:[%s3667 + $0x18] sm:$0xf]
        %v3675 = vld [vmem:[%s3667 + $0x1c] sm:$0xf]
        %v3676 = vld [vmem:[%s3667 + $0x20] sm:$0xf]
        %v3677 = vld [vmem:[%s3667 + $0x24] sm:$0xf]
        %v3678 = vld [vmem:[%s3667 + $0x28] sm:$0xf]
        %v3679 = vld [vmem:[%s3667 + $0x2c] sm:$0xf]
        %v3680 = vld [vmem:[%s3667 + $0x30] sm:$0xf]
        %v3681 = vld [vmem:[%s3667 + $0x34] sm:$0xf]
        %v3682 = vld [vmem:[%s3667 + $0x38] sm:$0xf]
        %v3683 = vld [vmem:[%s3667 + $0x3c] sm:$0xf]
        %s3684 = scalar_lea.vmem [#allocation8], 320
        %v3685 = vld [vmem:[%s3684] sm:$0xf]
        %v3686 = vld [vmem:[%s3684 + $0x4] sm:$0xf]
        %v3687 = vld [vmem:[%s3684 + $0x8] sm:$0xf]
        %v3688 = vld [vmem:[%s3684 + $0xc] sm:$0xf]
        %v3689 = vld [vmem:[%s3684 + $0x10] sm:$0xf]
        %v3690 = vld [vmem:[%s3684 + $0x14] sm:$0xf]
        %v3691 = vld [vmem:[%s3684 + $0x18] sm:$0xf]
        %v3692 = vld [vmem:[%s3684 + $0x1c] sm:$0xf]
        %v3693 = vld [vmem:[%s3684 + $0x20] sm:$0xf]
        %v3694 = vld [vmem:[%s3684 + $0x24] sm:$0xf]
        %v3695 = vld [vmem:[%s3684 + $0x28] sm:$0xf]
        %v3696 = vld [vmem:[%s3684 + $0x2c] sm:$0xf]
        %v3697 = vld [vmem:[%s3684 + $0x30] sm:$0xf]
        %v3698 = vld [vmem:[%s3684 + $0x34] sm:$0xf]
        %v3699 = vld [vmem:[%s3684 + $0x38] sm:$0xf]
        %v3700 = vld [vmem:[%s3684 + $0x3c] sm:$0xf]
        %v3701 = vld [vmem:[%s10 + $0x6] sm:$0x1]
        %v3702 = vmul.f32 %v3663, %v597
        %v3703 = vmul.f32 %v3664, %v602
        %v3704 = vmul.f32 %v3665, %v607
        %v3705 = vmul.f32 %v3666, %v612
        %3706 = vst [vmem:[#allocation2 + $0x10] sm:$0xff] %v3702
        %3707 = vst [vmem:[#allocation2 + $0x18] sm:$0xff] %v3703
        %3708 = vst [vmem:[#allocation2 + $0x20] sm:$0xff] %v3704
        %3709 = vst [vmem:[#allocation2 + $0x28] sm:$0xff] %v3705
        %v3710 = vld [vmem:[#allocation2] sm:$0xff]
        %v3711 = vld [vmem:[#allocation2 + $0x8] sm:$0xff]
        %v3712 = vld [vmem:[#allocation2 + $0x10] sm:$0xff]
        %v3713 = vld [vmem:[#allocation2 + $0x18] sm:$0xff]
        %v3714 = vpack.c.bf16 %v3711, %v3710
        %v3715 = vpack.c.bf16 %v3713, %v3712
        %v3716 = vld [vmem:[#allocation2 + $0x20] sm:$0xff]
        %v3717 = vld [vmem:[#allocation2 + $0x28] sm:$0xff]
        %v3718 = vld [vmem:[#allocation2 + $0x30] sm:$0xff]
        %v3719 = vld [vmem:[#allocation2 + $0x38] sm:$0xff]
        %v3720 = vpack.c.bf16 %v3717, %v3716
        %v3721 = vpack.c.bf16 %v3719, %v3718
        %v3738 = vunpack.c.l.b16 %v3685
        %v3739 = vunpack.c.l.b16 %v3686
        %v3740 = vunpack.c.l.b16 %v3687
        %v3741 = vunpack.c.l.b16 %v3688
        %v3742 = vunpack.c.l.b16 %v3689
        %v3743 = vunpack.c.l.b16 %v3690
        %v3744 = vunpack.c.l.b16 %v3691
        %v3745 = vunpack.c.l.b16 %v3692
        %v3746 = vunpack.c.l.b16 %v3693
        %v3747 = vunpack.c.l.b16 %v3694
        %v3748 = vunpack.c.l.b16 %v3695
        %v3749 = vunpack.c.l.b16 %v3696
        %v3750 = vunpack.c.l.b16 %v3697
        %v3751 = vunpack.c.l.b16 %v3698
        %v3752 = vunpack.c.l.b16 %v3699
        %v3753 = vunpack.c.l.b16 %v3700
        %v3754 = vpack.c.b16 %v3739, %v3738
        %v3755 = vpack.c.b16 %v3741, %v3740
        %v3756 = vpack.c.b16 %v3743, %v3742
        %v3757 = vpack.c.b16 %v3745, %v3744
        %v3758 = vpack.c.b16 %v3747, %v3746
        %v3759 = vpack.c.b16 %v3749, %v3748
        %v3760 = vpack.c.b16 %v3751, %v3750
        %v3761 = vpack.c.b16 %v3753, %v3752
        %3770 = vmatprep.subr.bf16.mxu0 0
        %3771 = vmatpush1.bf16.msra.mxu0 %v3754
        %3772 = vmatprep.subr.bf16.mxu0 0
        %3773 = vmatpush1.bf16.msra.mxu0 %v3755
        %3774 = vmatprep.subr.bf16.mxu0 0
        %3775 = vmatpush1.bf16.msra.mxu0 %v3756
        %3776 = vmatprep.subr.bf16.mxu0 0
        %3777 = vmatpush1.bf16.msra.mxu0 %v3757
        %3778 = vmatprep.subr.bf16.mxu0 0
        %3779 = vmatpush1.bf16.msra.mxu0 %v3758
        %3780 = vmatprep.subr.bf16.mxu0 0
        %3781 = vmatpush1.bf16.msra.mxu0 %v3759
        %3782 = vmatprep.subr.bf16.mxu0 0
        %3783 = vmatpush1.bf16.msra.mxu0 %v3760
        %3784 = vmatprep.subr.bf16.mxu0 0
        %3785 = vmatpush1.bf16.msra.mxu0 %v3761
        %3786 = vmatprep.subr.bf16.mxu0 0
        %3787 = vmatpush1.bf16.msra.mxu0 0
        %3788 = vmatprep.subr.bf16.mxu0 0
        %3789 = vmatpush1.bf16.msra.mxu0 0
        %3790 = vmatprep.subr.bf16.mxu0 0
        %3791 = vmatpush1.bf16.msra.mxu0 0
        %3792 = vmatprep.subr.bf16.mxu0 0
        %3793 = vmatpush1.bf16.msra.mxu0 0
        %3794 = vmatprep.subr.bf16.mxu0 0
        %3795 = vmatpush1.bf16.msra.mxu0 0
        %3796 = vmatprep.subr.bf16.mxu0 0
        %3797 = vmatpush1.bf16.msra.mxu0 0
        %3798 = vmatprep.subr.bf16.mxu0 0
        %3799 = vmatpush1.bf16.msra.mxu0 0
        %3800 = vmatprep.subr.bf16.mxu0 0
        %3801 = vmatpush1.bf16.msra.mxu0 0
        %3802 = vmatprep.mubr.bf16.mxu0 0
        %3803 = vmatmul.mubr.bf16.gmra.mrb[0].mxu0 %v3720
        %v3804 = vpop.f32.mrb[0].mxu0
        %v3805 = vadd.f32 0.0, %v3804
        %v3806 = vpop.f32.mrb[0].mxu0
        %v3807 = vpop.f32.mrb[0].mxu0
        %v3808 = vadd.f32 0.0, %v3807
        %v3809 = vpop.f32.mrb[0].mxu0
        %3810 = vmatprep.mubr.bf16.mxu0 0
        %3811 = vmatmul.mubr.bf16.gmra.mrb[0].mxu0 %v3721
        %v3812 = vpop.f32.mrb[0].mxu0
        %v3813 = vadd.f32 0.0, %v3812
        %v3814 = vpop.f32.mrb[0].mxu0
        %v3815 = vpop.f32.mrb[0].mxu0
        %v3816 = vadd.f32 0.0, %v3815
        %v3817 = vpop.f32.mrb[0].mxu0
        %3818 = vdwg.mxu0
        %v3835 = vunpack.c.l.b16 %v3668
        %v3836 = vunpack.c.l.b16 %v3669
        %v3837 = vunpack.c.l.b16 %v3670
        %v3838 = vunpack.c.l.b16 %v3671
        %v3839 = vunpack.c.l.b16 %v3672
        %v3840 = vunpack.c.l.b16 %v3673
        %v3841 = vunpack.c.l.b16 %v3674
        %v3842 = vunpack.c.l.b16 %v3675
        %v3843 = vunpack.c.l.b16 %v3676
        %v3844 = vunpack.c.l.b16 %v3677
        %v3845 = vunpack.c.l.b16 %v3678
        %v3846 = vunpack.c.l.b16 %v3679
        %v3847 = vunpack.c.l.b16 %v3680
        %v3848 = vunpack.c.l.b16 %v3681
        %v3849 = vunpack.c.l.b16 %v3682
        %v3850 = vunpack.c.l.b16 %v3683
        %v3851 = vpack.c.b16 %v3836, %v3835
        %v3852 = vpack.c.b16 %v3838, %v3837
        %v3853 = vpack.c.b16 %v3840, %v3839
        %v3854 = vpack.c.b16 %v3842, %v3841
        %v3855 = vpack.c.b16 %v3844, %v3843
        %v3856 = vpack.c.b16 %v3846, %v3845
        %v3857 = vpack.c.b16 %v3848, %v3847
        %v3858 = vpack.c.b16 %v3850, %v3849
        %3867 = vmatprep.subr.bf16.mxu0 0
        %3868 = vmatpush1.bf16.msra.mxu0 %v3851
        %3869 = vmatprep.subr.bf16.mxu0 0
        %3870 = vmatpush1.bf16.msra.mxu0 %v3852
        %3871 = vmatprep.subr.bf16.mxu0 0
        %3872 = vmatpush1.bf16.msra.mxu0 %v3853
        %3873 = vmatprep.subr.bf16.mxu0 0
        %3874 = vmatpush1.bf16.msra.mxu0 %v3854
        %3875 = vmatprep.subr.bf16.mxu0 0
        %3876 = vmatpush1.bf16.msra.mxu0 %v3855
        %3877 = vmatprep.subr.bf16.mxu0 0
        %3878 = vmatpush1.bf16.msra.mxu0 %v3856
        %3879 = vmatprep.subr.bf16.mxu0 0
        %3880 = vmatpush1.bf16.msra.mxu0 %v3857
        %3881 = vmatprep.subr.bf16.mxu0 0
        %3882 = vmatpush1.bf16.msra.mxu0 %v3858
        %3883 = vmatprep.subr.bf16.mxu0 0
        %3884 = vmatpush1.bf16.msra.mxu0 0
        %3885 = vmatprep.subr.bf16.mxu0 0
        %3886 = vmatpush1.bf16.msra.mxu0 0
        %3887 = vmatprep.subr.bf16.mxu0 0
        %3888 = vmatpush1.bf16.msra.mxu0 0
        %3889 = vmatprep.subr.bf16.mxu0 0
        %3890 = vmatpush1.bf16.msra.mxu0 0
        %3891 = vmatprep.subr.bf16.mxu0 0
        %3892 = vmatpush1.bf16.msra.mxu0 0
        %3893 = vmatprep.subr.bf16.mxu0 0
        %3894 = vmatpush1.bf16.msra.mxu0 0
        %3895 = vmatprep.subr.bf16.mxu0 0
        %3896 = vmatpush1.bf16.msra.mxu0 0
        %3897 = vmatprep.subr.bf16.mxu0 0
        %3898 = vmatpush1.bf16.msra.mxu0 0
        %3899 = vmatprep.mubr.bf16.mxu0 0
        %3900 = vmatmul.mubr.bf16.gmra.mrb[0].mxu0 %v3714
        %v3901 = vpop.f32.mrb[0].mxu0
        %v3902 = vadd.f32 %v3805, %v3901
        %v3903 = vpop.f32.mrb[0].mxu0
        %v3904 = vpop.f32.mrb[0].mxu0
        %v3905 = vadd.f32 %v3808, %v3904
        %v3906 = vpop.f32.mrb[0].mxu0
        %3907 = vmatprep.mubr.bf16.mxu0 0
        %3908 = vmatmul.mubr.bf16.gmra.mrb[0].mxu0 %v3715
        %v3909 = vpop.f32.mrb[0].mxu0
        %v3910 = vadd.f32 %v3813, %v3909
        %v3911 = vpop.f32.mrb[0].mxu0
        %v3912 = vpop.f32.mrb[0].mxu0
        %v3913 = vadd.f32 %v3816, %v3912
        %v3914 = vpop.f32.mrb[0].mxu0
        %3915 = vdwg.mxu0
        %v3916 = vlaneseq
        %v3917 = vshrl.u32 %v3916, 7
        %v3918 = vsub.s32 0, %v3917
        %v3919 = vrot.slane %v3701, %v3918
        %v3920 = vadd.f32 %v3902, %v3919
        %v3921 = vadd.f32 %v3905, %v3919
        %v3922 = vadd.f32 %v3910, %v3919
        %v3923 = vadd.f32 %v3913, %v3919
        %vm3924 = vcmp.ge.f32.partialorder %v3920, 0.0
        %vm3925 = vcmp.ge.f32.partialorder %v3921, 0.0
        %vm3926 = vcmp.ge.f32.partialorder %v3922, 0.0
        %vm3927 = vcmp.ge.f32.partialorder %v3923, 0.0
        %v3928 = vstv %s626
        %v3929 = vmul.f32 %v3928, %v3920
        %v3930 = vmul.f32 %v3928, %v3921
        %v3931 = vmul.f32 %v3928, %v3922
        %v3932 = vmul.f32 %v3928, %v3923
        %v3933 = vsel %vm3924, %v3920, %v3929
        %v3934 = vsel %vm3925, %v3921, %v3930
        %v3935 = vsel %vm3926, %v3922, %v3931
        %v3936 = vsel %vm3927, %v3923, %v3932
        %s3937 = scalar_lea.vmem [#allocation9], 320
        %v3938 = vld [vmem:[%s3937] sm:$0xf]
        %v3939 = vld [vmem:[%s3937 + $0x4] sm:$0xf]
        %v3940 = vld [vmem:[%s3937 + $0x8] sm:$0xf]
        %v3941 = vld [vmem:[%s3937 + $0xc] sm:$0xf]
        %v3942 = vld [vmem:[%s3937 + $0x10] sm:$0xf]
        %v3943 = vld [vmem:[%s3937 + $0x14] sm:$0xf]
        %v3944 = vld [vmem:[%s3937 + $0x18] sm:$0xf]
        %v3945 = vld [vmem:[%s3937 + $0x1c] sm:$0xf]
        %v3946 = vld [vmem:[%s3937 + $0x20] sm:$0xf]
        %v3947 = vld [vmem:[%s3937 + $0x24] sm:$0xf]
        %v3948 = vld [vmem:[%s3937 + $0x28] sm:$0xf]
        %v3949 = vld [vmem:[%s3937 + $0x2c] sm:$0xf]
        %v3950 = vld [vmem:[%s3937 + $0x30] sm:$0xf]
        %v3951 = vld [vmem:[%s3937 + $0x34] sm:$0xf]
        %v3952 = vld [vmem:[%s3937 + $0x38] sm:$0xf]
        %v3953 = vld [vmem:[%s3937 + $0x3c] sm:$0xf]
        %s3954 = scalar_lea.vmem [#allocation11], 320
        %v3955 = vld [vmem:[%s3954] sm:$0xf]
        %v3956 = vld [vmem:[%s3954 + $0x4] sm:$0xf]
        %v3957 = vld [vmem:[%s3954 + $0x8] sm:$0xf]
        %v3958 = vld [vmem:[%s3954 + $0xc] sm:$0xf]
        %v3959 = vld [vmem:[%s3954 + $0x10] sm:$0xf]
        %v3960 = vld [vmem:[%s3954 + $0x14] sm:$0xf]
        %v3961 = vld [vmem:[%s3954 + $0x18] sm:$0xf]
        %v3962 = vld [vmem:[%s3954 + $0x1c] sm:$0xf]
        %v3963 = vld [vmem:[%s3954 + $0x20] sm:$0xf]
        %v3964 = vld [vmem:[%s3954 + $0x24] sm:$0xf]
        %v3965 = vld [vmem:[%s3954 + $0x28] sm:$0xf]
        %v3966 = vld [vmem:[%s3954 + $0x2c] sm:$0xf]
        %v3967 = vld [vmem:[%s3954 + $0x30] sm:$0xf]
        %v3968 = vld [vmem:[%s3954 + $0x34] sm:$0xf]
        %v3969 = vld [vmem:[%s3954 + $0x38] sm:$0xf]
        %v3970 = vld [vmem:[%s3954 + $0x3c] sm:$0xf]
        %v3971 = vld [vmem:[#allocation14 + $0x6] sm:$0x1]
        %v3972 = vmul.f32 %v3933, %v597
        %v3973 = vmul.f32 %v3934, %v602
        %v3974 = vmul.f32 %v3935, %v607
        %v3975 = vmul.f32 %v3936, %v612
        %3976 = vst [vmem:[#allocation2 + $0x10] sm:$0xff] %v3972
        %3977 = vst [vmem:[#allocation2 + $0x18] sm:$0xff] %v3973
        %3978 = vst [vmem:[#allocation2 + $0x20] sm:$0xff] %v3974
        %3979 = vst [vmem:[#allocation2 + $0x28] sm:$0xff] %v3975
        %v3980 = vld [vmem:[#allocation2] sm:$0xff]
        %v3981 = vld [vmem:[#allocation2 + $0x8] sm:$0xff]
        %v3982 = vld [vmem:[#allocation2 + $0x10] sm:$0xff]
        %v3983 = vld [vmem:[#allocation2 + $0x18] sm:$0xff]
        %v3984 = vpack.c.bf16 %v3981, %v3980
        %v3985 = vpack.c.bf16 %v3983, %v3982
        %v3986 = vld [vmem:[#allocation2 + $0x20] sm:$0xff]
        %v3987 = vld [vmem:[#allocation2 + $0x28] sm:$0xff]
        %v3988 = vld [vmem:[#allocation2 + $0x30] sm:$0xff]
        %v3989 = vld [vmem:[#allocation2 + $0x38] sm:$0xff]
        %v3990 = vpack.c.bf16 %v3987, %v3986
        %v3991 = vpack.c.bf16 %v3989, %v3988
        %v4008 = vunpack.c.l.b16 %v3955
        %v4009 = vunpack.c.l.b16 %v3956
        %v4010 = vunpack.c.l.b16 %v3957
        %v4011 = vunpack.c.l.b16 %v3958
        %v4012 = vunpack.c.l.b16 %v3959
        %v4013 = vunpack.c.l.b16 %v3960
        %v4014 = vunpack.c.l.b16 %v3961
        %v4015 = vunpack.c.l.b16 %v3962
        %v4016 = vunpack.c.l.b16 %v3963
        %v4017 = vunpack.c.l.b16 %v3964
        %v4018 = vunpack.c.l.b16 %v3965
        %v4019 = vunpack.c.l.b16 %v3966
        %v4020 = vunpack.c.l.b16 %v3967
        %v4021 = vunpack.c.l.b16 %v3968
        %v4022 = vunpack.c.l.b16 %v3969
        %v4023 = vunpack.c.l.b16 %v3970
        %v4024 = vpack.c.b16 %v4009, %v4008
        %v4025 = vpack.c.b16 %v4011, %v4010
        %v4026 = vpack.c.b16 %v4013, %v4012
        %v4027 = vpack.c.b16 %v4015, %v4014
        %v4028 = vpack.c.b16 %v4017, %v4016
        %v4029 = vpack.c.b16 %v4019, %v4018
        %v4030 = vpack.c.b16 %v4021, %v4020
        %v4031 = vpack.c.b16 %v4023, %v4022
        %4040 = vmatprep.subr.bf16.mxu0 0
        %4041 = vmatpush1.bf16.msra.mxu0 %v4024
        %4042 = vmatprep.subr.bf16.mxu0 0
        %4043 = vmatpush1.bf16.msra.mxu0 %v4025
        %4044 = vmatprep.subr.bf16.mxu0 0
        %4045 = vmatpush1.bf16.msra.mxu0 %v4026
        %4046 = vmatprep.subr.bf16.mxu0 0
        %4047 = vmatpush1.bf16.msra.mxu0 %v4027
        %4048 = vmatprep.subr.bf16.mxu0 0
        %4049 = vmatpush1.bf16.msra.mxu0 %v4028
        %4050 = vmatprep.subr.bf16.mxu0 0
        %4051 = vmatpush1.bf16.msra.mxu0 %v4029
        %4052 = vmatprep.subr.bf16.mxu0 0
        %4053 = vmatpush1.bf16.msra.mxu0 %v4030
        %4054 = vmatprep.subr.bf16.mxu0 0
        %4055 = vmatpush1.bf16.msra.mxu0 %v4031
        %4056 = vmatprep.subr.bf16.mxu0 0
        %4057 = vmatpush1.bf16.msra.mxu0 0
        %4058 = vmatprep.subr.bf16.mxu0 0
        %4059 = vmatpush1.bf16.msra.mxu0 0
        %4060 = vmatprep.subr.bf16.mxu0 0
        %4061 = vmatpush1.bf16.msra.mxu0 0
        %4062 = vmatprep.subr.bf16.mxu0 0
        %4063 = vmatpush1.bf16.msra.mxu0 0
        %4064 = vmatprep.subr.bf16.mxu0 0
        %4065 = vmatpush1.bf16.msra.mxu0 0
        %4066 = vmatprep.subr.bf16.mxu0 0
        %4067 = vmatpush1.bf16.msra.mxu0 0
        %4068 = vmatprep.subr.bf16.mxu0 0
        %4069 = vmatpush1.bf16.msra.mxu0 0
        %4070 = vmatprep.subr.bf16.mxu0 0
        %4071 = vmatpush1.bf16.msra.mxu0 0
        %4072 = vmatprep.mubr.bf16.mxu0 0
        %4073 = vmatmul.mubr.bf16.gmra.mrb[0].mxu0 %v3990
        %v4074 = vpop.f32.mrb[0].mxu0
        %v4075 = vadd.f32 0.0, %v4074
        %v4076 = vpop.f32.mrb[0].mxu0
        %v4077 = vpop.f32.mrb[0].mxu0
        %v4078 = vadd.f32 0.0, %v4077
        %v4079 = vpop.f32.mrb[0].mxu0
        %4080 = vmatprep.mubr.bf16.mxu0 0
        %4081 = vmatmul.mubr.bf16.gmra.mrb[0].mxu0 %v3991
        %v4082 = vpop.f32.mrb[0].mxu0
        %v4083 = vadd.f32 0.0, %v4082
        %v4084 = vpop.f32.mrb[0].mxu0
        %v4085 = vpop.f32.mrb[0].mxu0
        %v4086 = vadd.f32 0.0, %v4085
        %v4087 = vpop.f32.mrb[0].mxu0
        %4088 = vdwg.mxu0
        %v4105 = vunpack.c.l.b16 %v3938
        %v4106 = vunpack.c.l.b16 %v3939
        %v4107 = vunpack.c.l.b16 %v3940
        %v4108 = vunpack.c.l.b16 %v3941
        %v4109 = vunpack.c.l.b16 %v3942
        %v4110 = vunpack.c.l.b16 %v3943
        %v4111 = vunpack.c.l.b16 %v3944
        %v4112 = vunpack.c.l.b16 %v3945
        %v4113 = vunpack.c.l.b16 %v3946
        %v4114 = vunpack.c.l.b16 %v3947
        %v4115 = vunpack.c.l.b16 %v3948
        %v4116 = vunpack.c.l.b16 %v3949
        %v4117 = vunpack.c.l.b16 %v3950
        %v4118 = vunpack.c.l.b16 %v3951
        %v4119 = vunpack.c.l.b16 %v3952
        %v4120 = vunpack.c.l.b16 %v3953
        %v4121 = vpack.c.b16 %v4106, %v4105
        %v4122 = vpack.c.b16 %v4108, %v4107
        %v4123 = vpack.c.b16 %v4110, %v4109
        %v4124 = vpack.c.b16 %v4112, %v4111
        %v4125 = vpack.c.b16 %v4114, %v4113
        %v4126 = vpack.c.b16 %v4116, %v4115
        %v4127 = vpack.c.b16 %v4118, %v4117
        %v4128 = vpack.c.b16 %v4120, %v4119
        %4137 = vmatprep.subr.bf16.mxu0 0
        %4138 = vmatpush1.bf16.msra.mxu0 %v4121
        %4139 = vmatprep.subr.bf16.mxu0 0
        %4140 = vmatpush1.bf16.msra.mxu0 %v4122
        %4141 = vmatprep.subr.bf16.mxu0 0
        %4142 = vmatpush1.bf16.msra.mxu0 %v4123
        %4143 = vmatprep.subr.bf16.mxu0 0
        %4144 = vmatpush1.bf16.msra.mxu0 %v4124
        %4145 = vmatprep.subr.bf16.mxu0 0
        %4146 = vmatpush1.bf16.msra.mxu0 %v4125
        %4147 = vmatprep.subr.bf16.mxu0 0
        %4148 = vmatpush1.bf16.msra.mxu0 %v4126
        %4149 = vmatprep.subr.bf16.mxu0 0
        %4150 = vmatpush1.bf16.msra.mxu0 %v4127
        %4151 = vmatprep.subr.bf16.mxu0 0
        %4152 = vmatpush1.bf16.msra.mxu0 %v4128
        %4153 = vmatprep.subr.bf16.mxu0 0
        %4154 = vmatpush1.bf16.msra.mxu0 0
        %4155 = vmatprep.subr.bf16.mxu0 0
        %4156 = vmatpush1.bf16.msra.mxu0 0
        %4157 = vmatprep.subr.bf16.mxu0 0
        %4158 = vmatpush1.bf16.msra.mxu0 0
        %4159 = vmatprep.subr.bf16.mxu0 0
        %4160 = vmatpush1.bf16.msra.mxu0 0
        %4161 = vmatprep.subr.bf16.mxu0 0
        %4162 = vmatpush1.bf16.msra.mxu0 0
        %4163 = vmatprep.subr.bf16.mxu0 0
        %4164 = vmatpush1.bf16.msra.mxu0 0
        %4165 = vmatprep.subr.bf16.mxu0 0
        %4166 = vmatpush1.bf16.msra.mxu0 0
        %4167 = vmatprep.subr.bf16.mxu0 0
        %4168 = vmatpush1.bf16.msra.mxu0 0
        %4169 = vmatprep.mubr.bf16.mxu0 0
        %4170 = vmatmul.mubr.bf16.gmra.mrb[0].mxu0 %v3984
        %v4171 = vpop.f32.mrb[0].mxu0
        %v4172 = vadd.f32 %v4075, %v4171
        %v4173 = vpop.f32.mrb[0].mxu0
        %v4174 = vpop.f32.mrb[0].mxu0
        %v4175 = vadd.f32 %v4078, %v4174
        %v4176 = vpop.f32.mrb[0].mxu0
        %4177 = vmatprep.mubr.bf16.mxu0 0
        %4178 = vmatmul.mubr.bf16.gmra.mrb[0].mxu0 %v3985
        %v4179 = vpop.f32.mrb[0].mxu0
        %v4180 = vadd.f32 %v4083, %v4179
        %v4181 = vpop.f32.mrb[0].mxu0
        %v4182 = vpop.f32.mrb[0].mxu0
        %v4183 = vadd.f32 %v4086, %v4182
        %v4184 = vpop.f32.mrb[0].mxu0
        %4185 = vdwg.mxu0
        %v4186 = vlaneseq
        %v4187 = vshrl.u32 %v4186, 7
        %v4188 = vsub.s32 0, %v4187
        %v4189 = vrot.slane %v3971, %v4188
        %v4190 = vadd.f32 %v4172, %v4189
        %v4191 = vadd.f32 %v4175, %v4189
        %v4192 = vadd.f32 %v4180, %v4189
        %v4193 = vadd.f32 %v4183, %v4189
        %vm4194 = vcmp.ge.f32.partialorder %v4190, 0.0
        %vm4195 = vcmp.ge.f32.partialorder %v4191, 0.0
        %vm4196 = vcmp.ge.f32.partialorder %v4192, 0.0
        %vm4197 = vcmp.ge.f32.partialorder %v4193, 0.0
        %v4198 = vstv %s627
        %v4199 = vmul.f32 %v4198, %v4190
        %v4200 = vmul.f32 %v4198, %v4191
        %v4201 = vmul.f32 %v4198, %v4192
        %v4202 = vmul.f32 %v4198, %v4193
        %v4203 = vsel %vm4194, %v4190, %v4199
        %v4204 = vsel %vm4195, %v4191, %v4200
        %v4205 = vsel %vm4196, %v4192, %v4201
        %v4206 = vsel %vm4197, %v4193, %v4202
        %v4207 = vadd.f32 %v4203, %v3663
        %v4208 = vadd.f32 %v4204, %v3664
        %v4209 = vadd.f32 %v4205, %v3665
        %v4210 = vadd.f32 %v4206, %v3666
        %v4211 = vpack.c.bf16 %v4208, %v4207
        %v4212 = vpack.c.bf16 %v4210, %v4209
        %v4213 = vld [vmem:[#allocation12] sm:$0xf]
        %v4214 = vld [vmem:[#allocation12 + $0x4] sm:$0xf]
        %v4215 = vld [vmem:[#allocation12 + $0x8] sm:$0xf]
        %v4216 = vld [vmem:[#allocation12 + $0xc] sm:$0xf]
        %v4217 = vld [vmem:[#allocation12 + $0x10] sm:$0xf]
        %v4218 = vld [vmem:[#allocation12 + $0x14] sm:$0xf]
        %v4219 = vld [vmem:[#allocation12 + $0x18] sm:$0xf]
        %v4220 = vld [vmem:[#allocation12 + $0x1c] sm:$0xf]
        %v4221 = vld [vmem:[#allocation12 + $0x20] sm:$0xf]
        %v4222 = vld [vmem:[#allocation12 + $0x24] sm:$0xf]
        %v4223 = vld [vmem:[#allocation12 + $0x28] sm:$0xf]
        %v4224 = vld [vmem:[#allocation12 + $0x2c] sm:$0xf]
        %v4225 = vld [vmem:[#allocation12 + $0x30] sm:$0xf]
        %v4226 = vld [vmem:[#allocation12 + $0x34] sm:$0xf]
        %v4227 = vld [vmem:[#allocation12 + $0x38] sm:$0xf]
        %v4228 = vld [vmem:[#allocation12 + $0x3c] sm:$0xf]
        %v4229 = vld [vmem:[%s12] sm:$0x1]
        %v4231 = vlaneseq
        %v4232 = vshrl.u32 %v4231, 7
        %v4233 = vsub.s32 0, %v4232
        %v4234 = vrot.slane %v4229, %v4233
        %v4252 = vunpack.c.l.b16 %v4213
        %v4253 = vunpack.c.l.b16 %v4214
        %v4254 = vunpack.c.l.b16 %v4215
        %v4255 = vunpack.c.l.b16 %v4216
        %v4256 = vunpack.c.l.b16 %v4217
        %v4257 = vunpack.c.l.b16 %v4218
        %v4258 = vunpack.c.l.b16 %v4219
        %v4259 = vunpack.c.l.b16 %v4220
        %v4260 = vunpack.c.l.b16 %v4221
        %v4261 = vunpack.c.l.b16 %v4222
        %v4262 = vunpack.c.l.b16 %v4223
        %v4263 = vunpack.c.l.b16 %v4224
        %v4264 = vunpack.c.l.b16 %v4225
        %v4265 = vunpack.c.l.b16 %v4226
        %v4266 = vunpack.c.l.b16 %v4227
        %v4267 = vunpack.c.l.b16 %v4228
        %v4268 = vpack.c.b16 %v4253, %v4252
        %v4269 = vpack.c.b16 %v4255, %v4254
        %v4270 = vpack.c.b16 %v4257, %v4256
        %v4271 = vpack.c.b16 %v4259, %v4258
        %v4272 = vpack.c.b16 %v4261, %v4260
        %v4273 = vpack.c.b16 %v4263, %v4262
        %v4274 = vpack.c.b16 %v4265, %v4264
        %v4275 = vpack.c.b16 %v4267, %v4266
        %4284 = vmatprep.subr.bf16.mxu0 0
        %4285 = vmatpush1.bf16.msra.mxu0 %v4268
        %4286 = vmatprep.subr.bf16.mxu0 0
        %4287 = vmatpush1.bf16.msra.mxu0 %v4269
        %4288 = vmatprep.subr.bf16.mxu0 0
        %4289 = vmatpush1.bf16.msra.mxu0 %v4270
        %4290 = vmatprep.subr.bf16.mxu0 0
        %4291 = vmatpush1.bf16.msra.mxu0 %v4271
        %4292 = vmatprep.subr.bf16.mxu0 0
        %4293 = vmatpush1.bf16.msra.mxu0 %v4272
        %4294 = vmatprep.subr.bf16.mxu0 0
        %4295 = vmatpush1.bf16.msra.mxu0 %v4273
        %4296 = vmatprep.subr.bf16.mxu0 0
        %4297 = vmatpush1.bf16.msra.mxu0 %v4274
        %4298 = vmatprep.subr.bf16.mxu0 0
        %4299 = vmatpush1.bf16.msra.mxu0 %v4275
        %4300 = vmatprep.subr.bf16.mxu0 0
        %4301 = vmatpush1.bf16.msra.mxu0 0
        %4302 = vmatprep.subr.bf16.mxu0 0
        %4303 = vmatpush1.bf16.msra.mxu0 0
        %4304 = vmatprep.subr.bf16.mxu0 0
        %4305 = vmatpush1.bf16.msra.mxu0 0
        %4306 = vmatprep.subr.bf16.mxu0 0
        %4307 = vmatpush1.bf16.msra.mxu0 0
        %4308 = vmatprep.subr.bf16.mxu0 0
        %4309 = vmatpush1.bf16.msra.mxu0 0
        %4310 = vmatprep.subr.bf16.mxu0 0
        %4311 = vmatpush1.bf16.msra.mxu0 0
        %4312 = vmatprep.subr.bf16.mxu0 0
        %4313 = vmatpush1.bf16.msra.mxu0 0
        %4314 = vmatprep.subr.bf16.mxu0 0
        %4315 = vmatpush1.bf16.msra.mxu0 0
        %4316 = vmatprep.mubr.bf16.mxu0 0
        %4317 = vmatmul.mubr.bf16.gmra.mrb[0].mxu0 %v4211
        %v4318 = vpop.f32.mrb[0].mxu0
        %v4319 = vadd.f32 %v4234, %v4318
        %v4320 = vpop.f32.mrb[0].mxu0
        %v4321 = vpop.f32.mrb[0].mxu0
        %v4322 = vadd.f32 %v4234, %v4321
        %v4323 = vpop.f32.mrb[0].mxu0
        %4324 = vmatprep.mubr.bf16.mxu0 0
        %4325 = vmatmul.mubr.bf16.gmra.mrb[0].mxu0 %v4212
        %v4326 = vpop.f32.mrb[0].mxu0
        %v4327 = vadd.f32 %v4234, %v4326
        %v4328 = vpop.f32.mrb[0].mxu0
        %v4329 = vpop.f32.mrb[0].mxu0
        %v4330 = vadd.f32 %v4234, %v4329
        %v4331 = vpop.f32.mrb[0].mxu0
        %4332 = vdwg.mxu0
        %v4333 = vand.u32 2147483647, %v4319
        %v4334 = vand.u32 2147483647, %v4322
        %v4335 = vand.u32 2147483647, %v4327
        %v4336 = vand.u32 2147483647, %v4330
        %v4337 = vsub.f32 0.0, %v4333
        %v4338 = vsub.f32 0.0, %v4334
        %v4339 = vsub.f32 0.0, %v4335
        %v4340 = vsub.f32 0.0, %v4336
        %v4341 = vmul.f32 %v4337, 1.442695
        %v4342 = vpow.pop %v4341
        %v4343 = vmul.f32 %v4338, 1.442695
        %v4344 = vpow.pop %v4343
        %v4345 = vmul.f32 %v4339, 1.442695
        %v4346 = vpow.pop %v4345
        %v4347 = vmul.f32 %v4340, 1.442695
        %v4348 = vpow.pop %v4347
        %v4349 = vadd.f32 %v4342, 1.0
        %v4350 = vadd.f32 %v4344, 1.0
        %v4351 = vadd.f32 %v4346, 1.0
        %v4352 = vadd.f32 %v4348, 1.0
        %v4353 = vrcp.pop %v4349
        %v4354 = vrcp.pop %v4350
        %v4355 = vrcp.pop %v4351
        %v4356 = vrcp.pop %v4352
        %vm4357 = vcmp.ge.f32.partialorder %v4319, 0.0
        %vm4358 = vcmp.ge.f32.partialorder %v4322, 0.0
        %vm4359 = vcmp.ge.f32.partialorder %v4327, 0.0
        %vm4360 = vcmp.ge.f32.partialorder %v4330, 0.0
        %v4361 = vmul.f32 %v4342, %v4353
        %v4362 = vmul.f32 %v4344, %v4354
        %v4363 = vmul.f32 %v4346, %v4355
        %v4364 = vmul.f32 %v4348, %v4356
        %v4365 = vsel %vm4357, %v4353, %v4361
        %v4366 = vsel %vm4358, %v4354, %v4362
        %v4367 = vsel %vm4359, %v4355, %v4363
        %v4368 = vsel %vm4360, %v4356, %v4364
        %4369 = vst [vmem:[%s583] sm:$0xff] %v4365
        %4370 = vst [vmem:[%s583 + $0x8] sm:$0xff] %v4366
        %4371 = vst [vmem:[%s583 + $0x10] sm:$0xff] %v4367
        %4372 = vst [vmem:[%s583 + $0x18] sm:$0xff] %v4368
        %s4373 = smul.u32 4, %s30
        %p4374 = scmp.lt.s32.totalorder %s4373, 7
        %s4375 = scalar_select %p4374, %s4373, 7
        %s4376 = smul.addr %s4375, 8
        %s4377 = scalar_lea.vmem %s14, %s4376
        // Predicated region
        $region109: #{discriminator_forward.1} parent=75 // pred_check
          %p4378 = pneg %p347
        $region110: #{discriminator_forward.1} parent=75 // pred_check_branch
          %4380 = sbr.rel (%p4378) target = $region112
        $region111: #{discriminator_forward.1} parent=75 // pred_region
          %s4381 = smul.u32 4, %s30
        $region112: #{discriminator_forward.1} parent=75 // pred_fallthru
          _
      $region76: #{discriminator_forward.1} parent=5 // pred_fallthru
        _
      %p4382 = scmp.le.s32.totalorder 2, %s25
      // Predicated region
      $region113: #{discriminator_forward.1} parent=5 // pred_check
        %p4383 = pneg %p4382
      $region114: #{discriminator_forward.1} parent=5 // pred_check_branch
        %4385 = sbr.rel (%p4383) target = $region116
      $region115: #{discriminator_forward.1} parent=5 // pred_region
        %s4386 = ssub.s32 %s25, 2
        // Predicated region
        $region117: #{discriminator_forward.1} parent=115 // pred_check
          %p4387 = pneg %p353
        $region118: #{discriminator_forward.1} parent=115 // pred_check_branch
          %4389 = sbr.rel (%p4387) target = $region120
        $region119: #{discriminator_forward.1} parent=115 // pred_region
          %s4390 = smul.u32 4, %s31
          %p4391 = scmp.lt.s32.totalorder %s4390, 7
          %s4392 = scalar_select %p4391, %s4390, 7
          %s4393 = smul.addr %s4392, 8
          %s4394 = scalar_lea.vmem %s14, %s4393
        $region120: #{discriminator_forward.1} parent=115 // pred_fallthru
          _
      $region116: #{discriminator_forward.1} parent=5 // pred_fallthru
        _
    $region6: #{discriminator_forward.1} parent=1 // loop_footer
      %s29 = sadd.s32 1, %s25
    $region7: #{discriminator_forward.1} parent=1 // loop_footer_branch
      %24 = sbr.rel target = $region3
    $region8: #{discriminator_forward.1} parent=1 // loop_exit
      _
    %4395 = vsyncpa [#allocation4], 1
    %s4396 = scalar_lea.sflag [#allocation4], 1
    %4397 = vsyncpa %s4396, 1
    %4398 = vsyncpa [#allocation7], 1
    %4399 = vsyncpa [#allocation10], 1
    %4400 = vsyncpa [#allocation13], 1
    %4401 = vsyncpa [#allocation5], 1
    %s4402 = scalar_lea.sflag [#allocation5], 1
    %4403 = vsyncpa %s4402, 1

</llo_original>
